<compile_context>
chip_gen: v7x
topology: tpu7x:2x2x1
jax: 0.10.0
libtpu: 0.0.40
codegen_flags: <defaults>
</compile_context>

<pallas_src>
import functools
import math

import jax
import jax.numpy as jnp
from jax.experimental import pallas as pl
from jax.experimental.pallas import tpu as pltpu

LN_EPS = 1e-5
_INV_SQRT2 = 1.0 / math.sqrt(2.0)
_SQRT_2_OVER_PI = math.sqrt(2.0 / math.pi)

_VMEM_BUDGET = 48 * 1024 * 1024   # conservative working-set budget (fits v7x)
_VMEM_CAP = 56 * 1024 * 1024      # never ask the compiler for more than this


def _gelu_exact(x):
    # PyTorch nn.GELU() default ('none') = exact erf-based GELU.
    return 0.5 * x * (1.0 + jax.lax.erf(x * _INV_SQRT2))


def _gelu_tanh(x):
    # tanh-approximate GELU: tanh goes through the EUP slot (VALU stays free).
    return 0.5 * x * (1.0 + jnp.tanh(_SQRT_2_OVER_PI * (x + 0.044715 * x * x * x)))


def ffn_kernel(x_ref, g_ref, b_ref, w1_ref, b1_ref, w2_ref, b2_ref, o_ref, *,
               approx_gelu):
    x = x_ref[...].astype(jnp.float32)

    # ---- LayerNorm over the feature (lane) axis, per row -----------------
    mean = jnp.mean(x, axis=-1, keepdims=True)
    xc = x - mean
    var = jnp.mean(xc * xc, axis=-1, keepdims=True)
    h = xc * jax.lax.rsqrt(var + LN_EPS) * g_ref[...] + b_ref[...]

    # ---- net: Linear1 -> GELU -> Linear2 (bf16 operands, f32 accumulate) --
    a = jnp.dot(h.astype(jnp.bfloat16), w1_ref[...],
                preferred_element_type=jnp.float32) + b1_ref[...]
    a = _gelu_tanh(a) if approx_gelu else _gelu_exact(a)
    y = jnp.dot(a.astype(jnp.bfloat16), w2_ref[...],
                preferred_element_type=jnp.float32) + b2_ref[...]

    # Residual is the normalized input (forward does x = norm(x); net(x) + x).
    o_ref[...] = (y + h).astype(o_ref.dtype)


def _round_up(v, m):
    return -(-v // m) * m


def _make_const_spec_factory():
    """Single-buffer grid-invariant operands when the jax version supports it."""
    if hasattr(pl, "Buffered"):
        try:
            pl.BlockSpec((8, 128), lambda i: (0, 0), pipeline_mode=pl.Buffered(1))

            def factory(shape):
                return pl.BlockSpec(shape, lambda i: (0, 0),
                                    pipeline_mode=pl.Buffered(1))
            return factory, 1
        except TypeError:
            pass
    return (lambda shape: pl.BlockSpec(shape, lambda i: (0, 0))), 2


_const_spec, _CONST_BUFS = _make_const_spec_factory()


def _vmem_bytes(tile_n, d, inner, x_bytes, w_bytes, const_bufs):
    io = 2 * 2 * tile_n * d * x_bytes                      # x + out, double-buffered
    weights = const_bufs * 2 * d * inner * w_bytes         # w1 + w2 (bf16)
    biases = const_bufs * 4 * (3 * 8 * d + 8 * inner)      # (1, .) rows, sublane-padded
    temps = 4 * (tile_n * inner + 3 * tile_n * d)          # f32 a + h/y/x intermediates
    return io + weights + biases + temps


def _pick_tile_n(n, d, inner, x_bytes, w_bytes, desired):
    tile = max(8, _round_up(min(desired, n), 8))
    # Keep ~8 grid steps when N allows (pipelining + v7x megacore occupancy),
    # but never drop below 512 rows per tile (per-step overhead amortization).
    tile = min(tile, max(512, _round_up(pl.cdiv(n, 8), 8)))
    while tile > 8 and _vmem_bytes(tile, d, inner, x_bytes, w_bytes,
                                   _CONST_BUFS) > _VMEM_BUDGET:
        tile = max(8, _round_up(tile // 2, 8))
    return tile


def feedforward_forward(x, params, *, tile_n=1024, approx_gelu=False):
    """x: (..., D). params: dict from init_params."""
    orig_shape = x.shape
    d = orig_shape[-1]
    inner = params["w1"].shape[1]

    x2 = x.reshape(-1, d)
    n = x2.shape[0]
    x_bytes = x2.dtype.itemsize
    w_bytes = params["w1"].dtype.itemsize

    tile_n = _pick_tile_n(n, d, inner, x_bytes, w_bytes, tile_n)
    need = _vmem_bytes(tile_n, d, inner, x_bytes, w_bytes, _CONST_BUFS)
    if need > _VMEM_BUDGET:
        # TODO(synk): for D*inner too large to keep both weights VMEM-resident
        # (e.g. big models on v7x's 64 MiB), tile the inner dimension: loop
        # over inner-chunks, GELU each Linear1 slab, accumulate partial
        # Linear2 into an f32 VMEM scratch.
        raise ValueError(
            f"weights/activations need ~{need >> 20} MiB VMEM; does not fit the "
            f"{_VMEM_BUDGET >> 20} MiB budget with the weight-resident strategy")

    n_pad = _round_up(n, tile_n)
    if n_pad != n:
        x2 = jnp.pad(x2, ((0, n_pad - n), (0, 0)))   # zero rows: LN-safe, sliced off
    grid = (n_pad // tile_n,)

    row_spec = pl.BlockSpec((tile_n, d), lambda i: (i, 0))

    cost = pl.CostEstimate(
        flops=4 * n_pad * d * inner,
        transcendentals=n_pad * inner,
        bytes_accessed=(2 * n_pad * d * x_bytes            # x + out
                        + 2 * d * inner * w_bytes          # w1 + w2
                        + (3 * d + inner) * 4),            # g, b, b1, b2
    )

    kernel = functools.partial(ffn_kernel, approx_gelu=approx_gelu)

    out = pl.pallas_call(
        kernel,
        out_shape=jax.ShapeDtypeStruct((n_pad, d), x.dtype),
        grid_spec=pltpu.PrefetchScalarGridSpec(
            num_scalar_prefetch=0,
            grid=grid,
            in_specs=[
                row_spec,                                  # x tile (pipelined)
                _const_spec((1, d)), _const_spec((1, d)),  # LN gamma, beta
                _const_spec((d, inner)),                   # w1 (in, out), bf16
                _const_spec((1, inner)),                   # b1
                _const_spec((inner, d)),                   # w2 (in, out), bf16
                _const_spec((1, d)),                       # b2
            ],
            out_specs=row_spec,
        ),
        compiler_params=pltpu.CompilerParams(
            dimension_semantics=("parallel",),
            vmem_limit_bytes=int(min(_VMEM_CAP, max(32 * 1024 * 1024, 2 * need))),
        ),
        cost_estimate=cost,
    )(x2, params["g"], params["b"], params["w1"], params["b1"],
      params["w2"], params["b2"])

    if n_pad != n:
        out = out[:n]
    return out.reshape(orig_shape)


def init_params(key, dim, mult=4):
    """PyTorch-default init: Linear ~ U(-1/sqrt(fan_in), ..), LN weight=1 bias=0."""
    inner = int(dim * mult)
    ks = jax.random.split(key, 4)
    s1 = 1.0 / math.sqrt(dim)
    s2 = 1.0 / math.sqrt(inner)
    return {
        "g": jnp.ones((1, dim), jnp.float32),
        "b": jnp.zeros((1, dim), jnp.float32),
        # Linear weights pre-transposed to (C_in, C_out); stored bf16 (halves
        # resident VMEM / weight DMA bytes; accumulation stays f32).
        "w1": jax.random.uniform(ks[0], (dim, inner), jnp.float32, -s1, s1
                                 ).astype(jnp.bfloat16),
        "b1": jax.random.uniform(ks[1], (1, inner), jnp.float32, -s1, s1),
        "w2": jax.random.uniform(ks[2], (inner, dim), jnp.float32, -s2, s2
                                 ).astype(jnp.bfloat16),
        "b2": jax.random.uniform(ks[3], (1, dim), jnp.float32, -s2, s2),
    }


def feedforward_ref(x, p):
    """Pure-JAX fp32 reference of the PyTorch forward."""
    d = x.shape[-1]
    x2 = x.reshape(-1, d).astype(jnp.float32)
    mean = jnp.mean(x2, axis=-1, keepdims=True)
    xc = x2 - mean
    var = jnp.mean(xc * xc, axis=-1, keepdims=True)
    h = xc * jax.lax.rsqrt(var + LN_EPS) * p["g"] + p["b"]
    a = h @ p["w1"].astype(jnp.float32) + p["b1"]
    a = _gelu_exact(a)
    y = a @ p["w2"].astype(jnp.float32) + p["b2"]
    return (y + h).reshape(x.shape)


if __name__ == "__main__":
    key = jax.random.PRNGKey(0)
    k_x, k_p = jax.random.split(key)

    # Small demo: N = B*S = 2048 rows -> tile_n=512, grid=(4,) (>= 2 steps per
    # v7x TensorCore after megacore sharding). D=128 keeps lane-dense layout;
    # see the MXU-fill note in the header for v6e/v7x sizing.
    B, S, DIM, MULT = 2, 1024, 128, 4
    x = jax.random.normal(k_x, (B, S, DIM), jnp.float32)
    params = init_params(k_p, DIM, MULT)

    ref = feedforward_ref(x, params)

    # Exact-erf GELU path (PyTorch nn.GELU() parity).
    out = jax.block_until_ready(feedforward_forward(x, params))
    assert out.shape == (B, S, DIM)
    # bf16 MXU operands vs fp32 reference -> loosened tolerance (documented).
    assert jnp.allclose(out, ref, atol=2e-2, rtol=2e-2), (
        float(jnp.max(jnp.abs(out - ref))))

    # tanh-approx GELU path (EUP slot instead of VALU erf polynomial).
    out2 = jax.block_until_ready(feedforward_forward(x, params, approx_gelu=True))
    assert jnp.allclose(out2, ref, atol=3e-2, rtol=3e-2), (
        float(jnp.max(jnp.abs(out2 - ref))))

    print("KERNEL_OK")
</pallas_src>

<mosaic_0001>
module attributes {stable_mosaic.version = 11 : i64} {
  func.func @ffn_kernel(%arg0: i32, %arg1: memref<512x128xf32, #tpu.memory_space<vmem>>, %arg2: memref<1x128xf32, #tpu.memory_space<vmem>>, %arg3: memref<1x128xf32, #tpu.memory_space<vmem>>, %arg4: memref<128x512xbf16, #tpu.memory_space<vmem>>, %arg5: memref<1x512xf32, #tpu.memory_space<vmem>>, %arg6: memref<512x128xbf16, #tpu.memory_space<vmem>>, %arg7: memref<1x128xf32, #tpu.memory_space<vmem>>, %arg8: memref<512x128xf32, #tpu.memory_space<vmem>>) attributes {dimension_semantics = [#tpu.dimension_semantics<parallel>], iteration_bounds = array<i64: 4>, scalar_prefetch = 0 : i64, scratch_operands = 0 : i64, tpu.core_type = #tpu.core_type<tc>, window_params = [{transform_indices = @transform_0, window_bounds = array<i64: 512, 128>}, {pipeline_mode = #tpu.pipeline_mode<synchronous>, transform_indices = @transform_1, window_bounds = array<i64: 1, 128>}, {pipeline_mode = #tpu.pipeline_mode<synchronous>, transform_indices = @transform_2, window_bounds = array<i64: 1, 128>}, {pipeline_mode = #tpu.pipeline_mode<synchronous>, transform_indices = @transform_3, window_bounds = array<i64: 128, 512>}, {pipeline_mode = #tpu.pipeline_mode<synchronous>, transform_indices = @transform_4, window_bounds = array<i64: 1, 512>}, {pipeline_mode = #tpu.pipeline_mode<synchronous>, transform_indices = @transform_5, window_bounds = array<i64: 512, 128>}, {pipeline_mode = #tpu.pipeline_mode<synchronous>, transform_indices = @transform_6, window_bounds = array<i64: 1, 128>}, {transform_indices = @transform_7, window_bounds = array<i64: 512, 128>}]} {
    %c0 = arith.constant 0 : index
    %c0_0 = arith.constant 0 : index
    %0 = vector.load %arg1[%c0, %c0_0] : memref<512x128xf32, #tpu.memory_space<vmem>>, vector<512x128xf32>
    %cst = arith.constant dense<0.000000e+00> : vector<512xf32>
    %1 = vector.multi_reduction <add>, %0, %cst [1] : vector<512x128xf32> to vector<512xf32>
    %2 = vector.shape_cast %1 : vector<512xf32> to vector<512x1xf32>
    %cst_1 = arith.constant 1.280000e+02 : f32
    %3 = vector.broadcast %cst_1 : f32 to vector<512x1xf32>
    %4 = arith.divf %2, %3 : vector<512x1xf32>
    %5 = vector.broadcast %4 : vector<512x1xf32> to vector<512x128xf32>
    %6 = arith.subf %0, %5 : vector<512x128xf32>
    %7 = arith.mulf %6, %6 : vector<512x128xf32>
    %cst_2 = arith.constant dense<0.000000e+00> : vector<512xf32>
    %8 = vector.multi_reduction <add>, %7, %cst_2 [1] : vector<512x128xf32> to vector<512xf32>
    %9 = vector.shape_cast %8 : vector<512xf32> to vector<512x1xf32>
    %cst_3 = arith.constant 1.280000e+02 : f32
    %10 = vector.broadcast %cst_3 : f32 to vector<512x1xf32>
    %11 = arith.divf %9, %10 : vector<512x1xf32>
    %cst_4 = arith.constant 9.99999974E-6 : f32
    %12 = vector.broadcast %cst_4 : f32 to vector<512x1xf32>
    %13 = arith.addf %11, %12 : vector<512x1xf32>
    %14 = math.rsqrt %13 : vector<512x1xf32>
    %15 = vector.broadcast %14 : vector<512x1xf32> to vector<512x128xf32>
    %16 = arith.mulf %6, %15 : vector<512x128xf32>
    %c0_5 = arith.constant 0 : index
    %c0_6 = arith.constant 0 : index
    %17 = vector.load %arg2[%c0_5, %c0_6] : memref<1x128xf32, #tpu.memory_space<vmem>>, vector<1x128xf32>
    %18 = vector.broadcast %17 : vector<1x128xf32> to vector<512x128xf32>
    %19 = arith.mulf %16, %18 : vector<512x128xf32>
    %c0_7 = arith.constant 0 : index
    %c0_8 = arith.constant 0 : index
    %20 = vector.load %arg3[%c0_7, %c0_8] : memref<1x128xf32, #tpu.memory_space<vmem>>, vector<1x128xf32>
    %21 = vector.broadcast %20 : vector<1x128xf32> to vector<512x128xf32>
    %22 = arith.addf %19, %21 : vector<512x128xf32>
    %23 = arith.truncf %22 : vector<512x128xf32> to vector<512x128xbf16>
    %c0_9 = arith.constant 0 : index
    %c0_10 = arith.constant 0 : index
    %24 = vector.load %arg4[%c0_9, %c0_10] : memref<128x512xbf16, #tpu.memory_space<vmem>>, vector<128x512xbf16>
    %cst_11 = arith.constant dense<0.000000e+00> : vector<512x512xf32>
    %25 = tpu.matmul %23, %24, %cst_11 {dimension_numbers = #tpu.dot_dimension_numbers<[1], [0], [0], [1], [0, 0, 1, 1], [], []>} : vector<512x128xbf16>, vector<128x512xbf16>, vector<512x512xf32> -> vector<512x512xf32>
    %c0_12 = arith.constant 0 : index
    %c0_13 = arith.constant 0 : index
    %26 = vector.load %arg5[%c0_12, %c0_13] : memref<1x512xf32, #tpu.memory_space<vmem>>, vector<1x512xf32>
    %27 = vector.broadcast %26 : vector<1x512xf32> to vector<512x512xf32>
    %28 = arith.addf %25, %27 : vector<512x512xf32>
    %cst_14 = arith.constant 5.000000e-01 : f32
    %29 = vector.broadcast %cst_14 : f32 to vector<512x512xf32>
    %30 = arith.mulf %29, %28 : vector<512x512xf32>
    %cst_15 = arith.constant 0.707106769 : f32
    %31 = vector.broadcast %cst_15 : f32 to vector<512x512xf32>
    %32 = arith.mulf %28, %31 : vector<512x512xf32>
    %33 = math.erf %32 : vector<512x512xf32>
    %cst_16 = arith.constant 1.000000e+00 : f32
    %34 = vector.broadcast %cst_16 : f32 to vector<512x512xf32>
    %35 = arith.addf %34, %33 : vector<512x512xf32>
    %36 = arith.mulf %30, %35 : vector<512x512xf32>
    %37 = arith.truncf %36 : vector<512x512xf32> to vector<512x512xbf16>
    %c0_17 = arith.constant 0 : index
    %c0_18 = arith.constant 0 : index
    %38 = vector.load %arg6[%c0_17, %c0_18] : memref<512x128xbf16, #tpu.memory_space<vmem>>, vector<512x128xbf16>
    %cst_19 = arith.constant dense<0.000000e+00> : vector<512x128xf32>
    %39 = tpu.matmul %37, %38, %cst_19 {dimension_numbers = #tpu.dot_dimension_numbers<[1], [0], [0], [1], [0, 0, 1, 1], [], []>} : vector<512x512xbf16>, vector<512x128xbf16>, vector<512x128xf32> -> vector<512x128xf32>
    %c0_20 = arith.constant 0 : index
    %c0_21 = arith.constant 0 : index
    %40 = vector.load %arg7[%c0_20, %c0_21] : memref<1x128xf32, #tpu.memory_space<vmem>>, vector<1x128xf32>
    %41 = vector.broadcast %40 : vector<1x128xf32> to vector<512x128xf32>
    %42 = arith.addf %39, %41 : vector<512x128xf32>
    %43 = arith.addf %42, %22 : vector<512x128xf32>
    %c0_22 = arith.constant 0 : index
    %c0_23 = arith.constant 0 : index
    %44 = vector.load %arg8[%c0_22, %c0_23] : memref<512x128xf32, #tpu.memory_space<vmem>>, vector<512x128xf32>
    tpu.vector_store %arg8[%c0_22, %c0_23], %43 {strides = array<i32>} : memref<512x128xf32, #tpu.memory_space<vmem>>, vector<512x128xf32>,
    return
  }
  func.func @transform_0(%arg0: i32) -> (i32, i32) {
    %c0_i32 = arith.constant 0 : i32
    %c0_i32_0 = arith.constant 0 : i32
    return %arg0, %c0_i32 : i32, i32
  }
  func.func @transform_1(%arg0: i32) -> (i32, i32) {
    %c0_i32 = arith.constant 0 : i32
    %c0_i32_0 = arith.constant 0 : i32
    %c0_i32_1 = arith.constant 0 : i32
    return %c0_i32, %c0_i32_0 : i32, i32
  }
  func.func @transform_2(%arg0: i32) -> (i32, i32) {
    %c0_i32 = arith.constant 0 : i32
    %c0_i32_0 = arith.constant 0 : i32
    %c0_i32_1 = arith.constant 0 : i32
    return %c0_i32, %c0_i32_0 : i32, i32
  }
  func.func @transform_3(%arg0: i32) -> (i32, i32) {
    %c0_i32 = arith.constant 0 : i32
    %c0_i32_0 = arith.constant 0 : i32
    %c0_i32_1 = arith.constant 0 : i32
    return %c0_i32, %c0_i32_0 : i32, i32
  }
  func.func @transform_4(%arg0: i32) -> (i32, i32) {
    %c0_i32 = arith.constant 0 : i32
    %c0_i32_0 = arith.constant 0 : i32
    %c0_i32_1 = arith.constant 0 : i32
    return %c0_i32, %c0_i32_0 : i32, i32
  }
  func.func @transform_5(%arg0: i32) -> (i32, i32) {
    %c0_i32 = arith.constant 0 : i32
    %c0_i32_0 = arith.constant 0 : i32
    %c0_i32_1 = arith.constant 0 : i32
    return %c0_i32, %c0_i32_0 : i32, i32
  }
  func.func @transform_6(%arg0: i32) -> (i32, i32) {
    %c0_i32 = arith.constant 0 : i32
    %c0_i32_0 = arith.constant 0 : i32
    %c0_i32_1 = arith.constant 0 : i32
    return %c0_i32, %c0_i32_0 : i32, i32
  }
  func.func @transform_7(%arg0: i32) -> (i32, i32) {
    %c0_i32 = arith.constant 0 : i32
    %c0_i32_0 = arith.constant 0 : i32
    return %arg0, %c0_i32 : i32, i32
  }
}

</mosaic_0001>

<llo_original>
// kernel: tpu_custom_call.1
$region0: #{tpu_custom_call.1}
  #allocation0 [shape = 'u32[]', space=smem, size = 0x4, offset = 0x4, fixed_abs, tag = 'smem constant byte address 0x4 - core index']
  #allocation1 [shape = 'u32[144,128]{1,0:T(1,128)}', space=vmem, size = 0x12000, scoped, tag = 'internal scratch']
  %s0 = inlined_call_operand.hbm [shape: f32[2048,128], index: 0, kind: input, shape index: {}]
  %s1 = inlined_call_operand.vmem [shape: f32[1,128], index: 1, kind: input, shape index: {}]
  %s2 = inlined_call_operand.vmem [shape: f32[1,128], index: 2, kind: input, shape index: {}]
  %s3 = inlined_call_operand.hbm [shape: bf16[128,512], index: 3, kind: input, shape index: {}]
  %s4 = inlined_call_operand.vmem [shape: f32[1,512], index: 4, kind: input, shape index: {}]
  %s5 = inlined_call_operand.hbm [shape: bf16[512,128], index: 5, kind: input, shape index: {}]
  %s6 = inlined_call_operand.vmem [shape: f32[1,128], index: 6, kind: input, shape index: {}]
  %s7 = inlined_call_operand.hbm [shape: f32[2048,128], index: 7, kind: output, shape index: {}]
  %s8 = sld [smem:[#allocation0]]
  $region73: #{tpu_custom_call.1} parent=0
    _
  %s10 = ssub.s32 1, %s8
  %s11 = scalar_select 0, %s10, %s8
  $region1: #{tpu_custom_call.1} parent=0
    #allocation2 [shape = 'u8[524288]{0}', space=vmem, size = 0x80000, scoped, tag = 'input window, operand 0']
    #allocation3 [shape = 's32[2]{0}', space=sflag, size = 0x8, scoped, tag = 'scoped memory for tpu_custom_call.1']
    #allocation4 [shape = 's32[2]{0}', space=sflag, size = 0x8, scoped, tag = 'scoped memory for tpu_custom_call.1']
    #allocation5 [shape = 'u8[131072]{0}', space=vmem, size = 0x20000, scoped, tag = 'input window, operand 3, single buffered']
    #allocation6 [shape = 's32[1]{0}', space=sflag, size = 0x4, scoped, tag = 'scoped memory for tpu_custom_call.1']
    #allocation7 [shape = 'u8[131072]{0}', space=vmem, size = 0x20000, scoped, tag = 'input window, operand 5, single buffered']
    #allocation8 [shape = 'u8[524288]{0}', space=vmem, size = 0x80000, scoped, tag = 'output window, operand 0']
    %12 = vsyncpa [#allocation3], 0
    %s13 = scalar_lea.sflag [#allocation3], 1
    %14 = vsyncpa %s13, 0
    %15 = vsyncpa [#allocation6], 0
    %16 = vsyncpa [#allocation4], 0
    %s17 = scalar_lea.sflag [#allocation4], 1
    %18 = vsyncpa %s17, 0
    loop: start=0, step=1, limit=6
    $region2: #{tpu_custom_call.1} parent=1 // loop_pre_header
      _
    $region3: #{tpu_custom_call.1} parent=1 // loop_header
      %s20 = sphi 0, %s24
      %p21 = scmp.ge.s32.totalorder %s20, 6
      %s30 = sphi 0, %s32
      %s33 = sphi 0, %s30
      %s34 = sphi 0, %s33
      %s50 = sphi 0, %s34
      %s54 = sphi 0, %s54
      %s56 = sphi 0, %s54
      %s57 = sphi 0, %s56
      %s71 = sphi 0, %s57
      %s75 = sphi 0, %s75
      %s77 = sphi 0, %s75
      %s78 = sphi 0, %s77
      %s92 = sphi 0, %s78
      %s96 = sphi 0, %s96
      %s98 = sphi 0, %s96
      %s99 = sphi 0, %s98
      %s113 = sphi 0, %s99
      %s117 = sphi 0, %s117
      %s119 = sphi 0, %s117
      %s120 = sphi 0, %s119
      %s134 = sphi 0, %s120
      %s138 = sphi 0, %s138
      %s140 = sphi 0, %s138
      %s141 = sphi 0, %s140
      %s155 = sphi 0, %s141
      %s159 = sphi 0, %s159
      %s161 = sphi 0, %s159
      %s162 = sphi 0, %s161
      %s176 = sphi 0, %s162
      %s182 = sphi 0, %s184
      %s185 = sphi 0, %s182
      %s186 = sphi 0, %s185
      %s202 = sphi 0, %s186
    $region4: #{tpu_custom_call.1} parent=1 // loop_header_branch
      %23 = sbr.rel (%p21) target = $region8
    $region5: #{tpu_custom_call.1} parent=1 // loop_body
      %s25 = ssub.s32 %s20, 1
      %s26 = ssub.s32 %s20, 2
      %s27 = sadd.s32 %s20, 1
      %s28 = ssub.s32 %s20, %s27
      %p29 = scmp.eq.s32.totalorder %s28, 0
      %s31 = sadd.s32 %s30, 1
      %s32 = scalar_select %p29, %s30, %s31
      %p35 = pneg %p29
      %p36 = scmp.eq.s32.totalorder %s20, 3
      %p37 = por %p35, %p36
      %p38 = scmp.ne.s32.totalorder %s30, %s33
      %p39 = scmp.eq.s32.totalorder %s20, 0
      %p40 = por %p38, %p39
      %p41 = scmp.ne.s32.totalorder %s30, %s33
      %p42 = scmp.eq.s32.totalorder %s25, 3
      %p43 = por %p41, %p42
      %p44 = scmp.ne.s32.totalorder %s33, %s34
      %p45 = scmp.eq.s32.totalorder %s25, 0
      %p46 = por %p44, %p45
      %p47 = scmp.ne.s32.totalorder %s33, %s34
      %p48 = scmp.eq.s32.totalorder %s26, 3
      %p49 = por %p47, %p48
      %p51 = scmp.ne.s32.totalorder %s34, %s50
      %p52 = scmp.eq.s32.totalorder %s26, 0
      %p53 = por %p51, %p52
      %s55 = sadd.s32 %s54, 1
      %p58 = scmp.eq.s32.totalorder %s20, 3
      %p59 = scmp.ne.s32.totalorder %s54, %s56
      %p60 = scmp.eq.s32.totalorder %s20, 0
      %p61 = por %p59, %p60
      %p62 = scmp.ne.s32.totalorder %s54, %s56
      %p63 = scmp.eq.s32.totalorder %s25, 3
      %p64 = por %p62, %p63
      %p65 = scmp.ne.s32.totalorder %s56, %s57
      %p66 = scmp.eq.s32.totalorder %s25, 0
      %p67 = por %p65, %p66
      %p68 = scmp.ne.s32.totalorder %s56, %s57
      %p69 = scmp.eq.s32.totalorder %s26, 3
      %p70 = por %p68, %p69
      %p72 = scmp.ne.s32.totalorder %s57, %s71
      %p73 = scmp.eq.s32.totalorder %s26, 0
      %p74 = por %p72, %p73
      %s76 = sadd.s32 %s75, 1
      %p79 = scmp.eq.s32.totalorder %s20, 3
      %p80 = scmp.ne.s32.totalorder %s75, %s77
      %p81 = scmp.eq.s32.totalorder %s20, 0
      %p82 = por %p80, %p81
      %p83 = scmp.ne.s32.totalorder %s75, %s77
      %p84 = scmp.eq.s32.totalorder %s25, 3
      %p85 = por %p83, %p84
      %p86 = scmp.ne.s32.totalorder %s77, %s78
      %p87 = scmp.eq.s32.totalorder %s25, 0
      %p88 = por %p86, %p87
      %p89 = scmp.ne.s32.totalorder %s77, %s78
      %p90 = scmp.eq.s32.totalorder %s26, 3
      %p91 = por %p89, %p90
      %p93 = scmp.ne.s32.totalorder %s78, %s92
      %p94 = scmp.eq.s32.totalorder %s26, 0
      %p95 = por %p93, %p94
      %s97 = sadd.s32 %s96, 1
      %p100 = scmp.eq.s32.totalorder %s20, 3
      %p101 = scmp.ne.s32.totalorder %s96, %s98
      %p102 = scmp.eq.s32.totalorder %s20, 0
      %p103 = por %p101, %p102
      %p104 = scmp.ne.s32.totalorder %s96, %s98
      %p105 = scmp.eq.s32.totalorder %s25, 3
      %p106 = por %p104, %p105
      %p107 = scmp.ne.s32.totalorder %s98, %s99
      %p108 = scmp.eq.s32.totalorder %s25, 0
      %p109 = por %p107, %p108
      %p110 = scmp.ne.s32.totalorder %s98, %s99
      %p111 = scmp.eq.s32.totalorder %s26, 3
      %p112 = por %p110, %p111
      %p114 = scmp.ne.s32.totalorder %s99, %s113
      %p115 = scmp.eq.s32.totalorder %s26, 0
      %p116 = por %p114, %p115
      %s118 = sadd.s32 %s117, 1
      %p121 = scmp.eq.s32.totalorder %s20, 3
      %p122 = scmp.ne.s32.totalorder %s117, %s119
      %p123 = scmp.eq.s32.totalorder %s20, 0
      %p124 = por %p122, %p123
      %p125 = scmp.ne.s32.totalorder %s117, %s119
      %p126 = scmp.eq.s32.totalorder %s25, 3
      %p127 = por %p125, %p126
      %p128 = scmp.ne.s32.totalorder %s119, %s120
      %p129 = scmp.eq.s32.totalorder %s25, 0
      %p130 = por %p128, %p129
      %p131 = scmp.ne.s32.totalorder %s119, %s120
      %p132 = scmp.eq.s32.totalorder %s26, 3
      %p133 = por %p131, %p132
      %p135 = scmp.ne.s32.totalorder %s120, %s134
      %p136 = scmp.eq.s32.totalorder %s26, 0
      %p137 = por %p135, %p136
      %s139 = sadd.s32 %s138, 1
      %p142 = scmp.eq.s32.totalorder %s20, 3
      %p143 = scmp.ne.s32.totalorder %s138, %s140
      %p144 = scmp.eq.s32.totalorder %s20, 0
      %p145 = por %p143, %p144
      %p146 = scmp.ne.s32.totalorder %s138, %s140
      %p147 = scmp.eq.s32.totalorder %s25, 3
      %p148 = por %p146, %p147
      %p149 = scmp.ne.s32.totalorder %s140, %s141
      %p150 = scmp.eq.s32.totalorder %s25, 0
      %p151 = por %p149, %p150
      %p152 = scmp.ne.s32.totalorder %s140, %s141
      %p153 = scmp.eq.s32.totalorder %s26, 3
      %p154 = por %p152, %p153
      %p156 = scmp.ne.s32.totalorder %s141, %s155
      %p157 = scmp.eq.s32.totalorder %s26, 0
      %p158 = por %p156, %p157
      %s160 = sadd.s32 %s159, 1
      %p163 = scmp.eq.s32.totalorder %s20, 3
      %p164 = scmp.ne.s32.totalorder %s159, %s161
      %p165 = scmp.eq.s32.totalorder %s20, 0
      %p166 = por %p164, %p165
      %p167 = scmp.ne.s32.totalorder %s159, %s161
      %p168 = scmp.eq.s32.totalorder %s25, 3
      %p169 = por %p167, %p168
      %p170 = scmp.ne.s32.totalorder %s161, %s162
      %p171 = scmp.eq.s32.totalorder %s25, 0
      %p172 = por %p170, %p171
      %p173 = scmp.ne.s32.totalorder %s161, %s162
      %p174 = scmp.eq.s32.totalorder %s26, 3
      %p175 = por %p173, %p174
      %p177 = scmp.ne.s32.totalorder %s162, %s176
      %p178 = scmp.eq.s32.totalorder %s26, 0
      %p179 = por %p177, %p178
      %s180 = ssub.s32 %s20, %s27
      %p181 = scmp.eq.s32.totalorder %s180, 0
      %s183 = sadd.s32 %s182, 1
      %s184 = scalar_select %p181, %s182, %s183
      %p187 = pneg %p181
      %p188 = scmp.eq.s32.totalorder %s20, 3
      %p189 = por %p187, %p188
      %p190 = scmp.ne.s32.totalorder %s182, %s185
      %p191 = scmp.eq.s32.totalorder %s20, 0
      %p192 = por %p190, %p191
      %p193 = scmp.ne.s32.totalorder %s182, %s185
      %p194 = scmp.eq.s32.totalorder %s25, 3
      %p195 = por %p193, %p194
      %p196 = scmp.ne.s32.totalorder %s185, %s186
      %p197 = scmp.eq.s32.totalorder %s25, 0
      %p198 = por %p196, %p197
      %p199 = scmp.ne.s32.totalorder %s185, %s186
      %p200 = scmp.eq.s32.totalorder %s26, 3
      %p201 = por %p199, %p200
      %p203 = scmp.ne.s32.totalorder %s186, %s202
      %p204 = scmp.eq.s32.totalorder %s26, 0
      %p205 = por %p203, %p204
      %p206 = scmp.le.s32.totalorder 1, %s20
      %p207 = scmp.lt.s32.totalorder %s20, 5
      %p208 = pnand %p206, %p207
      %p209 = pneg %p208
      // Predicated region
      $region9: #{tpu_custom_call.1} parent=5 // pred_check
        _
      $region10: #{tpu_custom_call.1} parent=5 // pred_check_branch
        %211 = sbr.rel (%p208) target = $region12
      $region11: #{tpu_custom_call.1} parent=5 // pred_region
        %s212 = ssub.s32 %s20, 1
        // Predicated region
        $region13: #{tpu_custom_call.1} parent=11 // pred_check
          %p213 = pneg %p67
        $region14: #{tpu_custom_call.1} parent=11 // pred_check_branch
          %215 = sbr.rel (%p213) target = $region16
        $region15: #{tpu_custom_call.1} parent=11 // pred_region
          _
        $region16: #{tpu_custom_call.1} parent=11 // pred_fallthru
          _
        // Predicated region
        $region17: #{tpu_custom_call.1} parent=11 // pred_check
          %p216 = pneg %p88
        $region18: #{tpu_custom_call.1} parent=11 // pred_check_branch
          %218 = sbr.rel (%p216) target = $region20
        $region19: #{tpu_custom_call.1} parent=11 // pred_region
          _
        $region20: #{tpu_custom_call.1} parent=11 // pred_fallthru
          _
        // Predicated region
        $region21: #{tpu_custom_call.1} parent=11 // pred_check
          %p219 = pneg %p109
        $region22: #{tpu_custom_call.1} parent=11 // pred_check_branch
          %221 = sbr.rel (%p219) target = $region24
        $region23: #{tpu_custom_call.1} parent=11 // pred_region
          %s223 = ssub.s32 4096, 4096
          %224 = vsyncadd [#allocation6], %s223
          %s225 = sshll.u32 [#allocation5], 4
          %s226 = int_to_ptr.vmem [resolvable:$true] %s225
          %231 = dma.hbm_to_vmem [thread:$0]  %s3, 4096, %s226, [#allocation6], 256, 256, 16
        $region24: #{tpu_custom_call.1} parent=11 // pred_fallthru
          _
        // Predicated region
        $region25: #{tpu_custom_call.1} parent=11 // pred_check
          %p232 = pneg %p130
        $region26: #{tpu_custom_call.1} parent=11 // pred_check_branch
          %234 = sbr.rel (%p232) target = $region28
        $region27: #{tpu_custom_call.1} parent=11 // pred_region
          _
        $region28: #{tpu_custom_call.1} parent=11 // pred_fallthru
          _
        // Predicated region
        $region29: #{tpu_custom_call.1} parent=11 // pred_check
          %p235 = pneg %p151
        $region30: #{tpu_custom_call.1} parent=11 // pred_check_branch
          %237 = sbr.rel (%p235) target = $region32
        $region31: #{tpu_custom_call.1} parent=11 // pred_region
          %s239 = ssub.s32 4096, 4096
          %240 = vsyncadd [#allocation6], %s239
          %s241 = sshll.u32 [#allocation7], 4
          %s242 = int_to_ptr.vmem [resolvable:$true] %s241
          %247 = dma.hbm_to_vmem [thread:$0]  %s5, 4096, %s242, [#allocation6], 64, 64, 4
        $region32: #{tpu_custom_call.1} parent=11 // pred_fallthru
          _
        // Predicated region
        $region33: #{tpu_custom_call.1} parent=11 // pred_check
          %p248 = pneg %p172
        $region34: #{tpu_custom_call.1} parent=11 // pred_check_branch
          %250 = sbr.rel (%p248) target = $region36
        $region35: #{tpu_custom_call.1} parent=11 // pred_region
          _
        $region36: #{tpu_custom_call.1} parent=11 // pred_fallthru
          _
      $region12: #{tpu_custom_call.1} parent=5 // pred_fallthru
        _
      %p251 = scmp.lt.s32.totalorder %s20, 4
      // Predicated region
      $region37: #{tpu_custom_call.1} parent=5 // pred_check
        %p252 = pneg %p251
      $region38: #{tpu_custom_call.1} parent=5 // pred_check_branch
        %254 = sbr.rel (%p252) target = $region40
      $region39: #{tpu_custom_call.1} parent=5 // pred_region
        // Predicated region
        $region41: #{tpu_custom_call.1} parent=39 // pred_check
          %p255 = pneg %p40
        $region42: #{tpu_custom_call.1} parent=39 // pred_check_branch
          %257 = sbr.rel (%p255) target = $region44
        $region43: #{tpu_custom_call.1} parent=39 // pred_region
          %s258 = sand.u32 %s30, 1
          %s259 = scalar_lea.sflag [#allocation3], %s258
          %s260 = sand.u32 %s30, 1
          %s261 = smul.addr %s260, 512
          %s262 = scalar_lea.vmem [#allocation2], %s261
          %s263 = smul.u32 64, %s20
          %s265 = ssub.s32 8192, 8192
          %266 = vsyncadd %s259, %s265
          %s267 = smul.addr %s263, 128
          %s268 = scalar_lea.hbm %s0, %s267
          %s269 = sshll.u32 %s262, 4
          %s270 = int_to_ptr.vmem [resolvable:$true] %s269
          %275 = dma.hbm_to_vmem [thread:$0]  %s268, 8192, %s270, %s259, 128, 128, 8
        $region44: #{tpu_custom_call.1} parent=39 // pred_fallthru
          _
      $region40: #{tpu_custom_call.1} parent=5 // pred_fallthru
        _
      %p276 = scmp.le.s32.totalorder 1, %s20
      %p277 = scmp.lt.s32.totalorder %s20, 5
      %p278 = pnand %p276, %p277
      %p279 = pneg %p278
      // Predicated region
      $region45: #{tpu_custom_call.1} parent=5 // pred_check
        _
      $region46: #{tpu_custom_call.1} parent=5 // pred_check_branch
        %281 = sbr.rel (%p278) target = $region48
      $region47: #{tpu_custom_call.1} parent=5 // pred_region
        %s282 = ssub.s32 %s20, 1
        %s283 = sand.u32 %s33, 1
        %s284 = scalar_lea.sflag [#allocation3], %s283
        %s285 = sand.u32 %s33, 1
        %s286 = smul.addr %s285, 512
        %s287 = scalar_lea.vmem [#allocation2], %s286
        // Predicated region
        $region49: #{tpu_custom_call.1} parent=47 // pred_check
          %p288 = pneg %p46
        $region50: #{tpu_custom_call.1} parent=47 // pred_check_branch
          %290 = sbr.rel (%p288) target = $region52
        $region51: #{tpu_custom_call.1} parent=47 // pred_region
          %291 = dma.done %s284, 8192
        $region52: #{tpu_custom_call.1} parent=47 // pred_fallthru
          _
        // Predicated region
        $region53: #{tpu_custom_call.1} parent=47 // pred_check
          %p292 = pneg %p109
        $region54: #{tpu_custom_call.1} parent=47 // pred_check_branch
          %294 = sbr.rel (%p292) target = $region56
        $region55: #{tpu_custom_call.1} parent=47 // pred_region
          %295 = dma.done [#allocation6], 4096
        $region56: #{tpu_custom_call.1} parent=47 // pred_fallthru
          _
        // Predicated region
        $region57: #{tpu_custom_call.1} parent=47 // pred_check
          %p296 = pneg %p151
        $region58: #{tpu_custom_call.1} parent=47 // pred_check_branch
          %298 = sbr.rel (%p296) target = $region60
        $region59: #{tpu_custom_call.1} parent=47 // pred_region
          %299 = dma.done [#allocation6], 4096
        $region60: #{tpu_custom_call.1} parent=47 // pred_fallthru
          _
        %s300 = sand.u32 %s33, 1
        %s301 = scalar_lea.sflag [#allocation3], %s300
        %s302 = sand.u32 %s33, 1
        %s303 = smul.addr %s302, 512
        %s304 = scalar_lea.vmem [#allocation2], %s303
        %p305 = pneg %p46
        %p306 = pneg %p43
        %p307 = pneg %p67
        %p308 = pneg %p64
        %p309 = pneg %p88
        %p310 = pneg %p85
        %p311 = pneg %p109
        %p312 = pneg %p106
        %p313 = pneg %p130
        %p314 = pneg %p127
        %p315 = pneg %p151
        %p316 = pneg %p148
        %p317 = pneg %p172
        %p318 = pneg %p169
        %p319 = pneg %p198
        %p320 = pneg %p195
        %s321 = sand.u32 %s185, 1
        %s322 = scalar_lea.sflag [#allocation4], %s321
        %s323 = sand.u32 %s185, 1
        %s324 = smul.addr %s323, 512
        %s325 = scalar_lea.vmem [#allocation8], %s324
        %s326 = smul.u32 64, %s25
        %s327 = smul.u32 64, %s25
        %v329 = vld [vmem:[%s287] sm:$0xff]
        %v330 = vld [vmem:[%s287 + $0x8] sm:$0xff]
        %v331 = vld [vmem:[%s287 + $0x10] sm:$0xff]
        %v332 = vld [vmem:[%s287 + $0x18] sm:$0xff]
        %v333 = vld [vmem:[%s287 + $0x20] sm:$0xff]
        %v334 = vld [vmem:[%s287 + $0x28] sm:$0xff]
        %v335 = vld [vmem:[%s287 + $0x30] sm:$0xff]
        %v336 = vld [vmem:[%s287 + $0x38] sm:$0xff]
        %v337 = vld [vmem:[%s287 + $0x40] sm:$0xff]
        %v338 = vld [vmem:[%s287 + $0x48] sm:$0xff]
        %v339 = vld [vmem:[%s287 + $0x50] sm:$0xff]
        %v340 = vld [vmem:[%s287 + $0x58] sm:$0xff]
        %v341 = vld [vmem:[%s287 + $0x60] sm:$0xff]
        %v342 = vld [vmem:[%s287 + $0x68] sm:$0xff]
        %v343 = vld [vmem:[%s287 + $0x70] sm:$0xff]
        %v344 = vld [vmem:[%s287 + $0x78] sm:$0xff]
        %v345 = vld [vmem:[%s287 + $0x80] sm:$0xff]
        %v346 = vld [vmem:[%s287 + $0x88] sm:$0xff]
        %v347 = vld [vmem:[%s287 + $0x90] sm:$0xff]
        %v348 = vld [vmem:[%s287 + $0x98] sm:$0xff]
        %v349 = vld [vmem:[%s287 + $0xa0] sm:$0xff]
        %v350 = vld [vmem:[%s287 + $0xa8] sm:$0xff]
        %v351 = vld [vmem:[%s287 + $0xb0] sm:$0xff]
        %v352 = vld [vmem:[%s287 + $0xb8] sm:$0xff]
        %v353 = vld [vmem:[%s287 + $0xc0] sm:$0xff]
        %v354 = vld [vmem:[%s287 + $0xc8] sm:$0xff]
        %v355 = vld [vmem:[%s287 + $0xd0] sm:$0xff]
        %v356 = vld [vmem:[%s287 + $0xd8] sm:$0xff]
        %v357 = vld [vmem:[%s287 + $0xe0] sm:$0xff]
        %v358 = vld [vmem:[%s287 + $0xe8] sm:$0xff]
        %v359 = vld [vmem:[%s287 + $0xf0] sm:$0xff]
        %v360 = vld [vmem:[%s287 + $0xf8] sm:$0xff]
        %v361 = vld [vmem:[%s287 + $0x100] sm:$0xff]
        %v362 = vld [vmem:[%s287 + $0x108] sm:$0xff]
        %v363 = vld [vmem:[%s287 + $0x110] sm:$0xff]
        %v364 = vld [vmem:[%s287 + $0x118] sm:$0xff]
        %v365 = vld [vmem:[%s287 + $0x120] sm:$0xff]
        %v366 = vld [vmem:[%s287 + $0x128] sm:$0xff]
        %v367 = vld [vmem:[%s287 + $0x130] sm:$0xff]
        %v368 = vld [vmem:[%s287 + $0x138] sm:$0xff]
        %v369 = vld [vmem:[%s287 + $0x140] sm:$0xff]
        %v370 = vld [vmem:[%s287 + $0x148] sm:$0xff]
        %v371 = vld [vmem:[%s287 + $0x150] sm:$0xff]
        %v372 = vld [vmem:[%s287 + $0x158] sm:$0xff]
        %v373 = vld [vmem:[%s287 + $0x160] sm:$0xff]
        %v374 = vld [vmem:[%s287 + $0x168] sm:$0xff]
        %v375 = vld [vmem:[%s287 + $0x170] sm:$0xff]
        %v376 = vld [vmem:[%s287 + $0x178] sm:$0xff]
        %v377 = vld [vmem:[%s287 + $0x180] sm:$0xff]
        %v378 = vld [vmem:[%s287 + $0x188] sm:$0xff]
        %v379 = vld [vmem:[%s287 + $0x190] sm:$0xff]
        %v380 = vld [vmem:[%s287 + $0x198] sm:$0xff]
        %v381 = vld [vmem:[%s287 + $0x1a0] sm:$0xff]
        %v382 = vld [vmem:[%s287 + $0x1a8] sm:$0xff]
        %v383 = vld [vmem:[%s287 + $0x1b0] sm:$0xff]
        %v384 = vld [vmem:[%s287 + $0x1b8] sm:$0xff]
        %v385 = vld [vmem:[%s287 + $0x1c0] sm:$0xff]
        %v386 = vld [vmem:[%s287 + $0x1c8] sm:$0xff]
        %v387 = vld [vmem:[%s287 + $0x1d0] sm:$0xff]
        %v388 = vld [vmem:[%s287 + $0x1d8] sm:$0xff]
        %v389 = vld [vmem:[%s287 + $0x1e0] sm:$0xff]
        %v390 = vld [vmem:[%s287 + $0x1e8] sm:$0xff]
        %v391 = vld [vmem:[%s287 + $0x1f0] sm:$0xff]
        %v392 = vld [vmem:[%s287 + $0x1f8] sm:$0xff]
        %393 = vadd.xlane.f32.xlu0 %v329
        %v394 = vpop.xlane.xlu0 %393
        %395 = vadd.xlane.f32.xlu0 %v330
        %v396 = vpop.xlane.xlu0 %395
        %397 = vadd.xlane.f32.xlu0 %v331
        %v398 = vpop.xlane.xlu0 %397
        %399 = vadd.xlane.f32.xlu0 %v332
        %v400 = vpop.xlane.xlu0 %399
        %401 = vadd.xlane.f32.xlu0 %v333
        %v402 = vpop.xlane.xlu0 %401
        %403 = vadd.xlane.f32.xlu0 %v334
        %v404 = vpop.xlane.xlu0 %403
        %405 = vadd.xlane.f32.xlu0 %v335
        %v406 = vpop.xlane.xlu0 %405
        %407 = vadd.xlane.f32.xlu0 %v336
        %v408 = vpop.xlane.xlu0 %407
        %409 = vadd.xlane.f32.xlu0 %v337
        %v410 = vpop.xlane.xlu0 %409
        %411 = vadd.xlane.f32.xlu0 %v338
        %v412 = vpop.xlane.xlu0 %411
        %413 = vadd.xlane.f32.xlu0 %v339
        %v414 = vpop.xlane.xlu0 %413
        %415 = vadd.xlane.f32.xlu0 %v340
        %v416 = vpop.xlane.xlu0 %415
        %417 = vadd.xlane.f32.xlu0 %v341
        %v418 = vpop.xlane.xlu0 %417
        %419 = vadd.xlane.f32.xlu0 %v342
        %v420 = vpop.xlane.xlu0 %419
        %421 = vadd.xlane.f32.xlu0 %v343
        %v422 = vpop.xlane.xlu0 %421
        %423 = vadd.xlane.f32.xlu0 %v344
        %v424 = vpop.xlane.xlu0 %423
        %425 = vadd.xlane.f32.xlu0 %v345
        %v426 = vpop.xlane.xlu0 %425
        %427 = vadd.xlane.f32.xlu0 %v346
        %v428 = vpop.xlane.xlu0 %427
        %429 = vadd.xlane.f32.xlu0 %v347
        %v430 = vpop.xlane.xlu0 %429
        %431 = vadd.xlane.f32.xlu0 %v348
        %v432 = vpop.xlane.xlu0 %431
        %433 = vadd.xlane.f32.xlu0 %v349
        %v434 = vpop.xlane.xlu0 %433
        %435 = vadd.xlane.f32.xlu0 %v350
        %v436 = vpop.xlane.xlu0 %435
        %437 = vadd.xlane.f32.xlu0 %v351
        %v438 = vpop.xlane.xlu0 %437
        %439 = vadd.xlane.f32.xlu0 %v352
        %v440 = vpop.xlane.xlu0 %439
        %441 = vadd.xlane.f32.xlu0 %v353
        %v442 = vpop.xlane.xlu0 %441
        %443 = vadd.xlane.f32.xlu0 %v354
        %v444 = vpop.xlane.xlu0 %443
        %445 = vadd.xlane.f32.xlu0 %v355
        %v446 = vpop.xlane.xlu0 %445
        %447 = vadd.xlane.f32.xlu0 %v356
        %v448 = vpop.xlane.xlu0 %447
        %449 = vadd.xlane.f32.xlu0 %v357
        %v450 = vpop.xlane.xlu0 %449
        %451 = vadd.xlane.f32.xlu0 %v358
        %v452 = vpop.xlane.xlu0 %451
        %453 = vadd.xlane.f32.xlu0 %v359
        %v454 = vpop.xlane.xlu0 %453
        %455 = vadd.xlane.f32.xlu0 %v360
        %v456 = vpop.xlane.xlu0 %455
        %457 = vadd.xlane.f32.xlu0 %v361
        %v458 = vpop.xlane.xlu0 %457
        %459 = vadd.xlane.f32.xlu0 %v362
        %v460 = vpop.xlane.xlu0 %459
        %461 = vadd.xlane.f32.xlu0 %v363
        %v462 = vpop.xlane.xlu0 %461
        %463 = vadd.xlane.f32.xlu0 %v364
        %v464 = vpop.xlane.xlu0 %463
        %465 = vadd.xlane.f32.xlu0 %v365
        %v466 = vpop.xlane.xlu0 %465
        %467 = vadd.xlane.f32.xlu0 %v366
        %v468 = vpop.xlane.xlu0 %467
        %469 = vadd.xlane.f32.xlu0 %v367
        %v470 = vpop.xlane.xlu0 %469
        %471 = vadd.xlane.f32.xlu0 %v368
        %v472 = vpop.xlane.xlu0 %471
        %473 = vadd.xlane.f32.xlu0 %v369
        %v474 = vpop.xlane.xlu0 %473
        %475 = vadd.xlane.f32.xlu0 %v370
        %v476 = vpop.xlane.xlu0 %475
        %477 = vadd.xlane.f32.xlu0 %v371
        %v478 = vpop.xlane.xlu0 %477
        %479 = vadd.xlane.f32.xlu0 %v372
        %v480 = vpop.xlane.xlu0 %479
        %481 = vadd.xlane.f32.xlu0 %v373
        %v482 = vpop.xlane.xlu0 %481
        %483 = vadd.xlane.f32.xlu0 %v374
        %v484 = vpop.xlane.xlu0 %483
        %485 = vadd.xlane.f32.xlu0 %v375
        %v486 = vpop.xlane.xlu0 %485
        %487 = vadd.xlane.f32.xlu0 %v376
        %v488 = vpop.xlane.xlu0 %487
        %489 = vadd.xlane.f32.xlu0 %v377
        %v490 = vpop.xlane.xlu0 %489
        %491 = vadd.xlane.f32.xlu0 %v378
        %v492 = vpop.xlane.xlu0 %491
        %493 = vadd.xlane.f32.xlu0 %v379
        %v494 = vpop.xlane.xlu0 %493
        %495 = vadd.xlane.f32.xlu0 %v380
        %v496 = vpop.xlane.xlu0 %495
        %497 = vadd.xlane.f32.xlu0 %v381
        %v498 = vpop.xlane.xlu0 %497
        %499 = vadd.xlane.f32.xlu0 %v382
        %v500 = vpop.xlane.xlu0 %499
        %501 = vadd.xlane.f32.xlu0 %v383
        %v502 = vpop.xlane.xlu0 %501
        %503 = vadd.xlane.f32.xlu0 %v384
        %v504 = vpop.xlane.xlu0 %503
        %505 = vadd.xlane.f32.xlu0 %v385
        %v506 = vpop.xlane.xlu0 %505
        %507 = vadd.xlane.f32.xlu0 %v386
        %v508 = vpop.xlane.xlu0 %507
        %509 = vadd.xlane.f32.xlu0 %v387
        %v510 = vpop.xlane.xlu0 %509
        %511 = vadd.xlane.f32.xlu0 %v388
        %v512 = vpop.xlane.xlu0 %511
        %513 = vadd.xlane.f32.xlu0 %v389
        %v514 = vpop.xlane.xlu0 %513
        %515 = vadd.xlane.f32.xlu0 %v390
        %v516 = vpop.xlane.xlu0 %515
        %517 = vadd.xlane.f32.xlu0 %v391
        %v518 = vpop.xlane.xlu0 %517
        %519 = vadd.xlane.f32.xlu0 %v392
        %v520 = vpop.xlane.xlu0 %519
        %v521 = vrcp.pop 128.0
        %v522 = vmul.f32 %v394, %v521
        %v523 = vmul.f32 %v396, %v521
        %v524 = vmul.f32 %v398, %v521
        %v525 = vmul.f32 %v400, %v521
        %v526 = vmul.f32 %v402, %v521
        %v527 = vmul.f32 %v404, %v521
        %v528 = vmul.f32 %v406, %v521
        %v529 = vmul.f32 %v408, %v521
        %v530 = vmul.f32 %v410, %v521
        %v531 = vmul.f32 %v412, %v521
        %v532 = vmul.f32 %v414, %v521
        %v533 = vmul.f32 %v416, %v521
        %v534 = vmul.f32 %v418, %v521
        %v535 = vmul.f32 %v420, %v521
        %v536 = vmul.f32 %v422, %v521
        %v537 = vmul.f32 %v424, %v521
        %v538 = vmul.f32 %v426, %v521
        %v539 = vmul.f32 %v428, %v521
        %v540 = vmul.f32 %v430, %v521
        %v541 = vmul.f32 %v432, %v521
        %v542 = vmul.f32 %v434, %v521
        %v543 = vmul.f32 %v436, %v521
        %v544 = vmul.f32 %v438, %v521
        %v545 = vmul.f32 %v440, %v521
        %v546 = vmul.f32 %v442, %v521
        %v547 = vmul.f32 %v444, %v521
        %v548 = vmul.f32 %v446, %v521
        %v549 = vmul.f32 %v448, %v521
        %v550 = vmul.f32 %v450, %v521
        %v551 = vmul.f32 %v452, %v521
        %v552 = vmul.f32 %v454, %v521
        %v553 = vmul.f32 %v456, %v521
        %v554 = vmul.f32 %v458, %v521
        %v555 = vmul.f32 %v460, %v521
        %v556 = vmul.f32 %v462, %v521
        %v557 = vmul.f32 %v464, %v521
        %v558 = vmul.f32 %v466, %v521
        %v559 = vmul.f32 %v468, %v521
        %v560 = vmul.f32 %v470, %v521
        %v561 = vmul.f32 %v472, %v521
        %v562 = vmul.f32 %v474, %v521
        %v563 = vmul.f32 %v476, %v521
        %v564 = vmul.f32 %v478, %v521
        %v565 = vmul.f32 %v480, %v521
        %v566 = vmul.f32 %v482, %v521
        %v567 = vmul.f32 %v484, %v521
        %v568 = vmul.f32 %v486, %v521
        %v569 = vmul.f32 %v488, %v521
        %v570 = vmul.f32 %v490, %v521
        %v571 = vmul.f32 %v492, %v521
        %v572 = vmul.f32 %v494, %v521
        %v573 = vmul.f32 %v496, %v521
        %v574 = vmul.f32 %v498, %v521
        %v575 = vmul.f32 %v500, %v521
        %v576 = vmul.f32 %v502, %v521
        %v577 = vmul.f32 %v504, %v521
        %v578 = vmul.f32 %v506, %v521
        %v579 = vmul.f32 %v508, %v521
        %v580 = vmul.f32 %v510, %v521
        %v581 = vmul.f32 %v512, %v521
        %v582 = vmul.f32 %v514, %v521
        %v583 = vmul.f32 %v516, %v521
        %v584 = vmul.f32 %v518, %v521
        %v585 = vmul.f32 %v520, %v521
        %v586 = vsub.f32 %v329, %v522
        %v587 = vsub.f32 %v330, %v523
        %v588 = vsub.f32 %v331, %v524
        %v589 = vsub.f32 %v332, %v525
        %v590 = vsub.f32 %v333, %v526
        %v591 = vsub.f32 %v334, %v527
        %v592 = vsub.f32 %v335, %v528
        %v593 = vsub.f32 %v336, %v529
        %v594 = vsub.f32 %v337, %v530
        %v595 = vsub.f32 %v338, %v531
        %v596 = vsub.f32 %v339, %v532
        %v597 = vsub.f32 %v340, %v533
        %v598 = vsub.f32 %v341, %v534
        %v599 = vsub.f32 %v342, %v535
        %v600 = vsub.f32 %v343, %v536
        %v601 = vsub.f32 %v344, %v537
        %v602 = vsub.f32 %v345, %v538
        %v603 = vsub.f32 %v346, %v539
        %v604 = vsub.f32 %v347, %v540
        %v605 = vsub.f32 %v348, %v541
        %v606 = vsub.f32 %v349, %v542
        %v607 = vsub.f32 %v350, %v543
        %v608 = vsub.f32 %v351, %v544
        %v609 = vsub.f32 %v352, %v545
        %v610 = vsub.f32 %v353, %v546
        %v611 = vsub.f32 %v354, %v547
        %v612 = vsub.f32 %v355, %v548
        %v613 = vsub.f32 %v356, %v549
        %v614 = vsub.f32 %v357, %v550
        %v615 = vsub.f32 %v358, %v551
        %v616 = vsub.f32 %v359, %v552
        %v617 = vsub.f32 %v360, %v553
        %v618 = vsub.f32 %v361, %v554
        %v619 = vsub.f32 %v362, %v555
        %v620 = vsub.f32 %v363, %v556
        %v621 = vsub.f32 %v364, %v557
        %v622 = vsub.f32 %v365, %v558
        %v623 = vsub.f32 %v366, %v559
        %v624 = vsub.f32 %v367, %v560
        %v625 = vsub.f32 %v368, %v561
        %v626 = vsub.f32 %v369, %v562
        %v627 = vsub.f32 %v370, %v563
        %v628 = vsub.f32 %v371, %v564
        %v629 = vsub.f32 %v372, %v565
        %v630 = vsub.f32 %v373, %v566
        %v631 = vsub.f32 %v374, %v567
        %v632 = vsub.f32 %v375, %v568
        %v633 = vsub.f32 %v376, %v569
        %v634 = vsub.f32 %v377, %v570
        %v635 = vsub.f32 %v378, %v571
        %v636 = vsub.f32 %v379, %v572
        %v637 = vsub.f32 %v380, %v573
        %v638 = vsub.f32 %v381, %v574
        %v639 = vsub.f32 %v382, %v575
        %v640 = vsub.f32 %v383, %v576
        %v641 = vsub.f32 %v384, %v577
        %v642 = vsub.f32 %v385, %v578
        %v643 = vsub.f32 %v386, %v579
        %v644 = vsub.f32 %v387, %v580
        %v645 = vsub.f32 %v388, %v581
        %v646 = vsub.f32 %v389, %v582
        %v647 = vsub.f32 %v390, %v583
        %v648 = vsub.f32 %v391, %v584
        %v649 = vsub.f32 %v392, %v585
        %v650 = vmul.f32 %v586, %v586
        %v651 = vmul.f32 %v587, %v587
        %v652 = vmul.f32 %v588, %v588
        %v653 = vmul.f32 %v589, %v589
        %v654 = vmul.f32 %v590, %v590
        %v655 = vmul.f32 %v591, %v591
        %v656 = vmul.f32 %v592, %v592
        %v657 = vmul.f32 %v593, %v593
        %v658 = vmul.f32 %v594, %v594
        %v659 = vmul.f32 %v595, %v595
        %v660 = vmul.f32 %v596, %v596
        %v661 = vmul.f32 %v597, %v597
        %v662 = vmul.f32 %v598, %v598
        %v663 = vmul.f32 %v599, %v599
        %v664 = vmul.f32 %v600, %v600
        %v665 = vmul.f32 %v601, %v601
        %v666 = vmul.f32 %v602, %v602
        %v667 = vmul.f32 %v603, %v603
        %v668 = vmul.f32 %v604, %v604
        %v669 = vmul.f32 %v605, %v605
        %v670 = vmul.f32 %v606, %v606
        %v671 = vmul.f32 %v607, %v607
        %v672 = vmul.f32 %v608, %v608
        %v673 = vmul.f32 %v609, %v609
        %v674 = vmul.f32 %v610, %v610
        %v675 = vmul.f32 %v611, %v611
        %v676 = vmul.f32 %v612, %v612
        %v677 = vmul.f32 %v613, %v613
        %v678 = vmul.f32 %v614, %v614
        %v679 = vmul.f32 %v615, %v615
        %v680 = vmul.f32 %v616, %v616
        %v681 = vmul.f32 %v617, %v617
        %v682 = vmul.f32 %v618, %v618
        %v683 = vmul.f32 %v619, %v619
        %v684 = vmul.f32 %v620, %v620
        %v685 = vmul.f32 %v621, %v621
        %v686 = vmul.f32 %v622, %v622
        %v687 = vmul.f32 %v623, %v623
        %v688 = vmul.f32 %v624, %v624
        %v689 = vmul.f32 %v625, %v625
        %v690 = vmul.f32 %v626, %v626
        %v691 = vmul.f32 %v627, %v627
        %v692 = vmul.f32 %v628, %v628
        %v693 = vmul.f32 %v629, %v629
        %v694 = vmul.f32 %v630, %v630
        %v695 = vmul.f32 %v631, %v631
        %v696 = vmul.f32 %v632, %v632
        %v697 = vmul.f32 %v633, %v633
        %v698 = vmul.f32 %v634, %v634
        %v699 = vmul.f32 %v635, %v635
        %v700 = vmul.f32 %v636, %v636
        %v701 = vmul.f32 %v637, %v637
        %v702 = vmul.f32 %v638, %v638
        %v703 = vmul.f32 %v639, %v639
        %v704 = vmul.f32 %v640, %v640
        %v705 = vmul.f32 %v641, %v641
        %v706 = vmul.f32 %v642, %v642
        %v707 = vmul.f32 %v643, %v643
        %v708 = vmul.f32 %v644, %v644
        %v709 = vmul.f32 %v645, %v645
        %v710 = vmul.f32 %v646, %v646
        %v711 = vmul.f32 %v647, %v647
        %v712 = vmul.f32 %v648, %v648
        %v713 = vmul.f32 %v649, %v649
        %714 = vadd.xlane.f32.xlu0 %v650
        %v715 = vpop.xlane.xlu0 %714
        %716 = vadd.xlane.f32.xlu0 %v651
        %v717 = vpop.xlane.xlu0 %716
        %718 = vadd.xlane.f32.xlu0 %v652
        %v719 = vpop.xlane.xlu0 %718
        %720 = vadd.xlane.f32.xlu0 %v653
        %v721 = vpop.xlane.xlu0 %720
        %722 = vadd.xlane.f32.xlu0 %v654
        %v723 = vpop.xlane.xlu0 %722
        %724 = vadd.xlane.f32.xlu0 %v655
        %v725 = vpop.xlane.xlu0 %724
        %726 = vadd.xlane.f32.xlu0 %v656
        %v727 = vpop.xlane.xlu0 %726
        %728 = vadd.xlane.f32.xlu0 %v657
        %v729 = vpop.xlane.xlu0 %728
        %730 = vadd.xlane.f32.xlu0 %v658
        %v731 = vpop.xlane.xlu0 %730
        %732 = vadd.xlane.f32.xlu0 %v659
        %v733 = vpop.xlane.xlu0 %732
        %734 = vadd.xlane.f32.xlu0 %v660
        %v735 = vpop.xlane.xlu0 %734
        %736 = vadd.xlane.f32.xlu0 %v661
        %v737 = vpop.xlane.xlu0 %736
        %738 = vadd.xlane.f32.xlu0 %v662
        %v739 = vpop.xlane.xlu0 %738
        %740 = vadd.xlane.f32.xlu0 %v663
        %v741 = vpop.xlane.xlu0 %740
        %742 = vadd.xlane.f32.xlu0 %v664
        %v743 = vpop.xlane.xlu0 %742
        %744 = vadd.xlane.f32.xlu0 %v665
        %v745 = vpop.xlane.xlu0 %744
        %746 = vadd.xlane.f32.xlu0 %v666
        %v747 = vpop.xlane.xlu0 %746
        %748 = vadd.xlane.f32.xlu0 %v667
        %v749 = vpop.xlane.xlu0 %748
        %750 = vadd.xlane.f32.xlu0 %v668
        %v751 = vpop.xlane.xlu0 %750
        %752 = vadd.xlane.f32.xlu0 %v669
        %v753 = vpop.xlane.xlu0 %752
        %754 = vadd.xlane.f32.xlu0 %v670
        %v755 = vpop.xlane.xlu0 %754
        %756 = vadd.xlane.f32.xlu0 %v671
        %v757 = vpop.xlane.xlu0 %756
        %758 = vadd.xlane.f32.xlu0 %v672
        %v759 = vpop.xlane.xlu0 %758
        %760 = vadd.xlane.f32.xlu0 %v673
        %v761 = vpop.xlane.xlu0 %760
        %762 = vadd.xlane.f32.xlu0 %v674
        %v763 = vpop.xlane.xlu0 %762
        %764 = vadd.xlane.f32.xlu0 %v675
        %v765 = vpop.xlane.xlu0 %764
        %766 = vadd.xlane.f32.xlu0 %v676
        %v767 = vpop.xlane.xlu0 %766
        %768 = vadd.xlane.f32.xlu0 %v677
        %v769 = vpop.xlane.xlu0 %768
        %770 = vadd.xlane.f32.xlu0 %v678
        %v771 = vpop.xlane.xlu0 %770
        %772 = vadd.xlane.f32.xlu0 %v679
        %v773 = vpop.xlane.xlu0 %772
        %774 = vadd.xlane.f32.xlu0 %v680
        %v775 = vpop.xlane.xlu0 %774
        %776 = vadd.xlane.f32.xlu0 %v681
        %v777 = vpop.xlane.xlu0 %776
        %778 = vadd.xlane.f32.xlu0 %v682
        %v779 = vpop.xlane.xlu0 %778
        %780 = vadd.xlane.f32.xlu0 %v683
        %v781 = vpop.xlane.xlu0 %780
        %782 = vadd.xlane.f32.xlu0 %v684
        %v783 = vpop.xlane.xlu0 %782
        %784 = vadd.xlane.f32.xlu0 %v685
        %v785 = vpop.xlane.xlu0 %784
        %786 = vadd.xlane.f32.xlu0 %v686
        %v787 = vpop.xlane.xlu0 %786
        %788 = vadd.xlane.f32.xlu0 %v687
        %v789 = vpop.xlane.xlu0 %788
        %790 = vadd.xlane.f32.xlu0 %v688
        %v791 = vpop.xlane.xlu0 %790
        %792 = vadd.xlane.f32.xlu0 %v689
        %v793 = vpop.xlane.xlu0 %792
        %794 = vadd.xlane.f32.xlu0 %v690
        %v795 = vpop.xlane.xlu0 %794
        %796 = vadd.xlane.f32.xlu0 %v691
        %v797 = vpop.xlane.xlu0 %796
        %798 = vadd.xlane.f32.xlu0 %v692
        %v799 = vpop.xlane.xlu0 %798
        %800 = vadd.xlane.f32.xlu0 %v693
        %v801 = vpop.xlane.xlu0 %800
        %802 = vadd.xlane.f32.xlu0 %v694
        %v803 = vpop.xlane.xlu0 %802
        %804 = vadd.xlane.f32.xlu0 %v695
        %v805 = vpop.xlane.xlu0 %804
        %806 = vadd.xlane.f32.xlu0 %v696
        %v807 = vpop.xlane.xlu0 %806
        %808 = vadd.xlane.f32.xlu0 %v697
        %v809 = vpop.xlane.xlu0 %808
        %810 = vadd.xlane.f32.xlu0 %v698
        %v811 = vpop.xlane.xlu0 %810
        %812 = vadd.xlane.f32.xlu0 %v699
        %v813 = vpop.xlane.xlu0 %812
        %814 = vadd.xlane.f32.xlu0 %v700
        %v815 = vpop.xlane.xlu0 %814
        %816 = vadd.xlane.f32.xlu0 %v701
        %v817 = vpop.xlane.xlu0 %816
        %818 = vadd.xlane.f32.xlu0 %v702
        %v819 = vpop.xlane.xlu0 %818
        %820 = vadd.xlane.f32.xlu0 %v703
        %v821 = vpop.xlane.xlu0 %820
        %822 = vadd.xlane.f32.xlu0 %v704
        %v823 = vpop.xlane.xlu0 %822
        %824 = vadd.xlane.f32.xlu0 %v705
        %v825 = vpop.xlane.xlu0 %824
        %826 = vadd.xlane.f32.xlu0 %v706
        %v827 = vpop.xlane.xlu0 %826
        %828 = vadd.xlane.f32.xlu0 %v707
        %v829 = vpop.xlane.xlu0 %828
        %830 = vadd.xlane.f32.xlu0 %v708
        %v831 = vpop.xlane.xlu0 %830
        %832 = vadd.xlane.f32.xlu0 %v709
        %v833 = vpop.xlane.xlu0 %832
        %834 = vadd.xlane.f32.xlu0 %v710
        %v835 = vpop.xlane.xlu0 %834
        %836 = vadd.xlane.f32.xlu0 %v711
        %v837 = vpop.xlane.xlu0 %836
        %838 = vadd.xlane.f32.xlu0 %v712
        %v839 = vpop.xlane.xlu0 %838
        %840 = vadd.xlane.f32.xlu0 %v713
        %v841 = vpop.xlane.xlu0 %840
        %v842 = vmul.f32 %v715, %v521
        %v843 = vmul.f32 %v717, %v521
        %v844 = vmul.f32 %v719, %v521
        %v845 = vmul.f32 %v721, %v521
        %v846 = vmul.f32 %v723, %v521
        %v847 = vmul.f32 %v725, %v521
        %v848 = vmul.f32 %v727, %v521
        %v849 = vmul.f32 %v729, %v521
        %v850 = vmul.f32 %v731, %v521
        %v851 = vmul.f32 %v733, %v521
        %v852 = vmul.f32 %v735, %v521
        %v853 = vmul.f32 %v737, %v521
        %v854 = vmul.f32 %v739, %v521
        %v855 = vmul.f32 %v741, %v521
        %v856 = vmul.f32 %v743, %v521
        %v857 = vmul.f32 %v745, %v521
        %v858 = vmul.f32 %v747, %v521
        %v859 = vmul.f32 %v749, %v521
        %v860 = vmul.f32 %v751, %v521
        %v861 = vmul.f32 %v753, %v521
        %v862 = vmul.f32 %v755, %v521
        %v863 = vmul.f32 %v757, %v521
        %v864 = vmul.f32 %v759, %v521
        %v865 = vmul.f32 %v761, %v521
        %v866 = vmul.f32 %v763, %v521
        %v867 = vmul.f32 %v765, %v521
        %v868 = vmul.f32 %v767, %v521
        %v869 = vmul.f32 %v769, %v521
        %v870 = vmul.f32 %v771, %v521
        %v871 = vmul.f32 %v773, %v521
        %v872 = vmul.f32 %v775, %v521
        %v873 = vmul.f32 %v777, %v521
        %v874 = vmul.f32 %v779, %v521
        %v875 = vmul.f32 %v781, %v521
        %v876 = vmul.f32 %v783, %v521
        %v877 = vmul.f32 %v785, %v521
        %v878 = vmul.f32 %v787, %v521
        %v879 = vmul.f32 %v789, %v521
        %v880 = vmul.f32 %v791, %v521
        %v881 = vmul.f32 %v793, %v521
        %v882 = vmul.f32 %v795, %v521
        %v883 = vmul.f32 %v797, %v521
        %v884 = vmul.f32 %v799, %v521
        %v885 = vmul.f32 %v801, %v521
        %v886 = vmul.f32 %v803, %v521
        %v887 = vmul.f32 %v805, %v521
        %v888 = vmul.f32 %v807, %v521
        %v889 = vmul.f32 %v809, %v521
        %v890 = vmul.f32 %v811, %v521
        %v891 = vmul.f32 %v813, %v521
        %v892 = vmul.f32 %v815, %v521
        %v893 = vmul.f32 %v817, %v521
        %v894 = vmul.f32 %v819, %v521
        %v895 = vmul.f32 %v821, %v521
        %v896 = vmul.f32 %v823, %v521
        %v897 = vmul.f32 %v825, %v521
        %v898 = vmul.f32 %v827, %v521
        %v899 = vmul.f32 %v829, %v521
        %v900 = vmul.f32 %v831, %v521
        %v901 = vmul.f32 %v833, %v521
        %v902 = vmul.f32 %v835, %v521
        %v903 = vmul.f32 %v837, %v521
        %v904 = vmul.f32 %v839, %v521
        %v905 = vmul.f32 %v841, %v521
        %v906 = vadd.f32 %v842, 1e-05
        %v907 = vadd.f32 %v843, 1e-05
        %v908 = vadd.f32 %v844, 1e-05
        %v909 = vadd.f32 %v845, 1e-05
        %v910 = vadd.f32 %v846, 1e-05
        %v911 = vadd.f32 %v847, 1e-05
        %v912 = vadd.f32 %v848, 1e-05
        %v913 = vadd.f32 %v849, 1e-05
        %v914 = vadd.f32 %v850, 1e-05
        %v915 = vadd.f32 %v851, 1e-05
        %v916 = vadd.f32 %v852, 1e-05
        %v917 = vadd.f32 %v853, 1e-05
        %v918 = vadd.f32 %v854, 1e-05
        %v919 = vadd.f32 %v855, 1e-05
        %v920 = vadd.f32 %v856, 1e-05
        %v921 = vadd.f32 %v857, 1e-05
        %v922 = vadd.f32 %v858, 1e-05
        %v923 = vadd.f32 %v859, 1e-05
        %v924 = vadd.f32 %v860, 1e-05
        %v925 = vadd.f32 %v861, 1e-05
        %v926 = vadd.f32 %v862, 1e-05
        %v927 = vadd.f32 %v863, 1e-05
        %v928 = vadd.f32 %v864, 1e-05
        %v929 = vadd.f32 %v865, 1e-05
        %v930 = vadd.f32 %v866, 1e-05
        %v931 = vadd.f32 %v867, 1e-05
        %v932 = vadd.f32 %v868, 1e-05
        %v933 = vadd.f32 %v869, 1e-05
        %v934 = vadd.f32 %v870, 1e-05
        %v935 = vadd.f32 %v871, 1e-05
        %v936 = vadd.f32 %v872, 1e-05
        %v937 = vadd.f32 %v873, 1e-05
        %v938 = vadd.f32 %v874, 1e-05
        %v939 = vadd.f32 %v875, 1e-05
        %v940 = vadd.f32 %v876, 1e-05
        %v941 = vadd.f32 %v877, 1e-05
        %v942 = vadd.f32 %v878, 1e-05
        %v943 = vadd.f32 %v879, 1e-05
        %v944 = vadd.f32 %v880, 1e-05
        %v945 = vadd.f32 %v881, 1e-05
        %v946 = vadd.f32 %v882, 1e-05
        %v947 = vadd.f32 %v883, 1e-05
        %v948 = vadd.f32 %v884, 1e-05
        %v949 = vadd.f32 %v885, 1e-05
        %v950 = vadd.f32 %v886, 1e-05
        %v951 = vadd.f32 %v887, 1e-05
        %v952 = vadd.f32 %v888, 1e-05
        %v953 = vadd.f32 %v889, 1e-05
        %v954 = vadd.f32 %v890, 1e-05
        %v955 = vadd.f32 %v891, 1e-05
        %v956 = vadd.f32 %v892, 1e-05
        %v957 = vadd.f32 %v893, 1e-05
        %v958 = vadd.f32 %v894, 1e-05
        %v959 = vadd.f32 %v895, 1e-05
        %v960 = vadd.f32 %v896, 1e-05
        %v961 = vadd.f32 %v897, 1e-05
        %v962 = vadd.f32 %v898, 1e-05
        %v963 = vadd.f32 %v899, 1e-05
        %v964 = vadd.f32 %v900, 1e-05
        %v965 = vadd.f32 %v901, 1e-05
        %v966 = vadd.f32 %v902, 1e-05
        %v967 = vadd.f32 %v903, 1e-05
        %v968 = vadd.f32 %v904, 1e-05
        %v969 = vadd.f32 %v905, 1e-05
        %v970 = vrsqrt.pop %v906
        %v971 = vrsqrt.pop %v907
        %v972 = vrsqrt.pop %v908
        %v973 = vrsqrt.pop %v909
        %v974 = vrsqrt.pop %v910
        %v975 = vrsqrt.pop %v911
        %v976 = vrsqrt.pop %v912
        %v977 = vrsqrt.pop %v913
        %v978 = vrsqrt.pop %v914
        %v979 = vrsqrt.pop %v915
        %v980 = vrsqrt.pop %v916
        %v981 = vrsqrt.pop %v917
        %v982 = vrsqrt.pop %v918
        %v983 = vrsqrt.pop %v919
        %v984 = vrsqrt.pop %v920
        %v985 = vrsqrt.pop %v921
        %v986 = vrsqrt.pop %v922
        %v987 = vrsqrt.pop %v923
        %v988 = vrsqrt.pop %v924
        %v989 = vrsqrt.pop %v925
        %v990 = vrsqrt.pop %v926
        %v991 = vrsqrt.pop %v927
        %v992 = vrsqrt.pop %v928
        %v993 = vrsqrt.pop %v929
        %v994 = vrsqrt.pop %v930
        %v995 = vrsqrt.pop %v931
        %v996 = vrsqrt.pop %v932
        %v997 = vrsqrt.pop %v933
        %v998 = vrsqrt.pop %v934
        %v999 = vrsqrt.pop %v935
        %v1000 = vrsqrt.pop %v936
        %v1001 = vrsqrt.pop %v937
        %v1002 = vrsqrt.pop %v938
        %v1003 = vrsqrt.pop %v939
        %v1004 = vrsqrt.pop %v940
        %v1005 = vrsqrt.pop %v941
        %v1006 = vrsqrt.pop %v942
        %v1007 = vrsqrt.pop %v943
        %v1008 = vrsqrt.pop %v944
        %v1009 = vrsqrt.pop %v945
        %v1010 = vrsqrt.pop %v946
        %v1011 = vrsqrt.pop %v947
        %v1012 = vrsqrt.pop %v948
        %v1013 = vrsqrt.pop %v949
        %v1014 = vrsqrt.pop %v950
        %v1015 = vrsqrt.pop %v951
        %v1016 = vrsqrt.pop %v952
        %v1017 = vrsqrt.pop %v953
        %v1018 = vrsqrt.pop %v954
        %v1019 = vrsqrt.pop %v955
        %v1020 = vrsqrt.pop %v956
        %v1021 = vrsqrt.pop %v957
        %v1022 = vrsqrt.pop %v958
        %v1023 = vrsqrt.pop %v959
        %v1024 = vrsqrt.pop %v960
        %v1025 = vrsqrt.pop %v961
        %v1026 = vrsqrt.pop %v962
        %v1027 = vrsqrt.pop %v963
        %v1028 = vrsqrt.pop %v964
        %v1029 = vrsqrt.pop %v965
        %v1030 = vrsqrt.pop %v966
        %v1031 = vrsqrt.pop %v967
        %v1032 = vrsqrt.pop %v968
        %v1033 = vrsqrt.pop %v969
        %v1034 = vmul.f32 %v586, %v970
        %v1035 = vmul.f32 %v587, %v971
        %v1036 = vmul.f32 %v588, %v972
        %v1037 = vmul.f32 %v589, %v973
        %v1038 = vmul.f32 %v590, %v974
        %v1039 = vmul.f32 %v591, %v975
        %v1040 = vmul.f32 %v592, %v976
        %v1041 = vmul.f32 %v593, %v977
        %v1042 = vmul.f32 %v594, %v978
        %v1043 = vmul.f32 %v595, %v979
        %v1044 = vmul.f32 %v596, %v980
        %v1045 = vmul.f32 %v597, %v981
        %v1046 = vmul.f32 %v598, %v982
        %v1047 = vmul.f32 %v599, %v983
        %v1048 = vmul.f32 %v600, %v984
        %v1049 = vmul.f32 %v601, %v985
        %v1050 = vmul.f32 %v602, %v986
        %v1051 = vmul.f32 %v603, %v987
        %v1052 = vmul.f32 %v604, %v988
        %v1053 = vmul.f32 %v605, %v989
        %v1054 = vmul.f32 %v606, %v990
        %v1055 = vmul.f32 %v607, %v991
        %v1056 = vmul.f32 %v608, %v992
        %v1057 = vmul.f32 %v609, %v993
        %v1058 = vmul.f32 %v610, %v994
        %v1059 = vmul.f32 %v611, %v995
        %v1060 = vmul.f32 %v612, %v996
        %v1061 = vmul.f32 %v613, %v997
        %v1062 = vmul.f32 %v614, %v998
        %v1063 = vmul.f32 %v615, %v999
        %v1064 = vmul.f32 %v616, %v1000
        %v1065 = vmul.f32 %v617, %v1001
        %v1066 = vmul.f32 %v618, %v1002
        %v1067 = vmul.f32 %v619, %v1003
        %v1068 = vmul.f32 %v620, %v1004
        %v1069 = vmul.f32 %v621, %v1005
        %v1070 = vmul.f32 %v622, %v1006
        %v1071 = vmul.f32 %v623, %v1007
        %v1072 = vmul.f32 %v624, %v1008
        %v1073 = vmul.f32 %v625, %v1009
        %v1074 = vmul.f32 %v626, %v1010
        %v1075 = vmul.f32 %v627, %v1011
        %v1076 = vmul.f32 %v628, %v1012
        %v1077 = vmul.f32 %v629, %v1013
        %v1078 = vmul.f32 %v630, %v1014
        %v1079 = vmul.f32 %v631, %v1015
        %v1080 = vmul.f32 %v632, %v1016
        %v1081 = vmul.f32 %v633, %v1017
        %v1082 = vmul.f32 %v634, %v1018
        %v1083 = vmul.f32 %v635, %v1019
        %v1084 = vmul.f32 %v636, %v1020
        %v1085 = vmul.f32 %v637, %v1021
        %v1086 = vmul.f32 %v638, %v1022
        %v1087 = vmul.f32 %v639, %v1023
        %v1088 = vmul.f32 %v640, %v1024
        %v1089 = vmul.f32 %v641, %v1025
        %v1090 = vmul.f32 %v642, %v1026
        %v1091 = vmul.f32 %v643, %v1027
        %v1092 = vmul.f32 %v644, %v1028
        %v1093 = vmul.f32 %v645, %v1029
        %v1094 = vmul.f32 %v646, %v1030
        %v1095 = vmul.f32 %v647, %v1031
        %v1096 = vmul.f32 %v648, %v1032
        %v1097 = vmul.f32 %v649, %v1033
        %v1098 = vld [vmem:[%s1] sm:$0x1]
        %v1100 = vlaneseq
        %v1101 = vshrl.u32 %v1100, 7
        %v1102 = vsub.s32 0, %v1101
        %v1103 = vrot.slane %v1098, %v1102
        %v1105 = vmul.f32 %v1034, %v1103
        %v1106 = vmul.f32 %v1035, %v1103
        %v1107 = vmul.f32 %v1036, %v1103
        %v1108 = vmul.f32 %v1037, %v1103
        %v1109 = vmul.f32 %v1038, %v1103
        %v1110 = vmul.f32 %v1039, %v1103
        %v1111 = vmul.f32 %v1040, %v1103
        %v1112 = vmul.f32 %v1041, %v1103
        %v1113 = vmul.f32 %v1042, %v1103
        %v1114 = vmul.f32 %v1043, %v1103
        %v1115 = vmul.f32 %v1044, %v1103
        %v1116 = vmul.f32 %v1045, %v1103
        %v1117 = vmul.f32 %v1046, %v1103
        %v1118 = vmul.f32 %v1047, %v1103
        %v1119 = vmul.f32 %v1048, %v1103
        %v1120 = vmul.f32 %v1049, %v1103
        %v1121 = vmul.f32 %v1050, %v1103
        %v1122 = vmul.f32 %v1051, %v1103
        %v1123 = vmul.f32 %v1052, %v1103
        %v1124 = vmul.f32 %v1053, %v1103
        %v1125 = vmul.f32 %v1054, %v1103
        %v1126 = vmul.f32 %v1055, %v1103
        %v1127 = vmul.f32 %v1056, %v1103
        %v1128 = vmul.f32 %v1057, %v1103
        %v1129 = vmul.f32 %v1058, %v1103
        %v1130 = vmul.f32 %v1059, %v1103
        %v1131 = vmul.f32 %v1060, %v1103
        %v1132 = vmul.f32 %v1061, %v1103
        %v1133 = vmul.f32 %v1062, %v1103
        %v1134 = vmul.f32 %v1063, %v1103
        %v1135 = vmul.f32 %v1064, %v1103
        %v1136 = vmul.f32 %v1065, %v1103
        %v1137 = vmul.f32 %v1066, %v1103
        %v1138 = vmul.f32 %v1067, %v1103
        %v1139 = vmul.f32 %v1068, %v1103
        %v1140 = vmul.f32 %v1069, %v1103
        %v1141 = vmul.f32 %v1070, %v1103
        %v1142 = vmul.f32 %v1071, %v1103
        %v1143 = vmul.f32 %v1072, %v1103
        %v1144 = vmul.f32 %v1073, %v1103
        %v1145 = vmul.f32 %v1074, %v1103
        %v1146 = vmul.f32 %v1075, %v1103
        %v1147 = vmul.f32 %v1076, %v1103
        %v1148 = vmul.f32 %v1077, %v1103
        %v1149 = vmul.f32 %v1078, %v1103
        %v1150 = vmul.f32 %v1079, %v1103
        %v1151 = vmul.f32 %v1080, %v1103
        %v1152 = vmul.f32 %v1081, %v1103
        %v1153 = vmul.f32 %v1082, %v1103
        %v1154 = vmul.f32 %v1083, %v1103
        %v1155 = vmul.f32 %v1084, %v1103
        %v1156 = vmul.f32 %v1085, %v1103
        %v1157 = vmul.f32 %v1086, %v1103
        %v1158 = vmul.f32 %v1087, %v1103
        %v1159 = vmul.f32 %v1088, %v1103
        %v1160 = vmul.f32 %v1089, %v1103
        %v1161 = vmul.f32 %v1090, %v1103
        %v1162 = vmul.f32 %v1091, %v1103
        %v1163 = vmul.f32 %v1092, %v1103
        %v1164 = vmul.f32 %v1093, %v1103
        %v1165 = vmul.f32 %v1094, %v1103
        %v1166 = vmul.f32 %v1095, %v1103
        %v1167 = vmul.f32 %v1096, %v1103
        %v1168 = vmul.f32 %v1097, %v1103
        %v1169 = vld [vmem:[%s2] sm:$0x1]
        %v1171 = vlaneseq
        %v1172 = vshrl.u32 %v1171, 7
        %v1173 = vsub.s32 0, %v1172
        %v1174 = vrot.slane %v1169, %v1173
        %v1176 = vadd.f32 %v1105, %v1174
        %v1177 = vadd.f32 %v1106, %v1174
        %v1178 = vadd.f32 %v1107, %v1174
        %v1179 = vadd.f32 %v1108, %v1174
        %v1180 = vadd.f32 %v1109, %v1174
        %v1181 = vadd.f32 %v1110, %v1174
        %v1182 = vadd.f32 %v1111, %v1174
        %v1183 = vadd.f32 %v1112, %v1174
        %v1184 = vadd.f32 %v1113, %v1174
        %v1185 = vadd.f32 %v1114, %v1174
        %v1186 = vadd.f32 %v1115, %v1174
        %v1187 = vadd.f32 %v1116, %v1174
        %v1188 = vadd.f32 %v1117, %v1174
        %v1189 = vadd.f32 %v1118, %v1174
        %v1190 = vadd.f32 %v1119, %v1174
        %v1191 = vadd.f32 %v1120, %v1174
        %v1192 = vadd.f32 %v1121, %v1174
        %v1193 = vadd.f32 %v1122, %v1174
        %v1194 = vadd.f32 %v1123, %v1174
        %v1195 = vadd.f32 %v1124, %v1174
        %v1196 = vadd.f32 %v1125, %v1174
        %v1197 = vadd.f32 %v1126, %v1174
        %v1198 = vadd.f32 %v1127, %v1174
        %v1199 = vadd.f32 %v1128, %v1174
        %v1200 = vadd.f32 %v1129, %v1174
        %v1201 = vadd.f32 %v1130, %v1174
        %v1202 = vadd.f32 %v1131, %v1174
        %v1203 = vadd.f32 %v1132, %v1174
        %v1204 = vadd.f32 %v1133, %v1174
        %v1205 = vadd.f32 %v1134, %v1174
        %v1206 = vadd.f32 %v1135, %v1174
        %v1207 = vadd.f32 %v1136, %v1174
        %v1208 = vadd.f32 %v1137, %v1174
        %v1209 = vadd.f32 %v1138, %v1174
        %v1210 = vadd.f32 %v1139, %v1174
        %v1211 = vadd.f32 %v1140, %v1174
        %v1212 = vadd.f32 %v1141, %v1174
        %v1213 = vadd.f32 %v1142, %v1174
        %v1214 = vadd.f32 %v1143, %v1174
        %v1215 = vadd.f32 %v1144, %v1174
        %v1216 = vadd.f32 %v1145, %v1174
        %v1217 = vadd.f32 %v1146, %v1174
        %v1218 = vadd.f32 %v1147, %v1174
        %v1219 = vadd.f32 %v1148, %v1174
        %v1220 = vadd.f32 %v1149, %v1174
        %v1221 = vadd.f32 %v1150, %v1174
        %v1222 = vadd.f32 %v1151, %v1174
        %v1223 = vadd.f32 %v1152, %v1174
        %v1224 = vadd.f32 %v1153, %v1174
        %v1225 = vadd.f32 %v1154, %v1174
        %v1226 = vadd.f32 %v1155, %v1174
        %v1227 = vadd.f32 %v1156, %v1174
        %v1228 = vadd.f32 %v1157, %v1174
        %v1229 = vadd.f32 %v1158, %v1174
        %v1230 = vadd.f32 %v1159, %v1174
        %v1231 = vadd.f32 %v1160, %v1174
        %v1232 = vadd.f32 %v1161, %v1174
        %v1233 = vadd.f32 %v1162, %v1174
        %v1234 = vadd.f32 %v1163, %v1174
        %v1235 = vadd.f32 %v1164, %v1174
        %v1236 = vadd.f32 %v1165, %v1174
        %v1237 = vadd.f32 %v1166, %v1174
        %v1238 = vadd.f32 %v1167, %v1174
        %v1239 = vadd.f32 %v1168, %v1174
        %v1240 = vpack.c.bf16 %v1177, %v1176
        %v1241 = vpack.c.bf16 %v1179, %v1178
        %v1242 = vpack.c.bf16 %v1181, %v1180
        %v1243 = vpack.c.bf16 %v1183, %v1182
        %v1244 = vpack.c.bf16 %v1185, %v1184
        %v1245 = vpack.c.bf16 %v1187, %v1186
        %v1246 = vpack.c.bf16 %v1189, %v1188
        %v1247 = vpack.c.bf16 %v1191, %v1190
        %v1248 = vpack.c.bf16 %v1193, %v1192
        %v1249 = vpack.c.bf16 %v1195, %v1194
        %v1250 = vpack.c.bf16 %v1197, %v1196
        %v1251 = vpack.c.bf16 %v1199, %v1198
        %v1252 = vpack.c.bf16 %v1201, %v1200
        %v1253 = vpack.c.bf16 %v1203, %v1202
        %v1254 = vpack.c.bf16 %v1205, %v1204
        %v1255 = vpack.c.bf16 %v1207, %v1206
        %v1256 = vpack.c.bf16 %v1209, %v1208
        %v1257 = vpack.c.bf16 %v1211, %v1210
        %v1258 = vpack.c.bf16 %v1213, %v1212
        %v1259 = vpack.c.bf16 %v1215, %v1214
        %v1260 = vpack.c.bf16 %v1217, %v1216
        %v1261 = vpack.c.bf16 %v1219, %v1218
        %v1262 = vpack.c.bf16 %v1221, %v1220
        %v1263 = vpack.c.bf16 %v1223, %v1222
        %v1264 = vpack.c.bf16 %v1225, %v1224
        %v1265 = vpack.c.bf16 %v1227, %v1226
        %v1266 = vpack.c.bf16 %v1229, %v1228
        %v1267 = vpack.c.bf16 %v1231, %v1230
        %v1268 = vpack.c.bf16 %v1233, %v1232
        %v1269 = vpack.c.bf16 %v1235, %v1234
        %v1270 = vpack.c.bf16 %v1237, %v1236
        %v1271 = vpack.c.bf16 %v1239, %v1238
        %v1272 = vld [vmem:[#allocation5] sm:$0xff]
        %v1273 = vld [vmem:[#allocation5 + $0x8] sm:$0xff]
        %v1274 = vld [vmem:[#allocation5 + $0x10] sm:$0xff]
        %v1275 = vld [vmem:[#allocation5 + $0x18] sm:$0xff]
        %v1276 = vld [vmem:[#allocation5 + $0x20] sm:$0xff]
        %v1277 = vld [vmem:[#allocation5 + $0x28] sm:$0xff]
        %v1278 = vld [vmem:[#allocation5 + $0x30] sm:$0xff]
        %v1279 = vld [vmem:[#allocation5 + $0x38] sm:$0xff]
        %v1280 = vld [vmem:[#allocation5 + $0x40] sm:$0xff]
        %v1281 = vld [vmem:[#allocation5 + $0x48] sm:$0xff]
        %v1282 = vld [vmem:[#allocation5 + $0x50] sm:$0xff]
        %v1283 = vld [vmem:[#allocation5 + $0x58] sm:$0xff]
        %v1284 = vld [vmem:[#allocation5 + $0x60] sm:$0xff]
        %v1285 = vld [vmem:[#allocation5 + $0x68] sm:$0xff]
        %v1286 = vld [vmem:[#allocation5 + $0x70] sm:$0xff]
        %v1287 = vld [vmem:[#allocation5 + $0x78] sm:$0xff]
        %v1288 = vld [vmem:[#allocation5 + $0x80] sm:$0xff]
        %v1289 = vld [vmem:[#allocation5 + $0x88] sm:$0xff]
        %v1290 = vld [vmem:[#allocation5 + $0x90] sm:$0xff]
        %v1291 = vld [vmem:[#allocation5 + $0x98] sm:$0xff]
        %v1292 = vld [vmem:[#allocation5 + $0xa0] sm:$0xff]
        %v1293 = vld [vmem:[#allocation5 + $0xa8] sm:$0xff]
        %v1294 = vld [vmem:[#allocation5 + $0xb0] sm:$0xff]
        %v1295 = vld [vmem:[#allocation5 + $0xb8] sm:$0xff]
        %v1296 = vld [vmem:[#allocation5 + $0xc0] sm:$0xff]
        %v1297 = vld [vmem:[#allocation5 + $0xc8] sm:$0xff]
        %v1298 = vld [vmem:[#allocation5 + $0xd0] sm:$0xff]
        %v1299 = vld [vmem:[#allocation5 + $0xd8] sm:$0xff]
        %v1300 = vld [vmem:[#allocation5 + $0xe0] sm:$0xff]
        %v1301 = vld [vmem:[#allocation5 + $0xe8] sm:$0xff]
        %v1302 = vld [vmem:[#allocation5 + $0xf0] sm:$0xff]
        %v1303 = vld [vmem:[#allocation5 + $0xf8] sm:$0xff]
        %v1304 = vld [vmem:[%s4] sm:$0xf]
        %v1306 = vlaneseq
        %v1307 = vshrl.u32 %v1306, 7
        %v1308 = vsub.s32 0, %v1307
        %v1309 = vrot.slane %v1304, %v1308
        %v1310 = vlaneseq
        %v1311 = vshrl.u32 %v1310, 7
        %v1312 = vsub.s32 1, %v1311
        %v1313 = vrot.slane %v1304, %v1312
        %v1314 = vlaneseq
        %v1315 = vshrl.u32 %v1314, 7
        %v1316 = vsub.s32 2, %v1315
        %v1317 = vrot.slane %v1304, %v1316
        %v1318 = vlaneseq
        %v1319 = vshrl.u32 %v1318, 7
        %v1320 = vsub.s32 3, %v1319
        %v1321 = vrot.slane %v1304, %v1320
        %v1358 = vunpack.c.l.b16 %v1272
        %v1359 = vunpack.c.h.b16 %v1272
        %v1360 = vunpack.c.l.b16 %v1273
        %v1361 = vunpack.c.h.b16 %v1273
        %v1362 = vunpack.c.l.b16 %v1274
        %v1363 = vunpack.c.h.b16 %v1274
        %v1364 = vunpack.c.l.b16 %v1275
        %v1365 = vunpack.c.h.b16 %v1275
        %v1366 = vunpack.c.l.b16 %v1276
        %v1367 = vunpack.c.h.b16 %v1276
        %v1368 = vunpack.c.l.b16 %v1277
        %v1369 = vunpack.c.h.b16 %v1277
        %v1370 = vunpack.c.l.b16 %v1278
        %v1371 = vunpack.c.h.b16 %v1278
        %v1372 = vunpack.c.l.b16 %v1279
        %v1373 = vunpack.c.h.b16 %v1279
        %v1374 = vunpack.c.l.b16 %v1280
        %v1375 = vunpack.c.h.b16 %v1280
        %v1376 = vunpack.c.l.b16 %v1281
        %v1377 = vunpack.c.h.b16 %v1281
        %v1378 = vunpack.c.l.b16 %v1282
        %v1379 = vunpack.c.h.b16 %v1282
        %v1380 = vunpack.c.l.b16 %v1283
        %v1381 = vunpack.c.h.b16 %v1283
        %v1382 = vunpack.c.l.b16 %v1284
        %v1383 = vunpack.c.h.b16 %v1284
        %v1384 = vunpack.c.l.b16 %v1285
        %v1385 = vunpack.c.h.b16 %v1285
        %v1386 = vunpack.c.l.b16 %v1286
        %v1387 = vunpack.c.h.b16 %v1286
        %v1388 = vunpack.c.l.b16 %v1287
        %v1389 = vunpack.c.h.b16 %v1287
        %v1390 = vunpack.c.l.b16 %v1288
        %v1391 = vunpack.c.h.b16 %v1288
        %v1392 = vunpack.c.l.b16 %v1289
        %v1393 = vunpack.c.h.b16 %v1289
        %v1394 = vunpack.c.l.b16 %v1290
        %v1395 = vunpack.c.h.b16 %v1290
        %v1396 = vunpack.c.l.b16 %v1291
        %v1397 = vunpack.c.h.b16 %v1291
        %v1398 = vunpack.c.l.b16 %v1292
        %v1399 = vunpack.c.h.b16 %v1292
        %v1400 = vunpack.c.l.b16 %v1293
        %v1401 = vunpack.c.h.b16 %v1293
        %v1402 = vunpack.c.l.b16 %v1294
        %v1403 = vunpack.c.h.b16 %v1294
        %v1404 = vunpack.c.l.b16 %v1295
        %v1405 = vunpack.c.h.b16 %v1295
        %v1406 = vunpack.c.l.b16 %v1296
        %v1407 = vunpack.c.h.b16 %v1296
        %v1408 = vunpack.c.l.b16 %v1297
        %v1409 = vunpack.c.h.b16 %v1297
        %v1410 = vunpack.c.l.b16 %v1298
        %v1411 = vunpack.c.h.b16 %v1298
        %v1412 = vunpack.c.l.b16 %v1299
        %v1413 = vunpack.c.h.b16 %v1299
        %v1414 = vunpack.c.l.b16 %v1300
        %v1415 = vunpack.c.h.b16 %v1300
        %v1416 = vunpack.c.l.b16 %v1301
        %v1417 = vunpack.c.h.b16 %v1301
        %v1418 = vunpack.c.l.b16 %v1302
        %v1419 = vunpack.c.h.b16 %v1302
        %v1420 = vunpack.c.l.b16 %v1303
        %v1421 = vunpack.c.h.b16 %v1303
        %v1422 = vpack.c.b16 %v1362, %v1358
        %v1423 = vpack.c.b16 %v1363, %v1359
        %v1424 = vpack.c.b16 %v1364, %v1360
        %v1425 = vpack.c.b16 %v1365, %v1361
        %v1426 = vpack.c.b16 %v1370, %v1366
        %v1427 = vpack.c.b16 %v1371, %v1367
        %v1428 = vpack.c.b16 %v1372, %v1368
        %v1429 = vpack.c.b16 %v1373, %v1369
        %v1430 = vpack.c.b16 %v1378, %v1374
        %v1431 = vpack.c.b16 %v1379, %v1375
        %v1432 = vpack.c.b16 %v1380, %v1376
        %v1433 = vpack.c.b16 %v1381, %v1377
        %v1434 = vpack.c.b16 %v1386, %v1382
        %v1435 = vpack.c.b16 %v1387, %v1383
        %v1436 = vpack.c.b16 %v1388, %v1384
        %v1437 = vpack.c.b16 %v1389, %v1385
        %v1438 = vpack.c.b16 %v1394, %v1390
        %v1439 = vpack.c.b16 %v1395, %v1391
        %v1440 = vpack.c.b16 %v1396, %v1392
        %v1441 = vpack.c.b16 %v1397, %v1393
        %v1442 = vpack.c.b16 %v1402, %v1398
        %v1443 = vpack.c.b16 %v1403, %v1399
        %v1444 = vpack.c.b16 %v1404, %v1400
        %v1445 = vpack.c.b16 %v1405, %v1401
        %v1446 = vpack.c.b16 %v1410, %v1406
        %v1447 = vpack.c.b16 %v1411, %v1407
        %v1448 = vpack.c.b16 %v1412, %v1408
        %v1449 = vpack.c.b16 %v1413, %v1409
        %v1450 = vpack.c.b16 %v1418, %v1414
        %v1451 = vpack.c.b16 %v1419, %v1415
        %v1452 = vpack.c.b16 %v1420, %v1416
        %v1453 = vpack.c.b16 %v1421, %v1417
        %1486 = vmatprep.subr.bf16.mxu0 %v1423
        %1487 = vmatpush1.bf16.msra.mxu0 %v1422
        %1488 = vmatprep.subr.bf16.mxu0 %v1427
        %1489 = vmatpush1.bf16.msra.mxu0 %v1426
        %1490 = vmatprep.subr.bf16.mxu0 %v1431
        %1491 = vmatpush1.bf16.msra.mxu0 %v1430
        %1492 = vmatprep.subr.bf16.mxu0 %v1435
        %1493 = vmatpush1.bf16.msra.mxu0 %v1434
        %1494 = vmatprep.subr.bf16.mxu0 %v1439
        %1495 = vmatpush1.bf16.msra.mxu0 %v1438
        %1496 = vmatprep.subr.bf16.mxu0 %v1443
        %1497 = vmatpush1.bf16.msra.mxu0 %v1442
        %1498 = vmatprep.subr.bf16.mxu0 %v1447
        %1499 = vmatpush1.bf16.msra.mxu0 %v1446
        %1500 = vmatprep.subr.bf16.mxu0 %v1451
        %1501 = vmatpush1.bf16.msra.mxu0 %v1450
        %1502 = vmatprep.subr.bf16.mxu0 0
        %1503 = vmatpush1.bf16.msra.mxu0 0
        %1504 = vmatprep.subr.bf16.mxu0 0
        %1505 = vmatpush1.bf16.msra.mxu0 0
        %1506 = vmatprep.subr.bf16.mxu0 0
        %1507 = vmatpush1.bf16.msra.mxu0 0
        %1508 = vmatprep.subr.bf16.mxu0 0
        %1509 = vmatpush1.bf16.msra.mxu0 0
        %1510 = vmatprep.subr.bf16.mxu0 0
        %1511 = vmatpush1.bf16.msra.mxu0 0
        %1512 = vmatprep.subr.bf16.mxu0 0
        %1513 = vmatpush1.bf16.msra.mxu0 0
        %1514 = vmatprep.subr.bf16.mxu0 0
        %1515 = vmatpush1.bf16.msra.mxu0 0
        %1516 = vmatprep.subr.bf16.mxu0 0
        %1517 = vmatpush1.bf16.msra.mxu0 0
        %1518 = vmatprep.mubr.bf16.mxu0 0
        %1519 = vmatmul.mubr.bf16.gmra.mrb[0].mxu0 %v1240
        %v1520 = vpop.f32.mrb[0].mxu0
        %v1521 = vadd.f32 %v1309, %v1520
        %v1522 = vpop.f32.mrb[0].mxu0
        %v1523 = vadd.f32 %v1313, %v1522
        %v1524 = vpop.f32.mrb[0].mxu0
        %v1525 = vadd.f32 %v1309, %v1524
        %v1526 = vpop.f32.mrb[0].mxu0
        %v1527 = vadd.f32 %v1313, %v1526
        %1528 = vmatprep.mubr.bf16.mxu0 0
        %1529 = vmatmul.mubr.bf16.gmra.mrb[0].mxu0 %v1241
        %v1530 = vpop.f32.mrb[0].mxu0
        %v1531 = vadd.f32 %v1309, %v1530
        %v1532 = vpop.f32.mrb[0].mxu0
        %v1533 = vadd.f32 %v1313, %v1532
        %v1534 = vpop.f32.mrb[0].mxu0
        %v1535 = vadd.f32 %v1309, %v1534
        %v1536 = vpop.f32.mrb[0].mxu0
        %v1537 = vadd.f32 %v1313, %v1536
        %1538 = vmatprep.mubr.bf16.mxu0 0
        %1539 = vmatmul.mubr.bf16.gmra.mrb[0].mxu0 %v1242
        %v1540 = vpop.f32.mrb[0].mxu0
        %v1541 = vadd.f32 %v1309, %v1540
        %v1542 = vpop.f32.mrb[0].mxu0
        %v1543 = vadd.f32 %v1313, %v1542
        %v1544 = vpop.f32.mrb[0].mxu0
        %v1545 = vadd.f32 %v1309, %v1544
        %v1546 = vpop.f32.mrb[0].mxu0
        %v1547 = vadd.f32 %v1313, %v1546
        %1548 = vmatprep.mubr.bf16.mxu0 0
        %1549 = vmatmul.mubr.bf16.gmra.mrb[0].mxu0 %v1243
        %v1550 = vpop.f32.mrb[0].mxu0
        %v1551 = vadd.f32 %v1309, %v1550
        %v1552 = vpop.f32.mrb[0].mxu0
        %v1553 = vadd.f32 %v1313, %v1552
        %v1554 = vpop.f32.mrb[0].mxu0
        %v1555 = vadd.f32 %v1309, %v1554
        %v1556 = vpop.f32.mrb[0].mxu0
        %v1557 = vadd.f32 %v1313, %v1556
        %1558 = vmatprep.mubr.bf16.mxu0 0
        %1559 = vmatmul.mubr.bf16.gmra.mrb[0].mxu0 %v1244
        %v1560 = vpop.f32.mrb[0].mxu0
        %v1561 = vadd.f32 %v1309, %v1560
        %v1562 = vpop.f32.mrb[0].mxu0
        %v1563 = vadd.f32 %v1313, %v1562
        %v1564 = vpop.f32.mrb[0].mxu0
        %v1565 = vadd.f32 %v1309, %v1564
        %v1566 = vpop.f32.mrb[0].mxu0
        %v1567 = vadd.f32 %v1313, %v1566
        %1568 = vmatprep.mubr.bf16.mxu0 0
        %1569 = vmatmul.mubr.bf16.gmra.mrb[0].mxu0 %v1245
        %v1570 = vpop.f32.mrb[0].mxu0
        %v1571 = vadd.f32 %v1309, %v1570
        %v1572 = vpop.f32.mrb[0].mxu0
        %v1573 = vadd.f32 %v1313, %v1572
        %v1574 = vpop.f32.mrb[0].mxu0
        %v1575 = vadd.f32 %v1309, %v1574
        %v1576 = vpop.f32.mrb[0].mxu0
        %v1577 = vadd.f32 %v1313, %v1576
        %1578 = vmatprep.mubr.bf16.mxu0 0
        %1579 = vmatmul.mubr.bf16.gmra.mrb[0].mxu0 %v1246
        %v1580 = vpop.f32.mrb[0].mxu0
        %v1581 = vadd.f32 %v1309, %v1580
        %v1582 = vpop.f32.mrb[0].mxu0
        %v1583 = vadd.f32 %v1313, %v1582
        %v1584 = vpop.f32.mrb[0].mxu0
        %v1585 = vadd.f32 %v1309, %v1584
        %v1586 = vpop.f32.mrb[0].mxu0
        %v1587 = vadd.f32 %v1313, %v1586
        %1588 = vmatprep.mubr.bf16.mxu0 0
        %1589 = vmatmul.mubr.bf16.gmra.mrb[0].mxu0 %v1247
        %v1590 = vpop.f32.mrb[0].mxu0
        %v1591 = vadd.f32 %v1309, %v1590
        %v1592 = vpop.f32.mrb[0].mxu0
        %v1593 = vadd.f32 %v1313, %v1592
        %v1594 = vpop.f32.mrb[0].mxu0
        %v1595 = vadd.f32 %v1309, %v1594
        %v1596 = vpop.f32.mrb[0].mxu0
        %v1597 = vadd.f32 %v1313, %v1596
        %1598 = vmatprep.mubr.bf16.mxu0 0
        %1599 = vmatmul.mubr.bf16.gmra.mrb[0].mxu0 %v1248
        %v1600 = vpop.f32.mrb[0].mxu0
        %v1601 = vadd.f32 %v1309, %v1600
        %v1602 = vpop.f32.mrb[0].mxu0
        %v1603 = vadd.f32 %v1313, %v1602
        %v1604 = vpop.f32.mrb[0].mxu0
        %v1605 = vadd.f32 %v1309, %v1604
        %v1606 = vpop.f32.mrb[0].mxu0
        %v1607 = vadd.f32 %v1313, %v1606
        %1608 = vmatprep.mubr.bf16.mxu0 0
        %1609 = vmatmul.mubr.bf16.gmra.mrb[0].mxu0 %v1249
        %v1610 = vpop.f32.mrb[0].mxu0
        %v1611 = vadd.f32 %v1309, %v1610
        %v1612 = vpop.f32.mrb[0].mxu0
        %v1613 = vadd.f32 %v1313, %v1612
        %v1614 = vpop.f32.mrb[0].mxu0
        %v1615 = vadd.f32 %v1309, %v1614
        %v1616 = vpop.f32.mrb[0].mxu0
        %v1617 = vadd.f32 %v1313, %v1616
        %1618 = vmatprep.mubr.bf16.mxu0 0
        %1619 = vmatmul.mubr.bf16.gmra.mrb[0].mxu0 %v1250
        %v1620 = vpop.f32.mrb[0].mxu0
        %v1621 = vadd.f32 %v1309, %v1620
        %v1622 = vpop.f32.mrb[0].mxu0
        %v1623 = vadd.f32 %v1313, %v1622
        %v1624 = vpop.f32.mrb[0].mxu0
        %v1625 = vadd.f32 %v1309, %v1624
        %v1626 = vpop.f32.mrb[0].mxu0
        %v1627 = vadd.f32 %v1313, %v1626
        %1628 = vmatprep.mubr.bf16.mxu0 0
        %1629 = vmatmul.mubr.bf16.gmra.mrb[0].mxu0 %v1251
        %v1630 = vpop.f32.mrb[0].mxu0
        %v1631 = vadd.f32 %v1309, %v1630
        %v1632 = vpop.f32.mrb[0].mxu0
        %v1633 = vadd.f32 %v1313, %v1632
        %v1634 = vpop.f32.mrb[0].mxu0
        %v1635 = vadd.f32 %v1309, %v1634
        %v1636 = vpop.f32.mrb[0].mxu0
        %v1637 = vadd.f32 %v1313, %v1636
        %1638 = vmatprep.mubr.bf16.mxu0 0
        %1639 = vmatmul.mubr.bf16.gmra.mrb[0].mxu0 %v1252
        %v1640 = vpop.f32.mrb[0].mxu0
        %v1641 = vadd.f32 %v1309, %v1640
        %v1642 = vpop.f32.mrb[0].mxu0
        %v1643 = vadd.f32 %v1313, %v1642
        %v1644 = vpop.f32.mrb[0].mxu0
        %v1645 = vadd.f32 %v1309, %v1644
        %v1646 = vpop.f32.mrb[0].mxu0
        %v1647 = vadd.f32 %v1313, %v1646
        %1648 = vmatprep.mubr.bf16.mxu0 0
        %1649 = vmatmul.mubr.bf16.gmra.mrb[0].mxu0 %v1253
        %v1650 = vpop.f32.mrb[0].mxu0
        %v1651 = vadd.f32 %v1309, %v1650
        %v1652 = vpop.f32.mrb[0].mxu0
        %v1653 = vadd.f32 %v1313, %v1652
        %v1654 = vpop.f32.mrb[0].mxu0
        %v1655 = vadd.f32 %v1309, %v1654
        %v1656 = vpop.f32.mrb[0].mxu0
        %v1657 = vadd.f32 %v1313, %v1656
        %1658 = vmatprep.mubr.bf16.mxu0 0
        %1659 = vmatmul.mubr.bf16.gmra.mrb[0].mxu0 %v1254
        %v1660 = vpop.f32.mrb[0].mxu0
        %v1661 = vadd.f32 %v1309, %v1660
        %v1662 = vpop.f32.mrb[0].mxu0
        %v1663 = vadd.f32 %v1313, %v1662
        %v1664 = vpop.f32.mrb[0].mxu0
        %v1665 = vadd.f32 %v1309, %v1664
        %v1666 = vpop.f32.mrb[0].mxu0
        %v1667 = vadd.f32 %v1313, %v1666
        %1668 = vmatprep.mubr.bf16.mxu0 0
        %1669 = vmatmul.mubr.bf16.gmra.mrb[0].mxu0 %v1255
        %v1670 = vpop.f32.mrb[0].mxu0
        %v1671 = vadd.f32 %v1309, %v1670
        %v1672 = vpop.f32.mrb[0].mxu0
        %v1673 = vadd.f32 %v1313, %v1672
        %v1674 = vpop.f32.mrb[0].mxu0
        %v1675 = vadd.f32 %v1309, %v1674
        %v1676 = vpop.f32.mrb[0].mxu0
        %v1677 = vadd.f32 %v1313, %v1676
        %1678 = vmatprep.mubr.bf16.mxu0 0
        %1679 = vmatmul.mubr.bf16.gmra.mrb[0].mxu0 %v1256
        %v1680 = vpop.f32.mrb[0].mxu0
        %v1681 = vadd.f32 %v1309, %v1680
        %v1682 = vpop.f32.mrb[0].mxu0
        %v1683 = vadd.f32 %v1313, %v1682
        %v1684 = vpop.f32.mrb[0].mxu0
        %v1685 = vadd.f32 %v1309, %v1684
        %v1686 = vpop.f32.mrb[0].mxu0
        %v1687 = vadd.f32 %v1313, %v1686
        %1688 = vmatprep.mubr.bf16.mxu0 0
        %1689 = vmatmul.mubr.bf16.gmra.mrb[0].mxu0 %v1257
        %v1690 = vpop.f32.mrb[0].mxu0
        %v1691 = vadd.f32 %v1309, %v1690
        %v1692 = vpop.f32.mrb[0].mxu0
        %v1693 = vadd.f32 %v1313, %v1692
        %v1694 = vpop.f32.mrb[0].mxu0
        %v1695 = vadd.f32 %v1309, %v1694
        %v1696 = vpop.f32.mrb[0].mxu0
        %v1697 = vadd.f32 %v1313, %v1696
        %1698 = vmatprep.mubr.bf16.mxu0 0
        %1699 = vmatmul.mubr.bf16.gmra.mrb[0].mxu0 %v1258
        %v1700 = vpop.f32.mrb[0].mxu0
        %v1701 = vadd.f32 %v1309, %v1700
        %v1702 = vpop.f32.mrb[0].mxu0
        %v1703 = vadd.f32 %v1313, %v1702
        %v1704 = vpop.f32.mrb[0].mxu0
        %v1705 = vadd.f32 %v1309, %v1704
        %v1706 = vpop.f32.mrb[0].mxu0
        %v1707 = vadd.f32 %v1313, %v1706
        %1708 = vmatprep.mubr.bf16.mxu0 0
        %1709 = vmatmul.mubr.bf16.gmra.mrb[0].mxu0 %v1259
        %v1710 = vpop.f32.mrb[0].mxu0
        %v1711 = vadd.f32 %v1309, %v1710
        %v1712 = vpop.f32.mrb[0].mxu0
        %v1713 = vadd.f32 %v1313, %v1712
        %v1714 = vpop.f32.mrb[0].mxu0
        %v1715 = vadd.f32 %v1309, %v1714
        %v1716 = vpop.f32.mrb[0].mxu0
        %v1717 = vadd.f32 %v1313, %v1716
        %1718 = vmatprep.mubr.bf16.mxu0 0
        %1719 = vmatmul.mubr.bf16.gmra.mrb[0].mxu0 %v1260
        %v1720 = vpop.f32.mrb[0].mxu0
        %v1721 = vadd.f32 %v1309, %v1720
        %v1722 = vpop.f32.mrb[0].mxu0
        %v1723 = vadd.f32 %v1313, %v1722
        %v1724 = vpop.f32.mrb[0].mxu0
        %v1725 = vadd.f32 %v1309, %v1724
        %v1726 = vpop.f32.mrb[0].mxu0
        %v1727 = vadd.f32 %v1313, %v1726
        %1728 = vmatprep.mubr.bf16.mxu0 0
        %1729 = vmatmul.mubr.bf16.gmra.mrb[0].mxu0 %v1261
        %v1730 = vpop.f32.mrb[0].mxu0
        %v1731 = vadd.f32 %v1309, %v1730
        %v1732 = vpop.f32.mrb[0].mxu0
        %v1733 = vadd.f32 %v1313, %v1732
        %v1734 = vpop.f32.mrb[0].mxu0
        %v1735 = vadd.f32 %v1309, %v1734
        %v1736 = vpop.f32.mrb[0].mxu0
        %v1737 = vadd.f32 %v1313, %v1736
        %1738 = vmatprep.mubr.bf16.mxu0 0
        %1739 = vmatmul.mubr.bf16.gmra.mrb[0].mxu0 %v1262
        %v1740 = vpop.f32.mrb[0].mxu0
        %v1741 = vadd.f32 %v1309, %v1740
        %v1742 = vpop.f32.mrb[0].mxu0
        %v1743 = vadd.f32 %v1313, %v1742
        %v1744 = vpop.f32.mrb[0].mxu0
        %v1745 = vadd.f32 %v1309, %v1744
        %v1746 = vpop.f32.mrb[0].mxu0
        %v1747 = vadd.f32 %v1313, %v1746
        %1748 = vmatprep.mubr.bf16.mxu0 0
        %1749 = vmatmul.mubr.bf16.gmra.mrb[0].mxu0 %v1263
        %v1750 = vpop.f32.mrb[0].mxu0
        %v1751 = vadd.f32 %v1309, %v1750
        %v1752 = vpop.f32.mrb[0].mxu0
        %v1753 = vadd.f32 %v1313, %v1752
        %v1754 = vpop.f32.mrb[0].mxu0
        %v1755 = vadd.f32 %v1309, %v1754
        %v1756 = vpop.f32.mrb[0].mxu0
        %v1757 = vadd.f32 %v1313, %v1756
        %1758 = vmatprep.mubr.bf16.mxu0 0
        %1759 = vmatmul.mubr.bf16.gmra.mrb[0].mxu0 %v1264
        %v1760 = vpop.f32.mrb[0].mxu0
        %v1761 = vadd.f32 %v1309, %v1760
        %v1762 = vpop.f32.mrb[0].mxu0
        %v1763 = vadd.f32 %v1313, %v1762
        %v1764 = vpop.f32.mrb[0].mxu0
        %v1765 = vadd.f32 %v1309, %v1764
        %v1766 = vpop.f32.mrb[0].mxu0
        %v1767 = vadd.f32 %v1313, %v1766
        %1768 = vmatprep.mubr.bf16.mxu0 0
        %1769 = vmatmul.mubr.bf16.gmra.mrb[0].mxu0 %v1265
        %v1770 = vpop.f32.mrb[0].mxu0
        %v1771 = vadd.f32 %v1309, %v1770
        %v1772 = vpop.f32.mrb[0].mxu0
        %v1773 = vadd.f32 %v1313, %v1772
        %v1774 = vpop.f32.mrb[0].mxu0
        %v1775 = vadd.f32 %v1309, %v1774
        %v1776 = vpop.f32.mrb[0].mxu0
        %v1777 = vadd.f32 %v1313, %v1776
        %1778 = vmatprep.mubr.bf16.mxu0 0
        %1779 = vmatmul.mubr.bf16.gmra.mrb[0].mxu0 %v1266
        %v1780 = vpop.f32.mrb[0].mxu0
        %v1781 = vadd.f32 %v1309, %v1780
        %v1782 = vpop.f32.mrb[0].mxu0
        %v1783 = vadd.f32 %v1313, %v1782
        %v1784 = vpop.f32.mrb[0].mxu0
        %v1785 = vadd.f32 %v1309, %v1784
        %v1786 = vpop.f32.mrb[0].mxu0
        %v1787 = vadd.f32 %v1313, %v1786
        %1788 = vmatprep.mubr.bf16.mxu0 0
        %1789 = vmatmul.mubr.bf16.gmra.mrb[0].mxu0 %v1267
        %v1790 = vpop.f32.mrb[0].mxu0
        %v1791 = vadd.f32 %v1309, %v1790
        %v1792 = vpop.f32.mrb[0].mxu0
        %v1793 = vadd.f32 %v1313, %v1792
        %v1794 = vpop.f32.mrb[0].mxu0
        %v1795 = vadd.f32 %v1309, %v1794
        %v1796 = vpop.f32.mrb[0].mxu0
        %v1797 = vadd.f32 %v1313, %v1796
        %1798 = vmatprep.mubr.bf16.mxu0 0
        %1799 = vmatmul.mubr.bf16.gmra.mrb[0].mxu0 %v1268
        %v1800 = vpop.f32.mrb[0].mxu0
        %v1801 = vadd.f32 %v1309, %v1800
        %v1802 = vpop.f32.mrb[0].mxu0
        %v1803 = vadd.f32 %v1313, %v1802
        %v1804 = vpop.f32.mrb[0].mxu0
        %v1805 = vadd.f32 %v1309, %v1804
        %v1806 = vpop.f32.mrb[0].mxu0
        %v1807 = vadd.f32 %v1313, %v1806
        %1808 = vmatprep.mubr.bf16.mxu0 0
        %1809 = vmatmul.mubr.bf16.gmra.mrb[0].mxu0 %v1269
        %v1810 = vpop.f32.mrb[0].mxu0
        %v1811 = vadd.f32 %v1309, %v1810
        %v1812 = vpop.f32.mrb[0].mxu0
        %v1813 = vadd.f32 %v1313, %v1812
        %v1814 = vpop.f32.mrb[0].mxu0
        %v1815 = vadd.f32 %v1309, %v1814
        %v1816 = vpop.f32.mrb[0].mxu0
        %v1817 = vadd.f32 %v1313, %v1816
        %1818 = vmatprep.mubr.bf16.mxu0 0
        %1819 = vmatmul.mubr.bf16.gmra.mrb[0].mxu0 %v1270
        %v1820 = vpop.f32.mrb[0].mxu0
        %v1821 = vadd.f32 %v1309, %v1820
        %v1822 = vpop.f32.mrb[0].mxu0
        %v1823 = vadd.f32 %v1313, %v1822
        %v1824 = vpop.f32.mrb[0].mxu0
        %v1825 = vadd.f32 %v1309, %v1824
        %v1826 = vpop.f32.mrb[0].mxu0
        %v1827 = vadd.f32 %v1313, %v1826
        %1828 = vmatprep.mubr.bf16.mxu0 0
        %1829 = vmatmul.mubr.bf16.gmra.mrb[0].mxu0 %v1271
        %v1830 = vpop.f32.mrb[0].mxu0
        %v1831 = vadd.f32 %v1309, %v1830
        %v1832 = vpop.f32.mrb[0].mxu0
        %v1833 = vadd.f32 %v1313, %v1832
        %v1834 = vpop.f32.mrb[0].mxu0
        %v1835 = vadd.f32 %v1309, %v1834
        %v1836 = vpop.f32.mrb[0].mxu0
        %v1837 = vadd.f32 %v1313, %v1836
        %1838 = vdwg.mxu0
        %1839 = vmatprep.subr.bf16.mxu0 %v1425
        %1840 = vmatpush1.bf16.msra.mxu0 %v1424
        %1841 = vmatprep.subr.bf16.mxu0 %v1429
        %1842 = vmatpush1.bf16.msra.mxu0 %v1428
        %1843 = vmatprep.subr.bf16.mxu0 %v1433
        %1844 = vmatpush1.bf16.msra.mxu0 %v1432
        %1845 = vmatprep.subr.bf16.mxu0 %v1437
        %1846 = vmatpush1.bf16.msra.mxu0 %v1436
        %1847 = vmatprep.subr.bf16.mxu0 %v1441
        %1848 = vmatpush1.bf16.msra.mxu0 %v1440
        %1849 = vmatprep.subr.bf16.mxu0 %v1445
        %1850 = vmatpush1.bf16.msra.mxu0 %v1444
        %1851 = vmatprep.subr.bf16.mxu0 %v1449
        %1852 = vmatpush1.bf16.msra.mxu0 %v1448
        %1853 = vmatprep.subr.bf16.mxu0 %v1453
        %1854 = vmatpush1.bf16.msra.mxu0 %v1452
        %1855 = vmatprep.subr.bf16.mxu0 0
        %1856 = vmatpush1.bf16.msra.mxu0 0
        %1857 = vmatprep.subr.bf16.mxu0 0
        %1858 = vmatpush1.bf16.msra.mxu0 0
        %1859 = vmatprep.subr.bf16.mxu0 0
        %1860 = vmatpush1.bf16.msra.mxu0 0
        %1861 = vmatprep.subr.bf16.mxu0 0
        %1862 = vmatpush1.bf16.msra.mxu0 0
        %1863 = vmatprep.subr.bf16.mxu0 0
        %1864 = vmatpush1.bf16.msra.mxu0 0
        %1865 = vmatprep.subr.bf16.mxu0 0
        %1866 = vmatpush1.bf16.msra.mxu0 0
        %1867 = vmatprep.subr.bf16.mxu0 0
        %1868 = vmatpush1.bf16.msra.mxu0 0
        %1869 = vmatprep.subr.bf16.mxu0 0
        %1870 = vmatpush1.bf16.msra.mxu0 0
        %1871 = vmatprep.mubr.bf16.mxu0 0
        %1872 = vmatmul.mubr.bf16.gmra.mrb[0].mxu0 %v1240
        %v1873 = vpop.f32.mrb[0].mxu0
        %v1874 = vadd.f32 %v1317, %v1873
        %v1875 = vpop.f32.mrb[0].mxu0
        %v1876 = vadd.f32 %v1321, %v1875
        %v1877 = vpop.f32.mrb[0].mxu0
        %v1878 = vadd.f32 %v1317, %v1877
        %v1879 = vpop.f32.mrb[0].mxu0
        %v1880 = vadd.f32 %v1321, %v1879
        %1881 = vmatprep.mubr.bf16.mxu0 0
        %1882 = vmatmul.mubr.bf16.gmra.mrb[0].mxu0 %v1241
        %v1883 = vpop.f32.mrb[0].mxu0
        %v1884 = vadd.f32 %v1317, %v1883
        %v1885 = vpop.f32.mrb[0].mxu0
        %v1886 = vadd.f32 %v1321, %v1885
        %v1887 = vpop.f32.mrb[0].mxu0
        %v1888 = vadd.f32 %v1317, %v1887
        %v1889 = vpop.f32.mrb[0].mxu0
        %v1890 = vadd.f32 %v1321, %v1889
        %1891 = vmatprep.mubr.bf16.mxu0 0
        %1892 = vmatmul.mubr.bf16.gmra.mrb[0].mxu0 %v1242
        %v1893 = vpop.f32.mrb[0].mxu0
        %v1894 = vadd.f32 %v1317, %v1893
        %v1895 = vpop.f32.mrb[0].mxu0
        %v1896 = vadd.f32 %v1321, %v1895
        %v1897 = vpop.f32.mrb[0].mxu0
        %v1898 = vadd.f32 %v1317, %v1897
        %v1899 = vpop.f32.mrb[0].mxu0
        %v1900 = vadd.f32 %v1321, %v1899
        %1901 = vmatprep.mubr.bf16.mxu0 0
        %1902 = vmatmul.mubr.bf16.gmra.mrb[0].mxu0 %v1243
        %v1903 = vpop.f32.mrb[0].mxu0
        %v1904 = vadd.f32 %v1317, %v1903
        %v1905 = vpop.f32.mrb[0].mxu0
        %v1906 = vadd.f32 %v1321, %v1905
        %v1907 = vpop.f32.mrb[0].mxu0
        %v1908 = vadd.f32 %v1317, %v1907
        %v1909 = vpop.f32.mrb[0].mxu0
        %v1910 = vadd.f32 %v1321, %v1909
        %1911 = vmatprep.mubr.bf16.mxu0 0
        %1912 = vmatmul.mubr.bf16.gmra.mrb[0].mxu0 %v1244
        %v1913 = vpop.f32.mrb[0].mxu0
        %v1914 = vadd.f32 %v1317, %v1913
        %v1915 = vpop.f32.mrb[0].mxu0
        %v1916 = vadd.f32 %v1321, %v1915
        %v1917 = vpop.f32.mrb[0].mxu0
        %v1918 = vadd.f32 %v1317, %v1917
        %v1919 = vpop.f32.mrb[0].mxu0
        %v1920 = vadd.f32 %v1321, %v1919
        %1921 = vmatprep.mubr.bf16.mxu0 0
        %1922 = vmatmul.mubr.bf16.gmra.mrb[0].mxu0 %v1245
        %v1923 = vpop.f32.mrb[0].mxu0
        %v1924 = vadd.f32 %v1317, %v1923
        %v1925 = vpop.f32.mrb[0].mxu0
        %v1926 = vadd.f32 %v1321, %v1925
        %v1927 = vpop.f32.mrb[0].mxu0
        %v1928 = vadd.f32 %v1317, %v1927
        %v1929 = vpop.f32.mrb[0].mxu0
        %v1930 = vadd.f32 %v1321, %v1929
        %1931 = vmatprep.mubr.bf16.mxu0 0
        %1932 = vmatmul.mubr.bf16.gmra.mrb[0].mxu0 %v1246
        %v1933 = vpop.f32.mrb[0].mxu0
        %v1934 = vadd.f32 %v1317, %v1933
        %v1935 = vpop.f32.mrb[0].mxu0
        %v1936 = vadd.f32 %v1321, %v1935
        %v1937 = vpop.f32.mrb[0].mxu0
        %v1938 = vadd.f32 %v1317, %v1937
        %v1939 = vpop.f32.mrb[0].mxu0
        %v1940 = vadd.f32 %v1321, %v1939
        %1941 = vmatprep.mubr.bf16.mxu0 0
        %1942 = vmatmul.mubr.bf16.gmra.mrb[0].mxu0 %v1247
        %v1943 = vpop.f32.mrb[0].mxu0
        %v1944 = vadd.f32 %v1317, %v1943
        %v1945 = vpop.f32.mrb[0].mxu0
        %v1946 = vadd.f32 %v1321, %v1945
        %v1947 = vpop.f32.mrb[0].mxu0
        %v1948 = vadd.f32 %v1317, %v1947
        %v1949 = vpop.f32.mrb[0].mxu0
        %v1950 = vadd.f32 %v1321, %v1949
        %1951 = vmatprep.mubr.bf16.mxu0 0
        %1952 = vmatmul.mubr.bf16.gmra.mrb[0].mxu0 %v1248
        %v1953 = vpop.f32.mrb[0].mxu0
        %v1954 = vadd.f32 %v1317, %v1953
        %v1955 = vpop.f32.mrb[0].mxu0
        %v1956 = vadd.f32 %v1321, %v1955
        %v1957 = vpop.f32.mrb[0].mxu0
        %v1958 = vadd.f32 %v1317, %v1957
        %v1959 = vpop.f32.mrb[0].mxu0
        %v1960 = vadd.f32 %v1321, %v1959
        %1961 = vmatprep.mubr.bf16.mxu0 0
        %1962 = vmatmul.mubr.bf16.gmra.mrb[0].mxu0 %v1249
        %v1963 = vpop.f32.mrb[0].mxu0
        %v1964 = vadd.f32 %v1317, %v1963
        %v1965 = vpop.f32.mrb[0].mxu0
        %v1966 = vadd.f32 %v1321, %v1965
        %v1967 = vpop.f32.mrb[0].mxu0
        %v1968 = vadd.f32 %v1317, %v1967
        %v1969 = vpop.f32.mrb[0].mxu0
        %v1970 = vadd.f32 %v1321, %v1969
        %1971 = vmatprep.mubr.bf16.mxu0 0
        %1972 = vmatmul.mubr.bf16.gmra.mrb[0].mxu0 %v1250
        %v1973 = vpop.f32.mrb[0].mxu0
        %v1974 = vadd.f32 %v1317, %v1973
        %v1975 = vpop.f32.mrb[0].mxu0
        %v1976 = vadd.f32 %v1321, %v1975
        %v1977 = vpop.f32.mrb[0].mxu0
        %v1978 = vadd.f32 %v1317, %v1977
        %v1979 = vpop.f32.mrb[0].mxu0
        %v1980 = vadd.f32 %v1321, %v1979
        %1981 = vmatprep.mubr.bf16.mxu0 0
        %1982 = vmatmul.mubr.bf16.gmra.mrb[0].mxu0 %v1251
        %v1983 = vpop.f32.mrb[0].mxu0
        %v1984 = vadd.f32 %v1317, %v1983
        %v1985 = vpop.f32.mrb[0].mxu0
        %v1986 = vadd.f32 %v1321, %v1985
        %v1987 = vpop.f32.mrb[0].mxu0
        %v1988 = vadd.f32 %v1317, %v1987
        %v1989 = vpop.f32.mrb[0].mxu0
        %v1990 = vadd.f32 %v1321, %v1989
        %1991 = vmatprep.mubr.bf16.mxu0 0
        %1992 = vmatmul.mubr.bf16.gmra.mrb[0].mxu0 %v1252
        %v1993 = vpop.f32.mrb[0].mxu0
        %v1994 = vadd.f32 %v1317, %v1993
        %v1995 = vpop.f32.mrb[0].mxu0
        %v1996 = vadd.f32 %v1321, %v1995
        %v1997 = vpop.f32.mrb[0].mxu0
        %v1998 = vadd.f32 %v1317, %v1997
        %v1999 = vpop.f32.mrb[0].mxu0
        %v2000 = vadd.f32 %v1321, %v1999
        %2001 = vmatprep.mubr.bf16.mxu0 0
        %2002 = vmatmul.mubr.bf16.gmra.mrb[0].mxu0 %v1253
        %v2003 = vpop.f32.mrb[0].mxu0
        %v2004 = vadd.f32 %v1317, %v2003
        %v2005 = vpop.f32.mrb[0].mxu0
        %v2006 = vadd.f32 %v1321, %v2005
        %v2007 = vpop.f32.mrb[0].mxu0
        %v2008 = vadd.f32 %v1317, %v2007
        %v2009 = vpop.f32.mrb[0].mxu0
        %v2010 = vadd.f32 %v1321, %v2009
        %2011 = vmatprep.mubr.bf16.mxu0 0
        %2012 = vmatmul.mubr.bf16.gmra.mrb[0].mxu0 %v1254
        %v2013 = vpop.f32.mrb[0].mxu0
        %v2014 = vadd.f32 %v1317, %v2013
        %v2015 = vpop.f32.mrb[0].mxu0
        %v2016 = vadd.f32 %v1321, %v2015
        %v2017 = vpop.f32.mrb[0].mxu0
        %v2018 = vadd.f32 %v1317, %v2017
        %v2019 = vpop.f32.mrb[0].mxu0
        %v2020 = vadd.f32 %v1321, %v2019
        %2021 = vmatprep.mubr.bf16.mxu0 0
        %2022 = vmatmul.mubr.bf16.gmra.mrb[0].mxu0 %v1255
        %v2023 = vpop.f32.mrb[0].mxu0
        %v2024 = vadd.f32 %v1317, %v2023
        %v2025 = vpop.f32.mrb[0].mxu0
        %v2026 = vadd.f32 %v1321, %v2025
        %v2027 = vpop.f32.mrb[0].mxu0
        %v2028 = vadd.f32 %v1317, %v2027
        %v2029 = vpop.f32.mrb[0].mxu0
        %v2030 = vadd.f32 %v1321, %v2029
        %2031 = vmatprep.mubr.bf16.mxu0 0
        %2032 = vmatmul.mubr.bf16.gmra.mrb[0].mxu0 %v1256
        %v2033 = vpop.f32.mrb[0].mxu0
        %v2034 = vadd.f32 %v1317, %v2033
        %v2035 = vpop.f32.mrb[0].mxu0
        %v2036 = vadd.f32 %v1321, %v2035
        %v2037 = vpop.f32.mrb[0].mxu0
        %v2038 = vadd.f32 %v1317, %v2037
        %v2039 = vpop.f32.mrb[0].mxu0
        %v2040 = vadd.f32 %v1321, %v2039
        %2041 = vmatprep.mubr.bf16.mxu0 0
        %2042 = vmatmul.mubr.bf16.gmra.mrb[0].mxu0 %v1257
        %v2043 = vpop.f32.mrb[0].mxu0
        %v2044 = vadd.f32 %v1317, %v2043
        %v2045 = vpop.f32.mrb[0].mxu0
        %v2046 = vadd.f32 %v1321, %v2045
        %v2047 = vpop.f32.mrb[0].mxu0
        %v2048 = vadd.f32 %v1317, %v2047
        %v2049 = vpop.f32.mrb[0].mxu0
        %v2050 = vadd.f32 %v1321, %v2049
        %2051 = vmatprep.mubr.bf16.mxu0 0
        %2052 = vmatmul.mubr.bf16.gmra.mrb[0].mxu0 %v1258
        %v2053 = vpop.f32.mrb[0].mxu0
        %v2054 = vadd.f32 %v1317, %v2053
        %v2055 = vpop.f32.mrb[0].mxu0
        %v2056 = vadd.f32 %v1321, %v2055
        %v2057 = vpop.f32.mrb[0].mxu0
        %v2058 = vadd.f32 %v1317, %v2057
        %v2059 = vpop.f32.mrb[0].mxu0
        %v2060 = vadd.f32 %v1321, %v2059
        %2061 = vmatprep.mubr.bf16.mxu0 0
        %2062 = vmatmul.mubr.bf16.gmra.mrb[0].mxu0 %v1259
        %v2063 = vpop.f32.mrb[0].mxu0
        %v2064 = vadd.f32 %v1317, %v2063
        %v2065 = vpop.f32.mrb[0].mxu0
        %v2066 = vadd.f32 %v1321, %v2065
        %v2067 = vpop.f32.mrb[0].mxu0
        %v2068 = vadd.f32 %v1317, %v2067
        %v2069 = vpop.f32.mrb[0].mxu0
        %v2070 = vadd.f32 %v1321, %v2069
        %2071 = vmatprep.mubr.bf16.mxu0 0
        %2072 = vmatmul.mubr.bf16.gmra.mrb[0].mxu0 %v1260
        %v2073 = vpop.f32.mrb[0].mxu0
        %v2074 = vadd.f32 %v1317, %v2073
        %v2075 = vpop.f32.mrb[0].mxu0
        %v2076 = vadd.f32 %v1321, %v2075
        %v2077 = vpop.f32.mrb[0].mxu0
        %v2078 = vadd.f32 %v1317, %v2077
        %v2079 = vpop.f32.mrb[0].mxu0
        %v2080 = vadd.f32 %v1321, %v2079
        %2081 = vmatprep.mubr.bf16.mxu0 0
        %2082 = vmatmul.mubr.bf16.gmra.mrb[0].mxu0 %v1261
        %v2083 = vpop.f32.mrb[0].mxu0
        %v2084 = vadd.f32 %v1317, %v2083
        %v2085 = vpop.f32.mrb[0].mxu0
        %v2086 = vadd.f32 %v1321, %v2085
        %v2087 = vpop.f32.mrb[0].mxu0
        %v2088 = vadd.f32 %v1317, %v2087
        %v2089 = vpop.f32.mrb[0].mxu0
        %v2090 = vadd.f32 %v1321, %v2089
        %2091 = vmatprep.mubr.bf16.mxu0 0
        %2092 = vmatmul.mubr.bf16.gmra.mrb[0].mxu0 %v1262
        %v2093 = vpop.f32.mrb[0].mxu0
        %v2094 = vadd.f32 %v1317, %v2093
        %v2095 = vpop.f32.mrb[0].mxu0
        %v2096 = vadd.f32 %v1321, %v2095
        %v2097 = vpop.f32.mrb[0].mxu0
        %v2098 = vadd.f32 %v1317, %v2097
        %v2099 = vpop.f32.mrb[0].mxu0
        %v2100 = vadd.f32 %v1321, %v2099
        %2101 = vmatprep.mubr.bf16.mxu0 0
        %2102 = vmatmul.mubr.bf16.gmra.mrb[0].mxu0 %v1263
        %v2103 = vpop.f32.mrb[0].mxu0
        %v2104 = vadd.f32 %v1317, %v2103
        %v2105 = vpop.f32.mrb[0].mxu0
        %v2106 = vadd.f32 %v1321, %v2105
        %v2107 = vpop.f32.mrb[0].mxu0
        %v2108 = vadd.f32 %v1317, %v2107
        %v2109 = vpop.f32.mrb[0].mxu0
        %v2110 = vadd.f32 %v1321, %v2109
        %2111 = vmatprep.mubr.bf16.mxu0 0
        %2112 = vmatmul.mubr.bf16.gmra.mrb[0].mxu0 %v1264
        %v2113 = vpop.f32.mrb[0].mxu0
        %v2114 = vadd.f32 %v1317, %v2113
        %v2115 = vpop.f32.mrb[0].mxu0
        %v2116 = vadd.f32 %v1321, %v2115
        %v2117 = vpop.f32.mrb[0].mxu0
        %v2118 = vadd.f32 %v1317, %v2117
        %v2119 = vpop.f32.mrb[0].mxu0
        %v2120 = vadd.f32 %v1321, %v2119
        %2121 = vmatprep.mubr.bf16.mxu0 0
        %2122 = vmatmul.mubr.bf16.gmra.mrb[0].mxu0 %v1265
        %v2123 = vpop.f32.mrb[0].mxu0
        %v2124 = vadd.f32 %v1317, %v2123
        %v2125 = vpop.f32.mrb[0].mxu0
        %v2126 = vadd.f32 %v1321, %v2125
        %v2127 = vpop.f32.mrb[0].mxu0
        %v2128 = vadd.f32 %v1317, %v2127
        %v2129 = vpop.f32.mrb[0].mxu0
        %v2130 = vadd.f32 %v1321, %v2129
        %2131 = vmatprep.mubr.bf16.mxu0 0
        %2132 = vmatmul.mubr.bf16.gmra.mrb[0].mxu0 %v1266
        %v2133 = vpop.f32.mrb[0].mxu0
        %v2134 = vadd.f32 %v1317, %v2133
        %v2135 = vpop.f32.mrb[0].mxu0
        %v2136 = vadd.f32 %v1321, %v2135
        %v2137 = vpop.f32.mrb[0].mxu0
        %v2138 = vadd.f32 %v1317, %v2137
        %v2139 = vpop.f32.mrb[0].mxu0
        %v2140 = vadd.f32 %v1321, %v2139
        %2141 = vmatprep.mubr.bf16.mxu0 0
        %2142 = vmatmul.mubr.bf16.gmra.mrb[0].mxu0 %v1267
        %v2143 = vpop.f32.mrb[0].mxu0
        %v2144 = vadd.f32 %v1317, %v2143
        %v2145 = vpop.f32.mrb[0].mxu0
        %v2146 = vadd.f32 %v1321, %v2145
        %v2147 = vpop.f32.mrb[0].mxu0
        %v2148 = vadd.f32 %v1317, %v2147
        %v2149 = vpop.f32.mrb[0].mxu0
        %v2150 = vadd.f32 %v1321, %v2149
        %2151 = vmatprep.mubr.bf16.mxu0 0
        %2152 = vmatmul.mubr.bf16.gmra.mrb[0].mxu0 %v1268
        %v2153 = vpop.f32.mrb[0].mxu0
        %v2154 = vadd.f32 %v1317, %v2153
        %v2155 = vpop.f32.mrb[0].mxu0
        %v2156 = vadd.f32 %v1321, %v2155
        %v2157 = vpop.f32.mrb[0].mxu0
        %v2158 = vadd.f32 %v1317, %v2157
        %v2159 = vpop.f32.mrb[0].mxu0
        %v2160 = vadd.f32 %v1321, %v2159
        %2161 = vmatprep.mubr.bf16.mxu0 0
        %2162 = vmatmul.mubr.bf16.gmra.mrb[0].mxu0 %v1269
        %v2163 = vpop.f32.mrb[0].mxu0
        %v2164 = vadd.f32 %v1317, %v2163
        %v2165 = vpop.f32.mrb[0].mxu0
        %v2166 = vadd.f32 %v1321, %v2165
        %v2167 = vpop.f32.mrb[0].mxu0
        %v2168 = vadd.f32 %v1317, %v2167
        %v2169 = vpop.f32.mrb[0].mxu0
        %v2170 = vadd.f32 %v1321, %v2169
        %2171 = vmatprep.mubr.bf16.mxu0 0
        %2172 = vmatmul.mubr.bf16.gmra.mrb[0].mxu0 %v1270
        %v2173 = vpop.f32.mrb[0].mxu0
        %v2174 = vadd.f32 %v1317, %v2173
        %v2175 = vpop.f32.mrb[0].mxu0
        %v2176 = vadd.f32 %v1321, %v2175
        %v2177 = vpop.f32.mrb[0].mxu0
        %v2178 = vadd.f32 %v1317, %v2177
        %v2179 = vpop.f32.mrb[0].mxu0
        %v2180 = vadd.f32 %v1321, %v2179
        %2181 = vmatprep.mubr.bf16.mxu0 0
        %2182 = vmatmul.mubr.bf16.gmra.mrb[0].mxu0 %v1271
        %v2183 = vpop.f32.mrb[0].mxu0
        %v2184 = vadd.f32 %v1317, %v2183
        %v2185 = vpop.f32.mrb[0].mxu0
        %v2186 = vadd.f32 %v1321, %v2185
        %v2187 = vpop.f32.mrb[0].mxu0
        %v2188 = vadd.f32 %v1317, %v2187
        %v2189 = vpop.f32.mrb[0].mxu0
        %v2190 = vadd.f32 %v1321, %v2189
        %2191 = vdwg.mxu0
        %v2192 = vmul.f32 %v1521, 0.5
        %v2193 = vmul.f32 %v1523, 0.5
        %v2194 = vmul.f32 %v1874, 0.5
        %v2195 = vmul.f32 %v1876, 0.5
        %v2196 = vmul.f32 %v1525, 0.5
        %v2197 = vmul.f32 %v1527, 0.5
        %v2198 = vmul.f32 %v1878, 0.5
        %v2199 = vmul.f32 %v1880, 0.5
        %v2200 = vmul.f32 %v1531, 0.5
        %v2201 = vmul.f32 %v1533, 0.5
        %v2202 = vmul.f32 %v1884, 0.5
        %v2203 = vmul.f32 %v1886, 0.5
        %v2204 = vmul.f32 %v1535, 0.5
        %v2205 = vmul.f32 %v1537, 0.5
        %v2206 = vmul.f32 %v1888, 0.5
        %v2207 = vmul.f32 %v1890, 0.5
        %v2208 = vmul.f32 %v1541, 0.5
        %v2209 = vmul.f32 %v1543, 0.5
        %v2210 = vmul.f32 %v1894, 0.5
        %v2211 = vmul.f32 %v1896, 0.5
        %v2212 = vmul.f32 %v1545, 0.5
        %v2213 = vmul.f32 %v1547, 0.5
        %v2214 = vmul.f32 %v1898, 0.5
        %v2215 = vmul.f32 %v1900, 0.5
        %v2216 = vmul.f32 %v1551, 0.5
        %v2217 = vmul.f32 %v1553, 0.5
        %v2218 = vmul.f32 %v1904, 0.5
        %v2219 = vmul.f32 %v1906, 0.5
        %v2220 = vmul.f32 %v1555, 0.5
        %v2221 = vmul.f32 %v1557, 0.5
        %v2222 = vmul.f32 %v1908, 0.5
        %v2223 = vmul.f32 %v1910, 0.5
        %v2224 = vmul.f32 %v1561, 0.5
        %v2225 = vmul.f32 %v1563, 0.5
        %v2226 = vmul.f32 %v1914, 0.5
        %v2227 = vmul.f32 %v1916, 0.5
        %v2228 = vmul.f32 %v1565, 0.5
        %v2229 = vmul.f32 %v1567, 0.5
        %v2230 = vmul.f32 %v1918, 0.5
        %v2231 = vmul.f32 %v1920, 0.5
        %v2232 = vmul.f32 %v1571, 0.5
        %v2233 = vmul.f32 %v1573, 0.5
        %v2234 = vmul.f32 %v1924, 0.5
        %v2235 = vmul.f32 %v1926, 0.5
        %v2236 = vmul.f32 %v1575, 0.5
        %v2237 = vmul.f32 %v1577, 0.5
        %v2238 = vmul.f32 %v1928, 0.5
        %v2239 = vmul.f32 %v1930, 0.5
        %v2240 = vmul.f32 %v1581, 0.5
        %v2241 = vmul.f32 %v1583, 0.5
        %v2242 = vmul.f32 %v1934, 0.5
        %v2243 = vmul.f32 %v1936, 0.5
        %v2244 = vmul.f32 %v1585, 0.5
        %v2245 = vmul.f32 %v1587, 0.5
        %v2246 = vmul.f32 %v1938, 0.5
        %v2247 = vmul.f32 %v1940, 0.5
        %v2248 = vmul.f32 %v1591, 0.5
        %v2249 = vmul.f32 %v1593, 0.5
        %v2250 = vmul.f32 %v1944, 0.5
        %v2251 = vmul.f32 %v1946, 0.5
        %v2252 = vmul.f32 %v1595, 0.5
        %v2253 = vmul.f32 %v1597, 0.5
        %v2254 = vmul.f32 %v1948, 0.5
        %v2255 = vmul.f32 %v1950, 0.5
        %v2256 = vmul.f32 %v1601, 0.5
        %v2257 = vmul.f32 %v1603, 0.5
        %v2258 = vmul.f32 %v1954, 0.5
        %v2259 = vmul.f32 %v1956, 0.5
        %v2260 = vmul.f32 %v1605, 0.5
        %v2261 = vmul.f32 %v1607, 0.5
        %v2262 = vmul.f32 %v1958, 0.5
        %v2263 = vmul.f32 %v1960, 0.5
        %v2264 = vmul.f32 %v1611, 0.5
        %v2265 = vmul.f32 %v1613, 0.5
        %v2266 = vmul.f32 %v1964, 0.5
        %v2267 = vmul.f32 %v1966, 0.5
        %v2268 = vmul.f32 %v1615, 0.5
        %v2269 = vmul.f32 %v1617, 0.5
        %v2270 = vmul.f32 %v1968, 0.5
        %v2271 = vmul.f32 %v1970, 0.5
        %v2272 = vmul.f32 %v1621, 0.5
        %v2273 = vmul.f32 %v1623, 0.5
        %v2274 = vmul.f32 %v1974, 0.5
        %v2275 = vmul.f32 %v1976, 0.5
        %v2276 = vmul.f32 %v1625, 0.5
        %v2277 = vmul.f32 %v1627, 0.5
        %v2278 = vmul.f32 %v1978, 0.5
        %v2279 = vmul.f32 %v1980, 0.5
        %v2280 = vmul.f32 %v1631, 0.5
        %v2281 = vmul.f32 %v1633, 0.5
        %v2282 = vmul.f32 %v1984, 0.5
        %v2283 = vmul.f32 %v1986, 0.5
        %v2284 = vmul.f32 %v1635, 0.5
        %v2285 = vmul.f32 %v1637, 0.5
        %v2286 = vmul.f32 %v1988, 0.5
        %v2287 = vmul.f32 %v1990, 0.5
        %v2288 = vmul.f32 %v1641, 0.5
        %v2289 = vmul.f32 %v1643, 0.5
        %v2290 = vmul.f32 %v1994, 0.5
        %v2291 = vmul.f32 %v1996, 0.5
        %v2292 = vmul.f32 %v1645, 0.5
        %v2293 = vmul.f32 %v1647, 0.5
        %v2294 = vmul.f32 %v1998, 0.5
        %v2295 = vmul.f32 %v2000, 0.5
        %v2296 = vmul.f32 %v1651, 0.5
        %v2297 = vmul.f32 %v1653, 0.5
        %v2298 = vmul.f32 %v2004, 0.5
        %v2299 = vmul.f32 %v2006, 0.5
        %v2300 = vmul.f32 %v1655, 0.5
        %v2301 = vmul.f32 %v1657, 0.5
        %v2302 = vmul.f32 %v2008, 0.5
        %v2303 = vmul.f32 %v2010, 0.5
        %v2304 = vmul.f32 %v1661, 0.5
        %v2305 = vmul.f32 %v1663, 0.5
        %v2306 = vmul.f32 %v2014, 0.5
        %v2307 = vmul.f32 %v2016, 0.5
        %v2308 = vmul.f32 %v1665, 0.5
        %v2309 = vmul.f32 %v1667, 0.5
        %v2310 = vmul.f32 %v2018, 0.5
        %v2311 = vmul.f32 %v2020, 0.5
        %v2312 = vmul.f32 %v1671, 0.5
        %v2313 = vmul.f32 %v1673, 0.5
        %v2314 = vmul.f32 %v2024, 0.5
        %v2315 = vmul.f32 %v2026, 0.5
        %v2316 = vmul.f32 %v1675, 0.5
        %v2317 = vmul.f32 %v1677, 0.5
        %v2318 = vmul.f32 %v2028, 0.5
        %v2319 = vmul.f32 %v2030, 0.5
        %v2320 = vmul.f32 %v1681, 0.5
        %v2321 = vmul.f32 %v1683, 0.5
        %v2322 = vmul.f32 %v2034, 0.5
        %v2323 = vmul.f32 %v2036, 0.5
        %v2324 = vmul.f32 %v1685, 0.5
        %v2325 = vmul.f32 %v1687, 0.5
        %v2326 = vmul.f32 %v2038, 0.5
        %v2327 = vmul.f32 %v2040, 0.5
        %v2328 = vmul.f32 %v1691, 0.5
        %v2329 = vmul.f32 %v1693, 0.5
        %v2330 = vmul.f32 %v2044, 0.5
        %v2331 = vmul.f32 %v2046, 0.5
        %v2332 = vmul.f32 %v1695, 0.5
        %v2333 = vmul.f32 %v1697, 0.5
        %v2334 = vmul.f32 %v2048, 0.5
        %v2335 = vmul.f32 %v2050, 0.5
        %v2336 = vmul.f32 %v1701, 0.5
        %v2337 = vmul.f32 %v1703, 0.5
        %v2338 = vmul.f32 %v2054, 0.5
        %v2339 = vmul.f32 %v2056, 0.5
        %v2340 = vmul.f32 %v1705, 0.5
        %v2341 = vmul.f32 %v1707, 0.5
        %v2342 = vmul.f32 %v2058, 0.5
        %v2343 = vmul.f32 %v2060, 0.5
        %v2344 = vmul.f32 %v1711, 0.5
        %v2345 = vmul.f32 %v1713, 0.5
        %v2346 = vmul.f32 %v2064, 0.5
        %v2347 = vmul.f32 %v2066, 0.5
        %v2348 = vmul.f32 %v1715, 0.5
        %v2349 = vmul.f32 %v1717, 0.5
        %v2350 = vmul.f32 %v2068, 0.5
        %v2351 = vmul.f32 %v2070, 0.5
        %v2352 = vmul.f32 %v1721, 0.5
        %v2353 = vmul.f32 %v1723, 0.5
        %v2354 = vmul.f32 %v2074, 0.5
        %v2355 = vmul.f32 %v2076, 0.5
        %v2356 = vmul.f32 %v1725, 0.5
        %v2357 = vmul.f32 %v1727, 0.5
        %v2358 = vmul.f32 %v2078, 0.5
        %v2359 = vmul.f32 %v2080, 0.5
        %v2360 = vmul.f32 %v1731, 0.5
        %v2361 = vmul.f32 %v1733, 0.5
        %v2362 = vmul.f32 %v2084, 0.5
        %v2363 = vmul.f32 %v2086, 0.5
        %v2364 = vmul.f32 %v1735, 0.5
        %v2365 = vmul.f32 %v1737, 0.5
        %v2366 = vmul.f32 %v2088, 0.5
        %v2367 = vmul.f32 %v2090, 0.5
        %v2368 = vmul.f32 %v1741, 0.5
        %v2369 = vmul.f32 %v1743, 0.5
        %v2370 = vmul.f32 %v2094, 0.5
        %v2371 = vmul.f32 %v2096, 0.5
        %v2372 = vmul.f32 %v1745, 0.5
        %v2373 = vmul.f32 %v1747, 0.5
        %v2374 = vmul.f32 %v2098, 0.5
        %v2375 = vmul.f32 %v2100, 0.5
        %v2376 = vmul.f32 %v1751, 0.5
        %v2377 = vmul.f32 %v1753, 0.5
        %v2378 = vmul.f32 %v2104, 0.5
        %v2379 = vmul.f32 %v2106, 0.5
        %v2380 = vmul.f32 %v1755, 0.5
        %v2381 = vmul.f32 %v1757, 0.5
        %v2382 = vmul.f32 %v2108, 0.5
        %v2383 = vmul.f32 %v2110, 0.5
        %v2384 = vmul.f32 %v1761, 0.5
        %v2385 = vmul.f32 %v1763, 0.5
        %v2386 = vmul.f32 %v2114, 0.5
        %v2387 = vmul.f32 %v2116, 0.5
        %v2388 = vmul.f32 %v1765, 0.5
        %v2389 = vmul.f32 %v1767, 0.5
        %v2390 = vmul.f32 %v2118, 0.5
        %v2391 = vmul.f32 %v2120, 0.5
        %v2392 = vmul.f32 %v1771, 0.5
        %v2393 = vmul.f32 %v1773, 0.5
        %v2394 = vmul.f32 %v2124, 0.5
        %v2395 = vmul.f32 %v2126, 0.5
        %v2396 = vmul.f32 %v1775, 0.5
        %v2397 = vmul.f32 %v1777, 0.5
        %v2398 = vmul.f32 %v2128, 0.5
        %v2399 = vmul.f32 %v2130, 0.5
        %v2400 = vmul.f32 %v1781, 0.5
        %v2401 = vmul.f32 %v1783, 0.5
        %v2402 = vmul.f32 %v2134, 0.5
        %v2403 = vmul.f32 %v2136, 0.5
        %v2404 = vmul.f32 %v1785, 0.5
        %v2405 = vmul.f32 %v1787, 0.5
        %v2406 = vmul.f32 %v2138, 0.5
        %v2407 = vmul.f32 %v2140, 0.5
        %v2408 = vmul.f32 %v1791, 0.5
        %v2409 = vmul.f32 %v1793, 0.5
        %v2410 = vmul.f32 %v2144, 0.5
        %v2411 = vmul.f32 %v2146, 0.5
        %v2412 = vmul.f32 %v1795, 0.5
        %v2413 = vmul.f32 %v1797, 0.5
        %v2414 = vmul.f32 %v2148, 0.5
        %v2415 = vmul.f32 %v2150, 0.5
        %v2416 = vmul.f32 %v1801, 0.5
        %v2417 = vmul.f32 %v1803, 0.5
        %v2418 = vmul.f32 %v2154, 0.5
        %v2419 = vmul.f32 %v2156, 0.5
        %v2420 = vmul.f32 %v1805, 0.5
        %v2421 = vmul.f32 %v1807, 0.5
        %v2422 = vmul.f32 %v2158, 0.5
        %v2423 = vmul.f32 %v2160, 0.5
        %v2424 = vmul.f32 %v1811, 0.5
        %v2425 = vmul.f32 %v1813, 0.5
        %v2426 = vmul.f32 %v2164, 0.5
        %v2427 = vmul.f32 %v2166, 0.5
        %v2428 = vmul.f32 %v1815, 0.5
        %v2429 = vmul.f32 %v1817, 0.5
        %v2430 = vmul.f32 %v2168, 0.5
        %v2431 = vmul.f32 %v2170, 0.5
        %v2432 = vmul.f32 %v1821, 0.5
        %v2433 = vmul.f32 %v1823, 0.5
        %v2434 = vmul.f32 %v2174, 0.5
        %v2435 = vmul.f32 %v2176, 0.5
        %v2436 = vmul.f32 %v1825, 0.5
        %v2437 = vmul.f32 %v1827, 0.5
        %v2438 = vmul.f32 %v2178, 0.5
        %v2439 = vmul.f32 %v2180, 0.5
        %v2440 = vmul.f32 %v1831, 0.5
        %v2441 = vmul.f32 %v1833, 0.5
        %v2442 = vmul.f32 %v2184, 0.5
        %v2443 = vmul.f32 %v2186, 0.5
        %v2444 = vmul.f32 %v1835, 0.5
        %v2445 = vmul.f32 %v1837, 0.5
        %v2446 = vmul.f32 %v2188, 0.5
        %v2447 = vmul.f32 %v2190, 0.5
        %v2448 = vmul.f32 %v1521, 0.70710677
        %v2449 = vmul.f32 %v1523, 0.70710677
        %v2450 = vmul.f32 %v1874, 0.70710677
        %v2451 = vmul.f32 %v1876, 0.70710677
        %v2452 = vmul.f32 %v1525, 0.70710677
        %v2453 = vmul.f32 %v1527, 0.70710677
        %v2454 = vmul.f32 %v1878, 0.70710677
        %v2455 = vmul.f32 %v1880, 0.70710677
        %v2456 = vmul.f32 %v1531, 0.70710677
        %v2457 = vmul.f32 %v1533, 0.70710677
        %v2458 = vmul.f32 %v1884, 0.70710677
        %v2459 = vmul.f32 %v1886, 0.70710677
        %v2460 = vmul.f32 %v1535, 0.70710677
        %v2461 = vmul.f32 %v1537, 0.70710677
        %v2462 = vmul.f32 %v1888, 0.70710677
        %v2463 = vmul.f32 %v1890, 0.70710677
        %v2464 = vmul.f32 %v1541, 0.70710677
        %v2465 = vmul.f32 %v1543, 0.70710677
        %v2466 = vmul.f32 %v1894, 0.70710677
        %v2467 = vmul.f32 %v1896, 0.70710677
        %v2468 = vmul.f32 %v1545, 0.70710677
        %v2469 = vmul.f32 %v1547, 0.70710677
        %v2470 = vmul.f32 %v1898, 0.70710677
        %v2471 = vmul.f32 %v1900, 0.70710677
        %v2472 = vmul.f32 %v1551, 0.70710677
        %v2473 = vmul.f32 %v1553, 0.70710677
        %v2474 = vmul.f32 %v1904, 0.70710677
        %v2475 = vmul.f32 %v1906, 0.70710677
        %v2476 = vmul.f32 %v1555, 0.70710677
        %v2477 = vmul.f32 %v1557, 0.70710677
        %v2478 = vmul.f32 %v1908, 0.70710677
        %v2479 = vmul.f32 %v1910, 0.70710677
        %v2480 = vmul.f32 %v1561, 0.70710677
        %v2481 = vmul.f32 %v1563, 0.70710677
        %v2482 = vmul.f32 %v1914, 0.70710677
        %v2483 = vmul.f32 %v1916, 0.70710677
        %v2484 = vmul.f32 %v1565, 0.70710677
        %v2485 = vmul.f32 %v1567, 0.70710677
        %v2486 = vmul.f32 %v1918, 0.70710677
        %v2487 = vmul.f32 %v1920, 0.70710677
        %v2488 = vmul.f32 %v1571, 0.70710677
        %v2489 = vmul.f32 %v1573, 0.70710677
        %v2490 = vmul.f32 %v1924, 0.70710677
        %v2491 = vmul.f32 %v1926, 0.70710677
        %v2492 = vmul.f32 %v1575, 0.70710677
        %v2493 = vmul.f32 %v1577, 0.70710677
        %v2494 = vmul.f32 %v1928, 0.70710677
        %v2495 = vmul.f32 %v1930, 0.70710677
        %v2496 = vmul.f32 %v1581, 0.70710677
        %v2497 = vmul.f32 %v1583, 0.70710677
        %v2498 = vmul.f32 %v1934, 0.70710677
        %v2499 = vmul.f32 %v1936, 0.70710677
        %v2500 = vmul.f32 %v1585, 0.70710677
        %v2501 = vmul.f32 %v1587, 0.70710677
        %v2502 = vmul.f32 %v1938, 0.70710677
        %v2503 = vmul.f32 %v1940, 0.70710677
        %v2504 = vmul.f32 %v1591, 0.70710677
        %v2505 = vmul.f32 %v1593, 0.70710677
        %v2506 = vmul.f32 %v1944, 0.70710677
        %v2507 = vmul.f32 %v1946, 0.70710677
        %v2508 = vmul.f32 %v1595, 0.70710677
        %v2509 = vmul.f32 %v1597, 0.70710677
        %v2510 = vmul.f32 %v1948, 0.70710677
        %v2511 = vmul.f32 %v1950, 0.70710677
        %v2512 = vmul.f32 %v1601, 0.70710677
        %v2513 = vmul.f32 %v1603, 0.70710677
        %v2514 = vmul.f32 %v1954, 0.70710677
        %v2515 = vmul.f32 %v1956, 0.70710677
        %v2516 = vmul.f32 %v1605, 0.70710677
        %v2517 = vmul.f32 %v1607, 0.70710677
        %v2518 = vmul.f32 %v1958, 0.70710677
        %v2519 = vmul.f32 %v1960, 0.70710677
        %v2520 = vmul.f32 %v1611, 0.70710677
        %v2521 = vmul.f32 %v1613, 0.70710677
        %v2522 = vmul.f32 %v1964, 0.70710677
        %v2523 = vmul.f32 %v1966, 0.70710677
        %v2524 = vmul.f32 %v1615, 0.70710677
        %v2525 = vmul.f32 %v1617, 0.70710677
        %v2526 = vmul.f32 %v1968, 0.70710677
        %v2527 = vmul.f32 %v1970, 0.70710677
        %v2528 = vmul.f32 %v1621, 0.70710677
        %v2529 = vmul.f32 %v1623, 0.70710677
        %v2530 = vmul.f32 %v1974, 0.70710677
        %v2531 = vmul.f32 %v1976, 0.70710677
        %v2532 = vmul.f32 %v1625, 0.70710677
        %v2533 = vmul.f32 %v1627, 0.70710677
        %v2534 = vmul.f32 %v1978, 0.70710677
        %v2535 = vmul.f32 %v1980, 0.70710677
        %v2536 = vmul.f32 %v1631, 0.70710677
        %v2537 = vmul.f32 %v1633, 0.70710677
        %v2538 = vmul.f32 %v1984, 0.70710677
        %v2539 = vmul.f32 %v1986, 0.70710677
        %v2540 = vmul.f32 %v1635, 0.70710677
        %v2541 = vmul.f32 %v1637, 0.70710677
        %v2542 = vmul.f32 %v1988, 0.70710677
        %v2543 = vmul.f32 %v1990, 0.70710677
        %v2544 = vmul.f32 %v1641, 0.70710677
        %v2545 = vmul.f32 %v1643, 0.70710677
        %v2546 = vmul.f32 %v1994, 0.70710677
        %v2547 = vmul.f32 %v1996, 0.70710677
        %v2548 = vmul.f32 %v1645, 0.70710677
        %v2549 = vmul.f32 %v1647, 0.70710677
        %v2550 = vmul.f32 %v1998, 0.70710677
        %v2551 = vmul.f32 %v2000, 0.70710677
        %v2552 = vmul.f32 %v1651, 0.70710677
        %v2553 = vmul.f32 %v1653, 0.70710677
        %v2554 = vmul.f32 %v2004, 0.70710677
        %v2555 = vmul.f32 %v2006, 0.70710677
        %v2556 = vmul.f32 %v1655, 0.70710677
        %v2557 = vmul.f32 %v1657, 0.70710677
        %v2558 = vmul.f32 %v2008, 0.70710677
        %v2559 = vmul.f32 %v2010, 0.70710677
        %v2560 = vmul.f32 %v1661, 0.70710677
        %v2561 = vmul.f32 %v1663, 0.70710677
        %v2562 = vmul.f32 %v2014, 0.70710677
        %v2563 = vmul.f32 %v2016, 0.70710677
        %v2564 = vmul.f32 %v1665, 0.70710677
        %v2565 = vmul.f32 %v1667, 0.70710677
        %v2566 = vmul.f32 %v2018, 0.70710677
        %v2567 = vmul.f32 %v2020, 0.70710677
        %v2568 = vmul.f32 %v1671, 0.70710677
        %v2569 = vmul.f32 %v1673, 0.70710677
        %v2570 = vmul.f32 %v2024, 0.70710677
        %v2571 = vmul.f32 %v2026, 0.70710677
        %v2572 = vmul.f32 %v1675, 0.70710677
        %v2573 = vmul.f32 %v1677, 0.70710677
        %v2574 = vmul.f32 %v2028, 0.70710677
        %v2575 = vmul.f32 %v2030, 0.70710677
        %v2576 = vmul.f32 %v1681, 0.70710677
        %v2577 = vmul.f32 %v1683, 0.70710677
        %v2578 = vmul.f32 %v2034, 0.70710677
        %v2579 = vmul.f32 %v2036, 0.70710677
        %v2580 = vmul.f32 %v1685, 0.70710677
        %v2581 = vmul.f32 %v1687, 0.70710677
        %v2582 = vmul.f32 %v2038, 0.70710677
        %v2583 = vmul.f32 %v2040, 0.70710677
        %v2584 = vmul.f32 %v1691, 0.70710677
        %v2585 = vmul.f32 %v1693, 0.70710677
        %v2586 = vmul.f32 %v2044, 0.70710677
        %v2587 = vmul.f32 %v2046, 0.70710677
        %v2588 = vmul.f32 %v1695, 0.70710677
        %v2589 = vmul.f32 %v1697, 0.70710677
        %v2590 = vmul.f32 %v2048, 0.70710677
        %v2591 = vmul.f32 %v2050, 0.70710677
        %v2592 = vmul.f32 %v1701, 0.70710677
        %v2593 = vmul.f32 %v1703, 0.70710677
        %v2594 = vmul.f32 %v2054, 0.70710677
        %v2595 = vmul.f32 %v2056, 0.70710677
        %v2596 = vmul.f32 %v1705, 0.70710677
        %v2597 = vmul.f32 %v1707, 0.70710677
        %v2598 = vmul.f32 %v2058, 0.70710677
        %v2599 = vmul.f32 %v2060, 0.70710677
        %v2600 = vmul.f32 %v1711, 0.70710677
        %v2601 = vmul.f32 %v1713, 0.70710677
        %v2602 = vmul.f32 %v2064, 0.70710677
        %v2603 = vmul.f32 %v2066, 0.70710677
        %v2604 = vmul.f32 %v1715, 0.70710677
        %v2605 = vmul.f32 %v1717, 0.70710677
        %v2606 = vmul.f32 %v2068, 0.70710677
        %v2607 = vmul.f32 %v2070, 0.70710677
        %v2608 = vmul.f32 %v1721, 0.70710677
        %v2609 = vmul.f32 %v1723, 0.70710677
        %v2610 = vmul.f32 %v2074, 0.70710677
        %v2611 = vmul.f32 %v2076, 0.70710677
        %v2612 = vmul.f32 %v1725, 0.70710677
        %v2613 = vmul.f32 %v1727, 0.70710677
        %v2614 = vmul.f32 %v2078, 0.70710677
        %v2615 = vmul.f32 %v2080, 0.70710677
        %v2616 = vmul.f32 %v1731, 0.70710677
        %v2617 = vmul.f32 %v1733, 0.70710677
        %v2618 = vmul.f32 %v2084, 0.70710677
        %v2619 = vmul.f32 %v2086, 0.70710677
        %v2620 = vmul.f32 %v1735, 0.70710677
        %v2621 = vmul.f32 %v1737, 0.70710677
        %v2622 = vmul.f32 %v2088, 0.70710677
        %v2623 = vmul.f32 %v2090, 0.70710677
        %v2624 = vmul.f32 %v1741, 0.70710677
        %v2625 = vmul.f32 %v1743, 0.70710677
        %v2626 = vmul.f32 %v2094, 0.70710677
        %v2627 = vmul.f32 %v2096, 0.70710677
        %v2628 = vmul.f32 %v1745, 0.70710677
        %v2629 = vmul.f32 %v1747, 0.70710677
        %v2630 = vmul.f32 %v2098, 0.70710677
        %v2631 = vmul.f32 %v2100, 0.70710677
        %v2632 = vmul.f32 %v1751, 0.70710677
        %v2633 = vmul.f32 %v1753, 0.70710677
        %v2634 = vmul.f32 %v2104, 0.70710677
        %v2635 = vmul.f32 %v2106, 0.70710677
        %v2636 = vmul.f32 %v1755, 0.70710677
        %v2637 = vmul.f32 %v1757, 0.70710677
        %v2638 = vmul.f32 %v2108, 0.70710677
        %v2639 = vmul.f32 %v2110, 0.70710677
        %v2640 = vmul.f32 %v1761, 0.70710677
        %v2641 = vmul.f32 %v1763, 0.70710677
        %v2642 = vmul.f32 %v2114, 0.70710677
        %v2643 = vmul.f32 %v2116, 0.70710677
        %v2644 = vmul.f32 %v1765, 0.70710677
        %v2645 = vmul.f32 %v1767, 0.70710677
        %v2646 = vmul.f32 %v2118, 0.70710677
        %v2647 = vmul.f32 %v2120, 0.70710677
        %v2648 = vmul.f32 %v1771, 0.70710677
        %v2649 = vmul.f32 %v1773, 0.70710677
        %v2650 = vmul.f32 %v2124, 0.70710677
        %v2651 = vmul.f32 %v2126, 0.70710677
        %v2652 = vmul.f32 %v1775, 0.70710677
        %v2653 = vmul.f32 %v1777, 0.70710677
        %v2654 = vmul.f32 %v2128, 0.70710677
        %v2655 = vmul.f32 %v2130, 0.70710677
        %v2656 = vmul.f32 %v1781, 0.70710677
        %v2657 = vmul.f32 %v1783, 0.70710677
        %v2658 = vmul.f32 %v2134, 0.70710677
        %v2659 = vmul.f32 %v2136, 0.70710677
        %v2660 = vmul.f32 %v1785, 0.70710677
        %v2661 = vmul.f32 %v1787, 0.70710677
        %v2662 = vmul.f32 %v2138, 0.70710677
        %v2663 = vmul.f32 %v2140, 0.70710677
        %v2664 = vmul.f32 %v1791, 0.70710677
        %v2665 = vmul.f32 %v1793, 0.70710677
        %v2666 = vmul.f32 %v2144, 0.70710677
        %v2667 = vmul.f32 %v2146, 0.70710677
        %v2668 = vmul.f32 %v1795, 0.70710677
        %v2669 = vmul.f32 %v1797, 0.70710677
        %v2670 = vmul.f32 %v2148, 0.70710677
        %v2671 = vmul.f32 %v2150, 0.70710677
        %v2672 = vmul.f32 %v1801, 0.70710677
        %v2673 = vmul.f32 %v1803, 0.70710677
        %v2674 = vmul.f32 %v2154, 0.70710677
        %v2675 = vmul.f32 %v2156, 0.70710677
        %v2676 = vmul.f32 %v1805, 0.70710677
        %v2677 = vmul.f32 %v1807, 0.70710677
        %v2678 = vmul.f32 %v2158, 0.70710677
        %v2679 = vmul.f32 %v2160, 0.70710677
        %v2680 = vmul.f32 %v1811, 0.70710677
        %v2681 = vmul.f32 %v1813, 0.70710677
        %v2682 = vmul.f32 %v2164, 0.70710677
        %v2683 = vmul.f32 %v2166, 0.70710677
        %v2684 = vmul.f32 %v1815, 0.70710677
        %v2685 = vmul.f32 %v1817, 0.70710677
        %v2686 = vmul.f32 %v2168, 0.70710677
        %v2687 = vmul.f32 %v2170, 0.70710677
        %v2688 = vmul.f32 %v1821, 0.70710677
        %v2689 = vmul.f32 %v1823, 0.70710677
        %v2690 = vmul.f32 %v2174, 0.70710677
        %v2691 = vmul.f32 %v2176, 0.70710677
        %v2692 = vmul.f32 %v1825, 0.70710677
        %v2693 = vmul.f32 %v1827, 0.70710677
        %v2694 = vmul.f32 %v2178, 0.70710677
        %v2695 = vmul.f32 %v2180, 0.70710677
        %v2696 = vmul.f32 %v1831, 0.70710677
        %v2697 = vmul.f32 %v1833, 0.70710677
        %v2698 = vmul.f32 %v2184, 0.70710677
        %v2699 = vmul.f32 %v2186, 0.70710677
        %v2700 = vmul.f32 %v1835, 0.70710677
        %v2701 = vmul.f32 %v1837, 0.70710677
        %v2702 = vmul.f32 %v2188, 0.70710677
        %v2703 = vmul.f32 %v2190, 0.70710677
        %v2704 = verf.f32.pop %v2448
        %v2705 = verf.f32.pop %v2449
        %v2706 = verf.f32.pop %v2450
        %v2707 = verf.f32.pop %v2451
        %v2708 = verf.f32.pop %v2452
        %v2709 = verf.f32.pop %v2453
        %v2710 = verf.f32.pop %v2454
        %v2711 = verf.f32.pop %v2455
        %v2712 = verf.f32.pop %v2456
        %v2713 = verf.f32.pop %v2457
        %v2714 = verf.f32.pop %v2458
        %v2715 = verf.f32.pop %v2459
        %v2716 = verf.f32.pop %v2460
        %v2717 = verf.f32.pop %v2461
        %v2718 = verf.f32.pop %v2462
        %v2719 = verf.f32.pop %v2463
        %v2720 = verf.f32.pop %v2464
        %v2721 = verf.f32.pop %v2465
        %v2722 = verf.f32.pop %v2466
        %v2723 = verf.f32.pop %v2467
        %v2724 = verf.f32.pop %v2468
        %v2725 = verf.f32.pop %v2469
        %v2726 = verf.f32.pop %v2470
        %v2727 = verf.f32.pop %v2471
        %v2728 = verf.f32.pop %v2472
        %v2729 = verf.f32.pop %v2473
        %v2730 = verf.f32.pop %v2474
        %v2731 = verf.f32.pop %v2475
        %v2732 = verf.f32.pop %v2476
        %v2733 = verf.f32.pop %v2477
        %v2734 = verf.f32.pop %v2478
        %v2735 = verf.f32.pop %v2479
        %v2736 = verf.f32.pop %v2480
        %v2737 = verf.f32.pop %v2481
        %v2738 = verf.f32.pop %v2482
        %v2739 = verf.f32.pop %v2483
        %v2740 = verf.f32.pop %v2484
        %v2741 = verf.f32.pop %v2485
        %v2742 = verf.f32.pop %v2486
        %v2743 = verf.f32.pop %v2487
        %v2744 = verf.f32.pop %v2488
        %v2745 = verf.f32.pop %v2489
        %v2746 = verf.f32.pop %v2490
        %v2747 = verf.f32.pop %v2491
        %v2748 = verf.f32.pop %v2492
        %v2749 = verf.f32.pop %v2493
        %v2750 = verf.f32.pop %v2494
        %v2751 = verf.f32.pop %v2495
        %v2752 = verf.f32.pop %v2496
        %v2753 = verf.f32.pop %v2497
        %v2754 = verf.f32.pop %v2498
        %v2755 = verf.f32.pop %v2499
        %v2756 = verf.f32.pop %v2500
        %v2757 = verf.f32.pop %v2501
        %v2758 = verf.f32.pop %v2502
        %v2759 = verf.f32.pop %v2503
        %v2760 = verf.f32.pop %v2504
        %v2761 = verf.f32.pop %v2505
        %v2762 = verf.f32.pop %v2506
        %v2763 = verf.f32.pop %v2507
        %v2764 = verf.f32.pop %v2508
        %v2765 = verf.f32.pop %v2509
        %v2766 = verf.f32.pop %v2510
        %v2767 = verf.f32.pop %v2511
        %v2768 = verf.f32.pop %v2512
        %v2769 = verf.f32.pop %v2513
        %v2770 = verf.f32.pop %v2514
        %v2771 = verf.f32.pop %v2515
        %v2772 = verf.f32.pop %v2516
        %v2773 = verf.f32.pop %v2517
        %v2774 = verf.f32.pop %v2518
        %v2775 = verf.f32.pop %v2519
        %v2776 = verf.f32.pop %v2520
        %v2777 = verf.f32.pop %v2521
        %v2778 = verf.f32.pop %v2522
        %v2779 = verf.f32.pop %v2523
        %v2780 = verf.f32.pop %v2524
        %v2781 = verf.f32.pop %v2525
        %v2782 = verf.f32.pop %v2526
        %v2783 = verf.f32.pop %v2527
        %v2784 = verf.f32.pop %v2528
        %v2785 = verf.f32.pop %v2529
        %v2786 = verf.f32.pop %v2530
        %v2787 = verf.f32.pop %v2531
        %v2788 = verf.f32.pop %v2532
        %v2789 = verf.f32.pop %v2533
        %v2790 = verf.f32.pop %v2534
        %v2791 = verf.f32.pop %v2535
        %v2792 = verf.f32.pop %v2536
        %v2793 = verf.f32.pop %v2537
        %v2794 = verf.f32.pop %v2538
        %v2795 = verf.f32.pop %v2539
        %v2796 = verf.f32.pop %v2540
        %v2797 = verf.f32.pop %v2541
        %v2798 = verf.f32.pop %v2542
        %v2799 = verf.f32.pop %v2543
        %v2800 = verf.f32.pop %v2544
        %v2801 = verf.f32.pop %v2545
        %v2802 = verf.f32.pop %v2546
        %v2803 = verf.f32.pop %v2547
        %v2804 = verf.f32.pop %v2548
        %v2805 = verf.f32.pop %v2549
        %v2806 = verf.f32.pop %v2550
        %v2807 = verf.f32.pop %v2551
        %v2808 = verf.f32.pop %v2552
        %v2809 = verf.f32.pop %v2553
        %v2810 = verf.f32.pop %v2554
        %v2811 = verf.f32.pop %v2555
        %v2812 = verf.f32.pop %v2556
        %v2813 = verf.f32.pop %v2557
        %v2814 = verf.f32.pop %v2558
        %v2815 = verf.f32.pop %v2559
        %v2816 = verf.f32.pop %v2560
        %v2817 = verf.f32.pop %v2561
        %v2818 = verf.f32.pop %v2562
        %v2819 = verf.f32.pop %v2563
        %v2820 = verf.f32.pop %v2564
        %v2821 = verf.f32.pop %v2565
        %v2822 = verf.f32.pop %v2566
        %v2823 = verf.f32.pop %v2567
        %v2824 = verf.f32.pop %v2568
        %v2825 = verf.f32.pop %v2569
        %v2826 = verf.f32.pop %v2570
        %v2827 = verf.f32.pop %v2571
        %v2828 = verf.f32.pop %v2572
        %v2829 = verf.f32.pop %v2573
        %v2830 = verf.f32.pop %v2574
        %v2831 = verf.f32.pop %v2575
        %v2832 = verf.f32.pop %v2576
        %v2833 = verf.f32.pop %v2577
        %v2834 = verf.f32.pop %v2578
        %v2835 = verf.f32.pop %v2579
        %v2836 = verf.f32.pop %v2580
        %v2837 = verf.f32.pop %v2581
        %v2838 = verf.f32.pop %v2582
        %v2839 = verf.f32.pop %v2583
        %v2840 = verf.f32.pop %v2584
        %v2841 = verf.f32.pop %v2585
        %v2842 = verf.f32.pop %v2586
        %v2843 = verf.f32.pop %v2587
        %v2844 = verf.f32.pop %v2588
        %v2845 = verf.f32.pop %v2589
        %v2846 = verf.f32.pop %v2590
        %v2847 = verf.f32.pop %v2591
        %v2848 = verf.f32.pop %v2592
        %v2849 = verf.f32.pop %v2593
        %v2850 = verf.f32.pop %v2594
        %v2851 = verf.f32.pop %v2595
        %v2852 = verf.f32.pop %v2596
        %v2853 = verf.f32.pop %v2597
        %v2854 = verf.f32.pop %v2598
        %v2855 = verf.f32.pop %v2599
        %v2856 = verf.f32.pop %v2600
        %v2857 = verf.f32.pop %v2601
        %v2858 = verf.f32.pop %v2602
        %v2859 = verf.f32.pop %v2603
        %v2860 = verf.f32.pop %v2604
        %v2861 = verf.f32.pop %v2605
        %v2862 = verf.f32.pop %v2606
        %v2863 = verf.f32.pop %v2607
        %v2864 = verf.f32.pop %v2608
        %v2865 = verf.f32.pop %v2609
        %v2866 = verf.f32.pop %v2610
        %v2867 = verf.f32.pop %v2611
        %v2868 = verf.f32.pop %v2612
        %v2869 = verf.f32.pop %v2613
        %v2870 = verf.f32.pop %v2614
        %v2871 = verf.f32.pop %v2615
        %v2872 = verf.f32.pop %v2616
        %v2873 = verf.f32.pop %v2617
        %v2874 = verf.f32.pop %v2618
        %v2875 = verf.f32.pop %v2619
        %v2876 = verf.f32.pop %v2620
        %v2877 = verf.f32.pop %v2621
        %v2878 = verf.f32.pop %v2622
        %v2879 = verf.f32.pop %v2623
        %v2880 = verf.f32.pop %v2624
        %v2881 = verf.f32.pop %v2625
        %v2882 = verf.f32.pop %v2626
        %v2883 = verf.f32.pop %v2627
        %v2884 = verf.f32.pop %v2628
        %v2885 = verf.f32.pop %v2629
        %v2886 = verf.f32.pop %v2630
        %v2887 = verf.f32.pop %v2631
        %v2888 = verf.f32.pop %v2632
        %v2889 = verf.f32.pop %v2633
        %v2890 = verf.f32.pop %v2634
        %v2891 = verf.f32.pop %v2635
        %v2892 = verf.f32.pop %v2636
        %v2893 = verf.f32.pop %v2637
        %v2894 = verf.f32.pop %v2638
        %v2895 = verf.f32.pop %v2639
        %v2896 = verf.f32.pop %v2640
        %v2897 = verf.f32.pop %v2641
        %v2898 = verf.f32.pop %v2642
        %v2899 = verf.f32.pop %v2643
        %v2900 = verf.f32.pop %v2644
        %v2901 = verf.f32.pop %v2645
        %v2902 = verf.f32.pop %v2646
        %v2903 = verf.f32.pop %v2647
        %v2904 = verf.f32.pop %v2648
        %v2905 = verf.f32.pop %v2649
        %v2906 = verf.f32.pop %v2650
        %v2907 = verf.f32.pop %v2651
        %v2908 = verf.f32.pop %v2652
        %v2909 = verf.f32.pop %v2653
        %v2910 = verf.f32.pop %v2654
        %v2911 = verf.f32.pop %v2655
        %v2912 = verf.f32.pop %v2656
        %v2913 = verf.f32.pop %v2657
        %v2914 = verf.f32.pop %v2658
        %v2915 = verf.f32.pop %v2659
        %v2916 = verf.f32.pop %v2660
        %v2917 = verf.f32.pop %v2661
        %v2918 = verf.f32.pop %v2662
        %v2919 = verf.f32.pop %v2663
        %v2920 = verf.f32.pop %v2664
        %v2921 = verf.f32.pop %v2665
        %v2922 = verf.f32.pop %v2666
        %v2923 = verf.f32.pop %v2667
        %v2924 = verf.f32.pop %v2668
        %v2925 = verf.f32.pop %v2669
        %v2926 = verf.f32.pop %v2670
        %v2927 = verf.f32.pop %v2671
        %v2928 = verf.f32.pop %v2672
        %v2929 = verf.f32.pop %v2673
        %v2930 = verf.f32.pop %v2674
        %v2931 = verf.f32.pop %v2675
        %v2932 = verf.f32.pop %v2676
        %v2933 = verf.f32.pop %v2677
        %v2934 = verf.f32.pop %v2678
        %v2935 = verf.f32.pop %v2679
        %v2936 = verf.f32.pop %v2680
        %v2937 = verf.f32.pop %v2681
        %v2938 = verf.f32.pop %v2682
        %v2939 = verf.f32.pop %v2683
        %v2940 = verf.f32.pop %v2684
        %v2941 = verf.f32.pop %v2685
        %v2942 = verf.f32.pop %v2686
        %v2943 = verf.f32.pop %v2687
        %v2944 = verf.f32.pop %v2688
        %v2945 = verf.f32.pop %v2689
        %v2946 = verf.f32.pop %v2690
        %v2947 = verf.f32.pop %v2691
        %v2948 = verf.f32.pop %v2692
        %v2949 = verf.f32.pop %v2693
        %v2950 = verf.f32.pop %v2694
        %v2951 = verf.f32.pop %v2695
        %v2952 = verf.f32.pop %v2696
        %v2953 = verf.f32.pop %v2697
        %v2954 = verf.f32.pop %v2698
        %v2955 = verf.f32.pop %v2699
        %v2956 = verf.f32.pop %v2700
        %v2957 = verf.f32.pop %v2701
        %v2958 = verf.f32.pop %v2702
        %v2959 = verf.f32.pop %v2703
        %v2960 = vadd.f32 %v2704, 1.0
        %v2961 = vadd.f32 %v2705, 1.0
        %v2962 = vadd.f32 %v2706, 1.0
        %v2963 = vadd.f32 %v2707, 1.0
        %v2964 = vadd.f32 %v2708, 1.0
        %v2965 = vadd.f32 %v2709, 1.0
        %v2966 = vadd.f32 %v2710, 1.0
        %v2967 = vadd.f32 %v2711, 1.0
        %v2968 = vadd.f32 %v2712, 1.0
        %v2969 = vadd.f32 %v2713, 1.0
        %v2970 = vadd.f32 %v2714, 1.0
        %v2971 = vadd.f32 %v2715, 1.0
        %v2972 = vadd.f32 %v2716, 1.0
        %v2973 = vadd.f32 %v2717, 1.0
        %v2974 = vadd.f32 %v2718, 1.0
        %v2975 = vadd.f32 %v2719, 1.0
        %v2976 = vadd.f32 %v2720, 1.0
        %v2977 = vadd.f32 %v2721, 1.0
        %v2978 = vadd.f32 %v2722, 1.0
        %v2979 = vadd.f32 %v2723, 1.0
        %v2980 = vadd.f32 %v2724, 1.0
        %v2981 = vadd.f32 %v2725, 1.0
        %v2982 = vadd.f32 %v2726, 1.0
        %v2983 = vadd.f32 %v2727, 1.0
        %v2984 = vadd.f32 %v2728, 1.0
        %v2985 = vadd.f32 %v2729, 1.0
        %v2986 = vadd.f32 %v2730, 1.0
        %v2987 = vadd.f32 %v2731, 1.0
        %v2988 = vadd.f32 %v2732, 1.0
        %v2989 = vadd.f32 %v2733, 1.0
        %v2990 = vadd.f32 %v2734, 1.0
        %v2991 = vadd.f32 %v2735, 1.0
        %v2992 = vadd.f32 %v2736, 1.0
        %v2993 = vadd.f32 %v2737, 1.0
        %v2994 = vadd.f32 %v2738, 1.0
        %v2995 = vadd.f32 %v2739, 1.0
        %v2996 = vadd.f32 %v2740, 1.0
        %v2997 = vadd.f32 %v2741, 1.0
        %v2998 = vadd.f32 %v2742, 1.0
        %v2999 = vadd.f32 %v2743, 1.0
        %v3000 = vadd.f32 %v2744, 1.0
        %v3001 = vadd.f32 %v2745, 1.0
        %v3002 = vadd.f32 %v2746, 1.0
        %v3003 = vadd.f32 %v2747, 1.0
        %v3004 = vadd.f32 %v2748, 1.0
        %v3005 = vadd.f32 %v2749, 1.0
        %v3006 = vadd.f32 %v2750, 1.0
        %v3007 = vadd.f32 %v2751, 1.0
        %v3008 = vadd.f32 %v2752, 1.0
        %v3009 = vadd.f32 %v2753, 1.0
        %v3010 = vadd.f32 %v2754, 1.0
        %v3011 = vadd.f32 %v2755, 1.0
        %v3012 = vadd.f32 %v2756, 1.0
        %v3013 = vadd.f32 %v2757, 1.0
        %v3014 = vadd.f32 %v2758, 1.0
        %v3015 = vadd.f32 %v2759, 1.0
        %v3016 = vadd.f32 %v2760, 1.0
        %v3017 = vadd.f32 %v2761, 1.0
        %v3018 = vadd.f32 %v2762, 1.0
        %v3019 = vadd.f32 %v2763, 1.0
        %v3020 = vadd.f32 %v2764, 1.0
        %v3021 = vadd.f32 %v2765, 1.0
        %v3022 = vadd.f32 %v2766, 1.0
        %v3023 = vadd.f32 %v2767, 1.0
        %v3024 = vadd.f32 %v2768, 1.0
        %v3025 = vadd.f32 %v2769, 1.0
        %v3026 = vadd.f32 %v2770, 1.0
        %v3027 = vadd.f32 %v2771, 1.0
        %v3028 = vadd.f32 %v2772, 1.0
        %v3029 = vadd.f32 %v2773, 1.0
        %v3030 = vadd.f32 %v2774, 1.0
        %v3031 = vadd.f32 %v2775, 1.0
        %v3032 = vadd.f32 %v2776, 1.0
        %v3033 = vadd.f32 %v2777, 1.0
        %v3034 = vadd.f32 %v2778, 1.0
        %v3035 = vadd.f32 %v2779, 1.0
        %v3036 = vadd.f32 %v2780, 1.0
        %v3037 = vadd.f32 %v2781, 1.0
        %v3038 = vadd.f32 %v2782, 1.0
        %v3039 = vadd.f32 %v2783, 1.0
        %v3040 = vadd.f32 %v2784, 1.0
        %v3041 = vadd.f32 %v2785, 1.0
        %v3042 = vadd.f32 %v2786, 1.0
        %v3043 = vadd.f32 %v2787, 1.0
        %v3044 = vadd.f32 %v2788, 1.0
        %v3045 = vadd.f32 %v2789, 1.0
        %v3046 = vadd.f32 %v2790, 1.0
        %v3047 = vadd.f32 %v2791, 1.0
        %v3048 = vadd.f32 %v2792, 1.0
        %v3049 = vadd.f32 %v2793, 1.0
        %v3050 = vadd.f32 %v2794, 1.0
        %v3051 = vadd.f32 %v2795, 1.0
        %v3052 = vadd.f32 %v2796, 1.0
        %v3053 = vadd.f32 %v2797, 1.0
        %v3054 = vadd.f32 %v2798, 1.0
        %v3055 = vadd.f32 %v2799, 1.0
        %v3056 = vadd.f32 %v2800, 1.0
        %v3057 = vadd.f32 %v2801, 1.0
        %v3058 = vadd.f32 %v2802, 1.0
        %v3059 = vadd.f32 %v2803, 1.0
        %v3060 = vadd.f32 %v2804, 1.0
        %v3061 = vadd.f32 %v2805, 1.0
        %v3062 = vadd.f32 %v2806, 1.0
        %v3063 = vadd.f32 %v2807, 1.0
        %v3064 = vadd.f32 %v2808, 1.0
        %v3065 = vadd.f32 %v2809, 1.0
        %v3066 = vadd.f32 %v2810, 1.0
        %v3067 = vadd.f32 %v2811, 1.0
        %v3068 = vadd.f32 %v2812, 1.0
        %v3069 = vadd.f32 %v2813, 1.0
        %v3070 = vadd.f32 %v2814, 1.0
        %v3071 = vadd.f32 %v2815, 1.0
        %v3072 = vadd.f32 %v2816, 1.0
        %v3073 = vadd.f32 %v2817, 1.0
        %v3074 = vadd.f32 %v2818, 1.0
        %v3075 = vadd.f32 %v2819, 1.0
        %v3076 = vadd.f32 %v2820, 1.0
        %v3077 = vadd.f32 %v2821, 1.0
        %v3078 = vadd.f32 %v2822, 1.0
        %v3079 = vadd.f32 %v2823, 1.0
        %v3080 = vadd.f32 %v2824, 1.0
        %v3081 = vadd.f32 %v2825, 1.0
        %v3082 = vadd.f32 %v2826, 1.0
        %v3083 = vadd.f32 %v2827, 1.0
        %v3084 = vadd.f32 %v2828, 1.0
        %v3085 = vadd.f32 %v2829, 1.0
        %v3086 = vadd.f32 %v2830, 1.0
        %v3087 = vadd.f32 %v2831, 1.0
        %v3088 = vadd.f32 %v2832, 1.0
        %v3089 = vadd.f32 %v2833, 1.0
        %v3090 = vadd.f32 %v2834, 1.0
        %v3091 = vadd.f32 %v2835, 1.0
        %v3092 = vadd.f32 %v2836, 1.0
        %v3093 = vadd.f32 %v2837, 1.0
        %v3094 = vadd.f32 %v2838, 1.0
        %v3095 = vadd.f32 %v2839, 1.0
        %v3096 = vadd.f32 %v2840, 1.0
        %v3097 = vadd.f32 %v2841, 1.0
        %v3098 = vadd.f32 %v2842, 1.0
        %v3099 = vadd.f32 %v2843, 1.0
        %v3100 = vadd.f32 %v2844, 1.0
        %v3101 = vadd.f32 %v2845, 1.0
        %v3102 = vadd.f32 %v2846, 1.0
        %v3103 = vadd.f32 %v2847, 1.0
        %v3104 = vadd.f32 %v2848, 1.0
        %v3105 = vadd.f32 %v2849, 1.0
        %v3106 = vadd.f32 %v2850, 1.0
        %v3107 = vadd.f32 %v2851, 1.0
        %v3108 = vadd.f32 %v2852, 1.0
        %v3109 = vadd.f32 %v2853, 1.0
        %v3110 = vadd.f32 %v2854, 1.0
        %v3111 = vadd.f32 %v2855, 1.0
        %v3112 = vadd.f32 %v2856, 1.0
        %v3113 = vadd.f32 %v2857, 1.0
        %v3114 = vadd.f32 %v2858, 1.0
        %v3115 = vadd.f32 %v2859, 1.0
        %v3116 = vadd.f32 %v2860, 1.0
        %v3117 = vadd.f32 %v2861, 1.0
        %v3118 = vadd.f32 %v2862, 1.0
        %v3119 = vadd.f32 %v2863, 1.0
        %v3120 = vadd.f32 %v2864, 1.0
        %v3121 = vadd.f32 %v2865, 1.0
        %v3122 = vadd.f32 %v2866, 1.0
        %v3123 = vadd.f32 %v2867, 1.0
        %v3124 = vadd.f32 %v2868, 1.0
        %v3125 = vadd.f32 %v2869, 1.0
        %v3126 = vadd.f32 %v2870, 1.0
        %v3127 = vadd.f32 %v2871, 1.0
        %v3128 = vadd.f32 %v2872, 1.0
        %v3129 = vadd.f32 %v2873, 1.0
        %v3130 = vadd.f32 %v2874, 1.0
        %v3131 = vadd.f32 %v2875, 1.0
        %v3132 = vadd.f32 %v2876, 1.0
        %v3133 = vadd.f32 %v2877, 1.0
        %v3134 = vadd.f32 %v2878, 1.0
        %v3135 = vadd.f32 %v2879, 1.0
        %v3136 = vadd.f32 %v2880, 1.0
        %v3137 = vadd.f32 %v2881, 1.0
        %v3138 = vadd.f32 %v2882, 1.0
        %v3139 = vadd.f32 %v2883, 1.0
        %v3140 = vadd.f32 %v2884, 1.0
        %v3141 = vadd.f32 %v2885, 1.0
        %v3142 = vadd.f32 %v2886, 1.0
        %v3143 = vadd.f32 %v2887, 1.0
        %v3144 = vadd.f32 %v2888, 1.0
        %v3145 = vadd.f32 %v2889, 1.0
        %v3146 = vadd.f32 %v2890, 1.0
        %v3147 = vadd.f32 %v2891, 1.0
        %v3148 = vadd.f32 %v2892, 1.0
        %v3149 = vadd.f32 %v2893, 1.0
        %v3150 = vadd.f32 %v2894, 1.0
        %v3151 = vadd.f32 %v2895, 1.0
        %v3152 = vadd.f32 %v2896, 1.0
        %v3153 = vadd.f32 %v2897, 1.0
        %v3154 = vadd.f32 %v2898, 1.0
        %v3155 = vadd.f32 %v2899, 1.0
        %v3156 = vadd.f32 %v2900, 1.0
        %v3157 = vadd.f32 %v2901, 1.0
        %v3158 = vadd.f32 %v2902, 1.0
        %v3159 = vadd.f32 %v2903, 1.0
        %v3160 = vadd.f32 %v2904, 1.0
        %v3161 = vadd.f32 %v2905, 1.0
        %v3162 = vadd.f32 %v2906, 1.0
        %v3163 = vadd.f32 %v2907, 1.0
        %v3164 = vadd.f32 %v2908, 1.0
        %v3165 = vadd.f32 %v2909, 1.0
        %v3166 = vadd.f32 %v2910, 1.0
        %v3167 = vadd.f32 %v2911, 1.0
        %v3168 = vadd.f32 %v2912, 1.0
        %v3169 = vadd.f32 %v2913, 1.0
        %v3170 = vadd.f32 %v2914, 1.0
        %v3171 = vadd.f32 %v2915, 1.0
        %v3172 = vadd.f32 %v2916, 1.0
        %v3173 = vadd.f32 %v2917, 1.0
        %v3174 = vadd.f32 %v2918, 1.0
        %v3175 = vadd.f32 %v2919, 1.0
        %v3176 = vadd.f32 %v2920, 1.0
        %v3177 = vadd.f32 %v2921, 1.0
        %v3178 = vadd.f32 %v2922, 1.0
        %v3179 = vadd.f32 %v2923, 1.0
        %v3180 = vadd.f32 %v2924, 1.0
        %v3181 = vadd.f32 %v2925, 1.0
        %v3182 = vadd.f32 %v2926, 1.0
        %v3183 = vadd.f32 %v2927, 1.0
        %v3184 = vadd.f32 %v2928, 1.0
        %v3185 = vadd.f32 %v2929, 1.0
        %v3186 = vadd.f32 %v2930, 1.0
        %v3187 = vadd.f32 %v2931, 1.0
        %v3188 = vadd.f32 %v2932, 1.0
        %v3189 = vadd.f32 %v2933, 1.0
        %v3190 = vadd.f32 %v2934, 1.0
        %v3191 = vadd.f32 %v2935, 1.0
        %v3192 = vadd.f32 %v2936, 1.0
        %v3193 = vadd.f32 %v2937, 1.0
        %v3194 = vadd.f32 %v2938, 1.0
        %v3195 = vadd.f32 %v2939, 1.0
        %v3196 = vadd.f32 %v2940, 1.0
        %v3197 = vadd.f32 %v2941, 1.0
        %v3198 = vadd.f32 %v2942, 1.0
        %v3199 = vadd.f32 %v2943, 1.0
        %v3200 = vadd.f32 %v2944, 1.0
        %v3201 = vadd.f32 %v2945, 1.0
        %v3202 = vadd.f32 %v2946, 1.0
        %v3203 = vadd.f32 %v2947, 1.0
        %v3204 = vadd.f32 %v2948, 1.0
        %v3205 = vadd.f32 %v2949, 1.0
        %v3206 = vadd.f32 %v2950, 1.0
        %v3207 = vadd.f32 %v2951, 1.0
        %v3208 = vadd.f32 %v2952, 1.0
        %v3209 = vadd.f32 %v2953, 1.0
        %v3210 = vadd.f32 %v2954, 1.0
        %v3211 = vadd.f32 %v2955, 1.0
        %v3212 = vadd.f32 %v2956, 1.0
        %v3213 = vadd.f32 %v2957, 1.0
        %v3214 = vadd.f32 %v2958, 1.0
        %v3215 = vadd.f32 %v2959, 1.0
        %v3216 = vmul.f32 %v2192, %v2960
        %v3217 = vmul.f32 %v2193, %v2961
        %v3218 = vmul.f32 %v2194, %v2962
        %v3219 = vmul.f32 %v2195, %v2963
        %v3220 = vmul.f32 %v2196, %v2964
        %v3221 = vmul.f32 %v2197, %v2965
        %v3222 = vmul.f32 %v2198, %v2966
        %v3223 = vmul.f32 %v2199, %v2967
        %v3224 = vmul.f32 %v2200, %v2968
        %v3225 = vmul.f32 %v2201, %v2969
        %v3226 = vmul.f32 %v2202, %v2970
        %v3227 = vmul.f32 %v2203, %v2971
        %v3228 = vmul.f32 %v2204, %v2972
        %v3229 = vmul.f32 %v2205, %v2973
        %v3230 = vmul.f32 %v2206, %v2974
        %v3231 = vmul.f32 %v2207, %v2975
        %v3232 = vmul.f32 %v2208, %v2976
        %v3233 = vmul.f32 %v2209, %v2977
        %v3234 = vmul.f32 %v2210, %v2978
        %v3235 = vmul.f32 %v2211, %v2979
        %v3236 = vmul.f32 %v2212, %v2980
        %v3237 = vmul.f32 %v2213, %v2981
        %v3238 = vmul.f32 %v2214, %v2982
        %v3239 = vmul.f32 %v2215, %v2983
        %v3240 = vmul.f32 %v2216, %v2984
        %v3241 = vmul.f32 %v2217, %v2985
        %v3242 = vmul.f32 %v2218, %v2986
        %v3243 = vmul.f32 %v2219, %v2987
        %v3244 = vmul.f32 %v2220, %v2988
        %v3245 = vmul.f32 %v2221, %v2989
        %v3246 = vmul.f32 %v2222, %v2990
        %v3247 = vmul.f32 %v2223, %v2991
        %v3248 = vmul.f32 %v2224, %v2992
        %v3249 = vmul.f32 %v2225, %v2993
        %v3250 = vmul.f32 %v2226, %v2994
        %v3251 = vmul.f32 %v2227, %v2995
        %v3252 = vmul.f32 %v2228, %v2996
        %v3253 = vmul.f32 %v2229, %v2997
        %v3254 = vmul.f32 %v2230, %v2998
        %v3255 = vmul.f32 %v2231, %v2999
        %v3256 = vmul.f32 %v2232, %v3000
        %v3257 = vmul.f32 %v2233, %v3001
        %v3258 = vmul.f32 %v2234, %v3002
        %v3259 = vmul.f32 %v2235, %v3003
        %v3260 = vmul.f32 %v2236, %v3004
        %v3261 = vmul.f32 %v2237, %v3005
        %v3262 = vmul.f32 %v2238, %v3006
        %v3263 = vmul.f32 %v2239, %v3007
        %v3264 = vmul.f32 %v2240, %v3008
        %v3265 = vmul.f32 %v2241, %v3009
        %v3266 = vmul.f32 %v2242, %v3010
        %v3267 = vmul.f32 %v2243, %v3011
        %v3268 = vmul.f32 %v2244, %v3012
        %v3269 = vmul.f32 %v2245, %v3013
        %v3270 = vmul.f32 %v2246, %v3014
        %v3271 = vmul.f32 %v2247, %v3015
        %v3272 = vmul.f32 %v2248, %v3016
        %v3273 = vmul.f32 %v2249, %v3017
        %v3274 = vmul.f32 %v2250, %v3018
        %v3275 = vmul.f32 %v2251, %v3019
        %v3276 = vmul.f32 %v2252, %v3020
        %v3277 = vmul.f32 %v2253, %v3021
        %v3278 = vmul.f32 %v2254, %v3022
        %v3279 = vmul.f32 %v2255, %v3023
        %v3280 = vmul.f32 %v2256, %v3024
        %v3281 = vmul.f32 %v2257, %v3025
        %v3282 = vmul.f32 %v2258, %v3026
        %v3283 = vmul.f32 %v2259, %v3027
        %v3284 = vmul.f32 %v2260, %v3028
        %v3285 = vmul.f32 %v2261, %v3029
        %v3286 = vmul.f32 %v2262, %v3030
        %v3287 = vmul.f32 %v2263, %v3031
        %v3288 = vmul.f32 %v2264, %v3032
        %v3289 = vmul.f32 %v2265, %v3033
        %v3290 = vmul.f32 %v2266, %v3034
        %v3291 = vmul.f32 %v2267, %v3035
        %v3292 = vmul.f32 %v2268, %v3036
        %v3293 = vmul.f32 %v2269, %v3037
        %v3294 = vmul.f32 %v2270, %v3038
        %v3295 = vmul.f32 %v2271, %v3039
        %v3296 = vmul.f32 %v2272, %v3040
        %v3297 = vmul.f32 %v2273, %v3041
        %v3298 = vmul.f32 %v2274, %v3042
        %v3299 = vmul.f32 %v2275, %v3043
        %v3300 = vmul.f32 %v2276, %v3044
        %v3301 = vmul.f32 %v2277, %v3045
        %v3302 = vmul.f32 %v2278, %v3046
        %v3303 = vmul.f32 %v2279, %v3047
        %v3304 = vmul.f32 %v2280, %v3048
        %v3305 = vmul.f32 %v2281, %v3049
        %v3306 = vmul.f32 %v2282, %v3050
        %v3307 = vmul.f32 %v2283, %v3051
        %v3308 = vmul.f32 %v2284, %v3052
        %v3309 = vmul.f32 %v2285, %v3053
        %v3310 = vmul.f32 %v2286, %v3054
        %v3311 = vmul.f32 %v2287, %v3055
        %v3312 = vmul.f32 %v2288, %v3056
        %v3313 = vmul.f32 %v2289, %v3057
        %v3314 = vmul.f32 %v2290, %v3058
        %v3315 = vmul.f32 %v2291, %v3059
        %v3316 = vmul.f32 %v2292, %v3060
        %v3317 = vmul.f32 %v2293, %v3061
        %v3318 = vmul.f32 %v2294, %v3062
        %v3319 = vmul.f32 %v2295, %v3063
        %v3320 = vmul.f32 %v2296, %v3064
        %v3321 = vmul.f32 %v2297, %v3065
        %v3322 = vmul.f32 %v2298, %v3066
        %v3323 = vmul.f32 %v2299, %v3067
        %v3324 = vmul.f32 %v2300, %v3068
        %v3325 = vmul.f32 %v2301, %v3069
        %v3326 = vmul.f32 %v2302, %v3070
        %v3327 = vmul.f32 %v2303, %v3071
        %v3328 = vmul.f32 %v2304, %v3072
        %v3329 = vmul.f32 %v2305, %v3073
        %v3330 = vmul.f32 %v2306, %v3074
        %v3331 = vmul.f32 %v2307, %v3075
        %v3332 = vmul.f32 %v2308, %v3076
        %v3333 = vmul.f32 %v2309, %v3077
        %v3334 = vmul.f32 %v2310, %v3078
        %v3335 = vmul.f32 %v2311, %v3079
        %v3336 = vmul.f32 %v2312, %v3080
        %v3337 = vmul.f32 %v2313, %v3081
        %v3338 = vmul.f32 %v2314, %v3082
        %v3339 = vmul.f32 %v2315, %v3083
        %v3340 = vmul.f32 %v2316, %v3084
        %v3341 = vmul.f32 %v2317, %v3085
        %v3342 = vmul.f32 %v2318, %v3086
        %v3343 = vmul.f32 %v2319, %v3087
        %v3344 = vmul.f32 %v2320, %v3088
        %v3345 = vmul.f32 %v2321, %v3089
        %v3346 = vmul.f32 %v2322, %v3090
        %v3347 = vmul.f32 %v2323, %v3091
        %v3348 = vmul.f32 %v2324, %v3092
        %v3349 = vmul.f32 %v2325, %v3093
        %v3350 = vmul.f32 %v2326, %v3094
        %v3351 = vmul.f32 %v2327, %v3095
        %v3352 = vmul.f32 %v2328, %v3096
        %v3353 = vmul.f32 %v2329, %v3097
        %v3354 = vmul.f32 %v2330, %v3098
        %v3355 = vmul.f32 %v2331, %v3099
        %v3356 = vmul.f32 %v2332, %v3100
        %v3357 = vmul.f32 %v2333, %v3101
        %v3358 = vmul.f32 %v2334, %v3102
        %v3359 = vmul.f32 %v2335, %v3103
        %v3360 = vmul.f32 %v2336, %v3104
        %v3361 = vmul.f32 %v2337, %v3105
        %v3362 = vmul.f32 %v2338, %v3106
        %v3363 = vmul.f32 %v2339, %v3107
        %v3364 = vmul.f32 %v2340, %v3108
        %v3365 = vmul.f32 %v2341, %v3109
        %v3366 = vmul.f32 %v2342, %v3110
        %v3367 = vmul.f32 %v2343, %v3111
        %v3368 = vmul.f32 %v2344, %v3112
        %v3369 = vmul.f32 %v2345, %v3113
        %v3370 = vmul.f32 %v2346, %v3114
        %v3371 = vmul.f32 %v2347, %v3115
        %v3372 = vmul.f32 %v2348, %v3116
        %v3373 = vmul.f32 %v2349, %v3117
        %v3374 = vmul.f32 %v2350, %v3118
        %v3375 = vmul.f32 %v2351, %v3119
        %v3376 = vmul.f32 %v2352, %v3120
        %v3377 = vmul.f32 %v2353, %v3121
        %v3378 = vmul.f32 %v2354, %v3122
        %v3379 = vmul.f32 %v2355, %v3123
        %v3380 = vmul.f32 %v2356, %v3124
        %v3381 = vmul.f32 %v2357, %v3125
        %v3382 = vmul.f32 %v2358, %v3126
        %v3383 = vmul.f32 %v2359, %v3127
        %v3384 = vmul.f32 %v2360, %v3128
        %v3385 = vmul.f32 %v2361, %v3129
        %v3386 = vmul.f32 %v2362, %v3130
        %v3387 = vmul.f32 %v2363, %v3131
        %v3388 = vmul.f32 %v2364, %v3132
        %v3389 = vmul.f32 %v2365, %v3133
        %v3390 = vmul.f32 %v2366, %v3134
        %v3391 = vmul.f32 %v2367, %v3135
        %v3392 = vmul.f32 %v2368, %v3136
        %v3393 = vmul.f32 %v2369, %v3137
        %v3394 = vmul.f32 %v2370, %v3138
        %v3395 = vmul.f32 %v2371, %v3139
        %v3396 = vmul.f32 %v2372, %v3140
        %v3397 = vmul.f32 %v2373, %v3141
        %v3398 = vmul.f32 %v2374, %v3142
        %v3399 = vmul.f32 %v2375, %v3143
        %v3400 = vmul.f32 %v2376, %v3144
        %v3401 = vmul.f32 %v2377, %v3145
        %v3402 = vmul.f32 %v2378, %v3146
        %v3403 = vmul.f32 %v2379, %v3147
        %v3404 = vmul.f32 %v2380, %v3148
        %v3405 = vmul.f32 %v2381, %v3149
        %v3406 = vmul.f32 %v2382, %v3150
        %v3407 = vmul.f32 %v2383, %v3151
        %v3408 = vmul.f32 %v2384, %v3152
        %v3409 = vmul.f32 %v2385, %v3153
        %v3410 = vmul.f32 %v2386, %v3154
        %v3411 = vmul.f32 %v2387, %v3155
        %v3412 = vmul.f32 %v2388, %v3156
        %v3413 = vmul.f32 %v2389, %v3157
        %v3414 = vmul.f32 %v2390, %v3158
        %v3415 = vmul.f32 %v2391, %v3159
        %v3416 = vmul.f32 %v2392, %v3160
        %v3417 = vmul.f32 %v2393, %v3161
        %v3418 = vmul.f32 %v2394, %v3162
        %v3419 = vmul.f32 %v2395, %v3163
        %v3420 = vmul.f32 %v2396, %v3164
        %v3421 = vmul.f32 %v2397, %v3165
        %v3422 = vmul.f32 %v2398, %v3166
        %v3423 = vmul.f32 %v2399, %v3167
        %v3424 = vmul.f32 %v2400, %v3168
        %v3425 = vmul.f32 %v2401, %v3169
        %v3426 = vmul.f32 %v2402, %v3170
        %v3427 = vmul.f32 %v2403, %v3171
        %v3428 = vmul.f32 %v2404, %v3172
        %v3429 = vmul.f32 %v2405, %v3173
        %v3430 = vmul.f32 %v2406, %v3174
        %v3431 = vmul.f32 %v2407, %v3175
        %v3432 = vmul.f32 %v2408, %v3176
        %v3433 = vmul.f32 %v2409, %v3177
        %v3434 = vmul.f32 %v2410, %v3178
        %v3435 = vmul.f32 %v2411, %v3179
        %v3436 = vmul.f32 %v2412, %v3180
        %v3437 = vmul.f32 %v2413, %v3181
        %v3438 = vmul.f32 %v2414, %v3182
        %v3439 = vmul.f32 %v2415, %v3183
        %v3440 = vmul.f32 %v2416, %v3184
        %v3441 = vmul.f32 %v2417, %v3185
        %v3442 = vmul.f32 %v2418, %v3186
        %v3443 = vmul.f32 %v2419, %v3187
        %v3444 = vmul.f32 %v2420, %v3188
        %v3445 = vmul.f32 %v2421, %v3189
        %v3446 = vmul.f32 %v2422, %v3190
        %v3447 = vmul.f32 %v2423, %v3191
        %v3448 = vmul.f32 %v2424, %v3192
        %v3449 = vmul.f32 %v2425, %v3193
        %v3450 = vmul.f32 %v2426, %v3194
        %v3451 = vmul.f32 %v2427, %v3195
        %v3452 = vmul.f32 %v2428, %v3196
        %v3453 = vmul.f32 %v2429, %v3197
        %v3454 = vmul.f32 %v2430, %v3198
        %v3455 = vmul.f32 %v2431, %v3199
        %v3456 = vmul.f32 %v2432, %v3200
        %v3457 = vmul.f32 %v2433, %v3201
        %v3458 = vmul.f32 %v2434, %v3202
        %v3459 = vmul.f32 %v2435, %v3203
        %v3460 = vmul.f32 %v2436, %v3204
        %v3461 = vmul.f32 %v2437, %v3205
        %v3462 = vmul.f32 %v2438, %v3206
        %v3463 = vmul.f32 %v2439, %v3207
        %v3464 = vmul.f32 %v2440, %v3208
        %v3465 = vmul.f32 %v2441, %v3209
        %v3466 = vmul.f32 %v2442, %v3210
        %v3467 = vmul.f32 %v2443, %v3211
        %v3468 = vmul.f32 %v2444, %v3212
        %v3469 = vmul.f32 %v2445, %v3213
        %v3470 = vmul.f32 %v2446, %v3214
        %v3471 = vmul.f32 %v2447, %v3215
        %v3472 = vpack.c.bf16 %v3220, %v3216
        %v3473 = vpack.c.bf16 %v3221, %v3217
        %v3474 = vpack.c.bf16 %v3222, %v3218
        %v3475 = vpack.c.bf16 %v3223, %v3219
        %v3476 = vpack.c.bf16 %v3228, %v3224
        %v3477 = vpack.c.bf16 %v3229, %v3225
        %v3478 = vpack.c.bf16 %v3230, %v3226
        %v3479 = vpack.c.bf16 %v3231, %v3227
        %v3480 = vpack.c.bf16 %v3236, %v3232
        %v3481 = vpack.c.bf16 %v3237, %v3233
        %v3482 = vpack.c.bf16 %v3238, %v3234
        %v3483 = vpack.c.bf16 %v3239, %v3235
        %v3484 = vpack.c.bf16 %v3244, %v3240
        %v3485 = vpack.c.bf16 %v3245, %v3241
        %v3486 = vpack.c.bf16 %v3246, %v3242
        %v3487 = vpack.c.bf16 %v3247, %v3243
        %v3488 = vpack.c.bf16 %v3252, %v3248
        %v3489 = vpack.c.bf16 %v3253, %v3249
        %v3490 = vpack.c.bf16 %v3254, %v3250
        %v3491 = vpack.c.bf16 %v3255, %v3251
        %v3492 = vpack.c.bf16 %v3260, %v3256
        %v3493 = vpack.c.bf16 %v3261, %v3257
        %v3494 = vpack.c.bf16 %v3262, %v3258
        %v3495 = vpack.c.bf16 %v3263, %v3259
        %v3496 = vpack.c.bf16 %v3268, %v3264
        %v3497 = vpack.c.bf16 %v3269, %v3265
        %v3498 = vpack.c.bf16 %v3270, %v3266
        %v3499 = vpack.c.bf16 %v3271, %v3267
        %v3500 = vpack.c.bf16 %v3276, %v3272
        %v3501 = vpack.c.bf16 %v3277, %v3273
        %v3502 = vpack.c.bf16 %v3278, %v3274
        %v3503 = vpack.c.bf16 %v3279, %v3275
        %v3504 = vpack.c.bf16 %v3284, %v3280
        %v3505 = vpack.c.bf16 %v3285, %v3281
        %v3506 = vpack.c.bf16 %v3286, %v3282
        %v3507 = vpack.c.bf16 %v3287, %v3283
        %v3508 = vpack.c.bf16 %v3292, %v3288
        %v3509 = vpack.c.bf16 %v3293, %v3289
        %v3510 = vpack.c.bf16 %v3294, %v3290
        %v3511 = vpack.c.bf16 %v3295, %v3291
        %v3512 = vpack.c.bf16 %v3300, %v3296
        %v3513 = vpack.c.bf16 %v3301, %v3297
        %v3514 = vpack.c.bf16 %v3302, %v3298
        %v3515 = vpack.c.bf16 %v3303, %v3299
        %v3516 = vpack.c.bf16 %v3308, %v3304
        %v3517 = vpack.c.bf16 %v3309, %v3305
        %v3518 = vpack.c.bf16 %v3310, %v3306
        %v3519 = vpack.c.bf16 %v3311, %v3307
        %v3520 = vpack.c.bf16 %v3316, %v3312
        %v3521 = vpack.c.bf16 %v3317, %v3313
        %v3522 = vpack.c.bf16 %v3318, %v3314
        %v3523 = vpack.c.bf16 %v3319, %v3315
        %v3524 = vpack.c.bf16 %v3324, %v3320
        %v3525 = vpack.c.bf16 %v3325, %v3321
        %v3526 = vpack.c.bf16 %v3326, %v3322
        %v3527 = vpack.c.bf16 %v3327, %v3323
        %v3528 = vpack.c.bf16 %v3332, %v3328
        %v3529 = vpack.c.bf16 %v3333, %v3329
        %v3530 = vpack.c.bf16 %v3334, %v3330
        %v3531 = vpack.c.bf16 %v3335, %v3331
        %v3532 = vpack.c.bf16 %v3340, %v3336
        %v3533 = vpack.c.bf16 %v3341, %v3337
        %v3534 = vpack.c.bf16 %v3342, %v3338
        %v3535 = vpack.c.bf16 %v3343, %v3339
        %v3536 = vpack.c.bf16 %v3348, %v3344
        %v3537 = vpack.c.bf16 %v3349, %v3345
        %v3538 = vpack.c.bf16 %v3350, %v3346
        %v3539 = vpack.c.bf16 %v3351, %v3347
        %v3540 = vpack.c.bf16 %v3356, %v3352
        %v3541 = vpack.c.bf16 %v3357, %v3353
        %v3542 = vpack.c.bf16 %v3358, %v3354
        %v3543 = vpack.c.bf16 %v3359, %v3355
        %v3544 = vpack.c.bf16 %v3364, %v3360
        %v3545 = vpack.c.bf16 %v3365, %v3361
        %v3546 = vpack.c.bf16 %v3366, %v3362
        %v3547 = vpack.c.bf16 %v3367, %v3363
        %v3548 = vpack.c.bf16 %v3372, %v3368
        %v3549 = vpack.c.bf16 %v3373, %v3369
        %v3550 = vpack.c.bf16 %v3374, %v3370
        %v3551 = vpack.c.bf16 %v3375, %v3371
        %v3552 = vpack.c.bf16 %v3380, %v3376
        %v3553 = vpack.c.bf16 %v3381, %v3377
        %v3554 = vpack.c.bf16 %v3382, %v3378
        %v3555 = vpack.c.bf16 %v3383, %v3379
        %v3556 = vpack.c.bf16 %v3388, %v3384
        %v3557 = vpack.c.bf16 %v3389, %v3385
        %v3558 = vpack.c.bf16 %v3390, %v3386
        %v3559 = vpack.c.bf16 %v3391, %v3387
        %v3560 = vpack.c.bf16 %v3396, %v3392
        %v3561 = vpack.c.bf16 %v3397, %v3393
        %v3562 = vpack.c.bf16 %v3398, %v3394
        %v3563 = vpack.c.bf16 %v3399, %v3395
        %v3564 = vpack.c.bf16 %v3404, %v3400
        %v3565 = vpack.c.bf16 %v3405, %v3401
        %v3566 = vpack.c.bf16 %v3406, %v3402
        %v3567 = vpack.c.bf16 %v3407, %v3403
        %v3568 = vpack.c.bf16 %v3412, %v3408
        %v3569 = vpack.c.bf16 %v3413, %v3409
        %v3570 = vpack.c.bf16 %v3414, %v3410
        %v3571 = vpack.c.bf16 %v3415, %v3411
        %v3572 = vpack.c.bf16 %v3420, %v3416
        %v3573 = vpack.c.bf16 %v3421, %v3417
        %v3574 = vpack.c.bf16 %v3422, %v3418
        %v3575 = vpack.c.bf16 %v3423, %v3419
        %v3576 = vpack.c.bf16 %v3428, %v3424
        %v3577 = vpack.c.bf16 %v3429, %v3425
        %v3578 = vpack.c.bf16 %v3430, %v3426
        %v3579 = vpack.c.bf16 %v3431, %v3427
        %v3580 = vpack.c.bf16 %v3436, %v3432
        %v3581 = vpack.c.bf16 %v3437, %v3433
        %v3582 = vpack.c.bf16 %v3438, %v3434
        %v3583 = vpack.c.bf16 %v3439, %v3435
        %v3584 = vpack.c.bf16 %v3444, %v3440
        %v3585 = vpack.c.bf16 %v3445, %v3441
        %v3586 = vpack.c.bf16 %v3446, %v3442
        %v3587 = vpack.c.bf16 %v3447, %v3443
        %v3588 = vpack.c.bf16 %v3452, %v3448
        %v3589 = vpack.c.bf16 %v3453, %v3449
        %v3590 = vpack.c.bf16 %v3454, %v3450
        %v3591 = vpack.c.bf16 %v3455, %v3451
        %v3592 = vpack.c.bf16 %v3460, %v3456
        %v3593 = vpack.c.bf16 %v3461, %v3457
        %v3594 = vpack.c.bf16 %v3462, %v3458
        %v3595 = vpack.c.bf16 %v3463, %v3459
        %v3596 = vpack.c.bf16 %v3468, %v3464
        %v3597 = vpack.c.bf16 %v3469, %v3465
        %v3598 = vpack.c.bf16 %v3470, %v3466
        %v3599 = vpack.c.bf16 %v3471, %v3467
        %v3600 = vld [vmem:[#allocation7] sm:$0xf]
        %v3601 = vld [vmem:[#allocation7 + $0x4] sm:$0xf]
        %v3602 = vld [vmem:[#allocation7 + $0x8] sm:$0xf]
        %v3603 = vld [vmem:[#allocation7 + $0xc] sm:$0xf]
        %v3604 = vld [vmem:[#allocation7 + $0x10] sm:$0xf]
        %v3605 = vld [vmem:[#allocation7 + $0x14] sm:$0xf]
        %v3606 = vld [vmem:[#allocation7 + $0x18] sm:$0xf]
        %v3607 = vld [vmem:[#allocation7 + $0x1c] sm:$0xf]
        %v3608 = vld [vmem:[#allocation7 + $0x20] sm:$0xf]
        %v3609 = vld [vmem:[#allocation7 + $0x24] sm:$0xf]
        %v3610 = vld [vmem:[#allocation7 + $0x28] sm:$0xf]
        %v3611 = vld [vmem:[#allocation7 + $0x2c] sm:$0xf]
        %v3612 = vld [vmem:[#allocation7 + $0x30] sm:$0xf]
        %v3613 = vld [vmem:[#allocation7 + $0x34] sm:$0xf]
        %v3614 = vld [vmem:[#allocation7 + $0x38] sm:$0xf]
        %v3615 = vld [vmem:[#allocation7 + $0x3c] sm:$0xf]
        %v3616 = vld [vmem:[#allocation7 + $0x40] sm:$0xf]
        %v3617 = vld [vmem:[#allocation7 + $0x44] sm:$0xf]
        %v3618 = vld [vmem:[#allocation7 + $0x48] sm:$0xf]
        %v3619 = vld [vmem:[#allocation7 + $0x4c] sm:$0xf]
        %v3620 = vld [vmem:[#allocation7 + $0x50] sm:$0xf]
        %v3621 = vld [vmem:[#allocation7 + $0x54] sm:$0xf]
        %v3622 = vld [vmem:[#allocation7 + $0x58] sm:$0xf]
        %v3623 = vld [vmem:[#allocation7 + $0x5c] sm:$0xf]
        %v3624 = vld [vmem:[#allocation7 + $0x60] sm:$0xf]
        %v3625 = vld [vmem:[#allocation7 + $0x64] sm:$0xf]
        %v3626 = vld [vmem:[#allocation7 + $0x68] sm:$0xf]
        %v3627 = vld [vmem:[#allocation7 + $0x6c] sm:$0xf]
        %v3628 = vld [vmem:[#allocation7 + $0x70] sm:$0xf]
        %v3629 = vld [vmem:[#allocation7 + $0x74] sm:$0xf]
        %v3630 = vld [vmem:[#allocation7 + $0x78] sm:$0xf]
        %v3631 = vld [vmem:[#allocation7 + $0x7c] sm:$0xf]
        %v3632 = vld [vmem:[#allocation7 + $0x80] sm:$0xf]
        %v3633 = vld [vmem:[#allocation7 + $0x84] sm:$0xf]
        %v3634 = vld [vmem:[#allocation7 + $0x88] sm:$0xf]
        %v3635 = vld [vmem:[#allocation7 + $0x8c] sm:$0xf]
        %v3636 = vld [vmem:[#allocation7 + $0x90] sm:$0xf]
        %v3637 = vld [vmem:[#allocation7 + $0x94] sm:$0xf]
        %v3638 = vld [vmem:[#allocation7 + $0x98] sm:$0xf]
        %v3639 = vld [vmem:[#allocation7 + $0x9c] sm:$0xf]
        %v3640 = vld [vmem:[#allocation7 + $0xa0] sm:$0xf]
        %v3641 = vld [vmem:[#allocation7 + $0xa4] sm:$0xf]
        %v3642 = vld [vmem:[#allocation7 + $0xa8] sm:$0xf]
        %v3643 = vld [vmem:[#allocation7 + $0xac] sm:$0xf]
        %v3644 = vld [vmem:[#allocation7 + $0xb0] sm:$0xf]
        %v3645 = vld [vmem:[#allocation7 + $0xb4] sm:$0xf]
        %v3646 = vld [vmem:[#allocation7 + $0xb8] sm:$0xf]
        %v3647 = vld [vmem:[#allocation7 + $0xbc] sm:$0xf]
        %v3648 = vld [vmem:[#allocation7 + $0xc0] sm:$0xf]
        %v3649 = vld [vmem:[#allocation7 + $0xc4] sm:$0xf]
        %v3650 = vld [vmem:[#allocation7 + $0xc8] sm:$0xf]
        %v3651 = vld [vmem:[#allocation7 + $0xcc] sm:$0xf]
        %v3652 = vld [vmem:[#allocation7 + $0xd0] sm:$0xf]
        %v3653 = vld [vmem:[#allocation7 + $0xd4] sm:$0xf]
        %v3654 = vld [vmem:[#allocation7 + $0xd8] sm:$0xf]
        %v3655 = vld [vmem:[#allocation7 + $0xdc] sm:$0xf]
        %v3656 = vld [vmem:[#allocation7 + $0xe0] sm:$0xf]
        %v3657 = vld [vmem:[#allocation7 + $0xe4] sm:$0xf]
        %v3658 = vld [vmem:[#allocation7 + $0xe8] sm:$0xf]
        %v3659 = vld [vmem:[#allocation7 + $0xec] sm:$0xf]
        %v3660 = vld [vmem:[#allocation7 + $0xf0] sm:$0xf]
        %v3661 = vld [vmem:[#allocation7 + $0xf4] sm:$0xf]
        %v3662 = vld [vmem:[#allocation7 + $0xf8] sm:$0xf]
        %v3663 = vld [vmem:[#allocation7 + $0xfc] sm:$0xf]
        %v3664 = vld [vmem:[%s6] sm:$0x1]
        %v3666 = vlaneseq
        %v3667 = vshrl.u32 %v3666, 7
        %v3668 = vsub.s32 0, %v3667
        %v3669 = vrot.slane %v3664, %v3668
        %v3735 = vunpack.c.l.b16 %v3600
        %v3736 = vunpack.c.l.b16 %v3601
        %v3737 = vunpack.c.l.b16 %v3602
        %v3738 = vunpack.c.l.b16 %v3603
        %v3739 = vunpack.c.l.b16 %v3604
        %v3740 = vunpack.c.l.b16 %v3605
        %v3741 = vunpack.c.l.b16 %v3606
        %v3742 = vunpack.c.l.b16 %v3607
        %v3743 = vunpack.c.l.b16 %v3608
        %v3744 = vunpack.c.l.b16 %v3609
        %v3745 = vunpack.c.l.b16 %v3610
        %v3746 = vunpack.c.l.b16 %v3611
        %v3747 = vunpack.c.l.b16 %v3612
        %v3748 = vunpack.c.l.b16 %v3613
        %v3749 = vunpack.c.l.b16 %v3614
        %v3750 = vunpack.c.l.b16 %v3615
        %v3751 = vunpack.c.l.b16 %v3616
        %v3752 = vunpack.c.l.b16 %v3617
        %v3753 = vunpack.c.l.b16 %v3618
        %v3754 = vunpack.c.l.b16 %v3619
        %v3755 = vunpack.c.l.b16 %v3620
        %v3756 = vunpack.c.l.b16 %v3621
        %v3757 = vunpack.c.l.b16 %v3622
        %v3758 = vunpack.c.l.b16 %v3623
        %v3759 = vunpack.c.l.b16 %v3624
        %v3760 = vunpack.c.l.b16 %v3625
        %v3761 = vunpack.c.l.b16 %v3626
        %v3762 = vunpack.c.l.b16 %v3627
        %v3763 = vunpack.c.l.b16 %v3628
        %v3764 = vunpack.c.l.b16 %v3629
        %v3765 = vunpack.c.l.b16 %v3630
        %v3766 = vunpack.c.l.b16 %v3631
        %v3767 = vunpack.c.l.b16 %v3632
        %v3768 = vunpack.c.l.b16 %v3633
        %v3769 = vunpack.c.l.b16 %v3634
        %v3770 = vunpack.c.l.b16 %v3635
        %v3771 = vunpack.c.l.b16 %v3636
        %v3772 = vunpack.c.l.b16 %v3637
        %v3773 = vunpack.c.l.b16 %v3638
        %v3774 = vunpack.c.l.b16 %v3639
        %v3775 = vunpack.c.l.b16 %v3640
        %v3776 = vunpack.c.l.b16 %v3641
        %v3777 = vunpack.c.l.b16 %v3642
        %v3778 = vunpack.c.l.b16 %v3643
        %v3779 = vunpack.c.l.b16 %v3644
        %v3780 = vunpack.c.l.b16 %v3645
        %v3781 = vunpack.c.l.b16 %v3646
        %v3782 = vunpack.c.l.b16 %v3647
        %v3783 = vunpack.c.l.b16 %v3648
        %v3784 = vunpack.c.l.b16 %v3649
        %v3785 = vunpack.c.l.b16 %v3650
        %v3786 = vunpack.c.l.b16 %v3651
        %v3787 = vunpack.c.l.b16 %v3652
        %v3788 = vunpack.c.l.b16 %v3653
        %v3789 = vunpack.c.l.b16 %v3654
        %v3790 = vunpack.c.l.b16 %v3655
        %v3791 = vunpack.c.l.b16 %v3656
        %v3792 = vunpack.c.l.b16 %v3657
        %v3793 = vunpack.c.l.b16 %v3658
        %v3794 = vunpack.c.l.b16 %v3659
        %v3795 = vunpack.c.l.b16 %v3660
        %v3796 = vunpack.c.l.b16 %v3661
        %v3797 = vunpack.c.l.b16 %v3662
        %v3798 = vunpack.c.l.b16 %v3663
        %v3799 = vpack.c.b16 %v3736, %v3735
        %v3800 = vpack.c.b16 %v3738, %v3737
        %v3801 = vpack.c.b16 %v3740, %v3739
        %v3802 = vpack.c.b16 %v3742, %v3741
        %v3803 = vpack.c.b16 %v3744, %v3743
        %v3804 = vpack.c.b16 %v3746, %v3745
        %v3805 = vpack.c.b16 %v3748, %v3747
        %v3806 = vpack.c.b16 %v3750, %v3749
        %v3807 = vpack.c.b16 %v3752, %v3751
        %v3808 = vpack.c.b16 %v3754, %v3753
        %v3809 = vpack.c.b16 %v3756, %v3755
        %v3810 = vpack.c.b16 %v3758, %v3757
        %v3811 = vpack.c.b16 %v3760, %v3759
        %v3812 = vpack.c.b16 %v3762, %v3761
        %v3813 = vpack.c.b16 %v3764, %v3763
        %v3814 = vpack.c.b16 %v3766, %v3765
        %v3815 = vpack.c.b16 %v3768, %v3767
        %v3816 = vpack.c.b16 %v3770, %v3769
        %v3817 = vpack.c.b16 %v3772, %v3771
        %v3818 = vpack.c.b16 %v3774, %v3773
        %v3819 = vpack.c.b16 %v3776, %v3775
        %v3820 = vpack.c.b16 %v3778, %v3777
        %v3821 = vpack.c.b16 %v3780, %v3779
        %v3822 = vpack.c.b16 %v3782, %v3781
        %v3823 = vpack.c.b16 %v3784, %v3783
        %v3824 = vpack.c.b16 %v3786, %v3785
        %v3825 = vpack.c.b16 %v3788, %v3787
        %v3826 = vpack.c.b16 %v3790, %v3789
        %v3827 = vpack.c.b16 %v3792, %v3791
        %v3828 = vpack.c.b16 %v3794, %v3793
        %v3829 = vpack.c.b16 %v3796, %v3795
        %v3830 = vpack.c.b16 %v3798, %v3797
        %3863 = vmatprep.subr.bf16.mxu0 0
        %3864 = vmatpush1.bf16.msra.mxu0 %v3799
        %3865 = vmatprep.subr.bf16.mxu0 0
        %3866 = vmatpush1.bf16.msra.mxu0 %v3800
        %3867 = vmatprep.subr.bf16.mxu0 0
        %3868 = vmatpush1.bf16.msra.mxu0 %v3801
        %3869 = vmatprep.subr.bf16.mxu0 0
        %3870 = vmatpush1.bf16.msra.mxu0 %v3802
        %3871 = vmatprep.subr.bf16.mxu0 0
        %3872 = vmatpush1.bf16.msra.mxu0 %v3803
        %3873 = vmatprep.subr.bf16.mxu0 0
        %3874 = vmatpush1.bf16.msra.mxu0 %v3804
        %3875 = vmatprep.subr.bf16.mxu0 0
        %3876 = vmatpush1.bf16.msra.mxu0 %v3805
        %3877 = vmatprep.subr.bf16.mxu0 0
        %3878 = vmatpush1.bf16.msra.mxu0 %v3806
        %3879 = vmatprep.subr.bf16.mxu0 0
        %3880 = vmatpush1.bf16.msra.mxu0 %v3807
        %3881 = vmatprep.subr.bf16.mxu0 0
        %3882 = vmatpush1.bf16.msra.mxu0 %v3808
        %3883 = vmatprep.subr.bf16.mxu0 0
        %3884 = vmatpush1.bf16.msra.mxu0 %v3809
        %3885 = vmatprep.subr.bf16.mxu0 0
        %3886 = vmatpush1.bf16.msra.mxu0 %v3810
        %3887 = vmatprep.subr.bf16.mxu0 0
        %3888 = vmatpush1.bf16.msra.mxu0 %v3811
        %3889 = vmatprep.subr.bf16.mxu0 0
        %3890 = vmatpush1.bf16.msra.mxu0 %v3812
        %3891 = vmatprep.subr.bf16.mxu0 0
        %3892 = vmatpush1.bf16.msra.mxu0 %v3813
        %3893 = vmatprep.subr.bf16.mxu0 0
        %3894 = vmatpush1.bf16.msra.mxu0 %v3814
        %3895 = vmatprep.mubr.bf16.mxu0 %v3473
        %3896 = vmatmul.mubr.bf16.gmra.mrb[0].mxu0 %v3472
        %v3897 = vpop.f32.mrb[0].mxu0
        %v3898 = vadd.f32 %v3669, %v3897
        %v3899 = vpop.f32.mrb[0].mxu0
        %v3900 = vpop.f32.mrb[0].mxu0
        %v3901 = vadd.f32 %v3669, %v3900
        %v3902 = vpop.f32.mrb[0].mxu0
        %3903 = vmatprep.mubr.bf16.mxu0 %v3477
        %3904 = vmatmul.mubr.bf16.gmra.mrb[0].mxu0 %v3476
        %v3905 = vpop.f32.mrb[0].mxu0
        %v3906 = vadd.f32 %v3669, %v3905
        %v3907 = vpop.f32.mrb[0].mxu0
        %v3908 = vpop.f32.mrb[0].mxu0
        %v3909 = vadd.f32 %v3669, %v3908
        %v3910 = vpop.f32.mrb[0].mxu0
        %3911 = vmatprep.mubr.bf16.mxu0 %v3481
        %3912 = vmatmul.mubr.bf16.gmra.mrb[0].mxu0 %v3480
        %v3913 = vpop.f32.mrb[0].mxu0
        %v3914 = vadd.f32 %v3669, %v3913
        %v3915 = vpop.f32.mrb[0].mxu0
        %v3916 = vpop.f32.mrb[0].mxu0
        %v3917 = vadd.f32 %v3669, %v3916
        %v3918 = vpop.f32.mrb[0].mxu0
        %3919 = vmatprep.mubr.bf16.mxu0 %v3485
        %3920 = vmatmul.mubr.bf16.gmra.mrb[0].mxu0 %v3484
        %v3921 = vpop.f32.mrb[0].mxu0
        %v3922 = vadd.f32 %v3669, %v3921
        %v3923 = vpop.f32.mrb[0].mxu0
        %v3924 = vpop.f32.mrb[0].mxu0
        %v3925 = vadd.f32 %v3669, %v3924
        %v3926 = vpop.f32.mrb[0].mxu0
        %3927 = vmatprep.mubr.bf16.mxu0 %v3489
        %3928 = vmatmul.mubr.bf16.gmra.mrb[0].mxu0 %v3488
        %v3929 = vpop.f32.mrb[0].mxu0
        %v3930 = vadd.f32 %v3669, %v3929
        %v3931 = vpop.f32.mrb[0].mxu0
        %v3932 = vpop.f32.mrb[0].mxu0
        %v3933 = vadd.f32 %v3669, %v3932
        %v3934 = vpop.f32.mrb[0].mxu0
        %3935 = vmatprep.mubr.bf16.mxu0 %v3493
        %3936 = vmatmul.mubr.bf16.gmra.mrb[0].mxu0 %v3492
        %v3937 = vpop.f32.mrb[0].mxu0
        %v3938 = vadd.f32 %v3669, %v3937
        %v3939 = vpop.f32.mrb[0].mxu0
        %v3940 = vpop.f32.mrb[0].mxu0
        %v3941 = vadd.f32 %v3669, %v3940
        %v3942 = vpop.f32.mrb[0].mxu0
        %3943 = vmatprep.mubr.bf16.mxu0 %v3497
        %3944 = vmatmul.mubr.bf16.gmra.mrb[0].mxu0 %v3496
        %v3945 = vpop.f32.mrb[0].mxu0
        %v3946 = vadd.f32 %v3669, %v3945
        %v3947 = vpop.f32.mrb[0].mxu0
        %v3948 = vpop.f32.mrb[0].mxu0
        %v3949 = vadd.f32 %v3669, %v3948
        %v3950 = vpop.f32.mrb[0].mxu0
        %3951 = vmatprep.mubr.bf16.mxu0 %v3501
        %3952 = vmatmul.mubr.bf16.gmra.mrb[0].mxu0 %v3500
        %v3953 = vpop.f32.mrb[0].mxu0
        %v3954 = vadd.f32 %v3669, %v3953
        %v3955 = vpop.f32.mrb[0].mxu0
        %v3956 = vpop.f32.mrb[0].mxu0
        %v3957 = vadd.f32 %v3669, %v3956
        %v3958 = vpop.f32.mrb[0].mxu0
        %3959 = vmatprep.mubr.bf16.mxu0 %v3505
        %3960 = vmatmul.mubr.bf16.gmra.mrb[0].mxu0 %v3504
        %v3961 = vpop.f32.mrb[0].mxu0
        %v3962 = vadd.f32 %v3669, %v3961
        %v3963 = vpop.f32.mrb[0].mxu0
        %v3964 = vpop.f32.mrb[0].mxu0
        %v3965 = vadd.f32 %v3669, %v3964
        %v3966 = vpop.f32.mrb[0].mxu0
        %3967 = vmatprep.mubr.bf16.mxu0 %v3509
        %3968 = vmatmul.mubr.bf16.gmra.mrb[0].mxu0 %v3508
        %v3969 = vpop.f32.mrb[0].mxu0
        %v3970 = vadd.f32 %v3669, %v3969
        %v3971 = vpop.f32.mrb[0].mxu0
        %v3972 = vpop.f32.mrb[0].mxu0
        %v3973 = vadd.f32 %v3669, %v3972
        %v3974 = vpop.f32.mrb[0].mxu0
        %3975 = vmatprep.mubr.bf16.mxu0 %v3513
        %3976 = vmatmul.mubr.bf16.gmra.mrb[0].mxu0 %v3512
        %v3977 = vpop.f32.mrb[0].mxu0
        %v3978 = vadd.f32 %v3669, %v3977
        %v3979 = vpop.f32.mrb[0].mxu0
        %v3980 = vpop.f32.mrb[0].mxu0
        %v3981 = vadd.f32 %v3669, %v3980
        %v3982 = vpop.f32.mrb[0].mxu0
        %3983 = vmatprep.mubr.bf16.mxu0 %v3517
        %3984 = vmatmul.mubr.bf16.gmra.mrb[0].mxu0 %v3516
        %v3985 = vpop.f32.mrb[0].mxu0
        %v3986 = vadd.f32 %v3669, %v3985
        %v3987 = vpop.f32.mrb[0].mxu0
        %v3988 = vpop.f32.mrb[0].mxu0
        %v3989 = vadd.f32 %v3669, %v3988
        %v3990 = vpop.f32.mrb[0].mxu0
        %3991 = vmatprep.mubr.bf16.mxu0 %v3521
        %3992 = vmatmul.mubr.bf16.gmra.mrb[0].mxu0 %v3520
        %v3993 = vpop.f32.mrb[0].mxu0
        %v3994 = vadd.f32 %v3669, %v3993
        %v3995 = vpop.f32.mrb[0].mxu0
        %v3996 = vpop.f32.mrb[0].mxu0
        %v3997 = vadd.f32 %v3669, %v3996
        %v3998 = vpop.f32.mrb[0].mxu0
        %3999 = vmatprep.mubr.bf16.mxu0 %v3525
        %4000 = vmatmul.mubr.bf16.gmra.mrb[0].mxu0 %v3524
        %v4001 = vpop.f32.mrb[0].mxu0
        %v4002 = vadd.f32 %v3669, %v4001
        %v4003 = vpop.f32.mrb[0].mxu0
        %v4004 = vpop.f32.mrb[0].mxu0
        %v4005 = vadd.f32 %v3669, %v4004
        %v4006 = vpop.f32.mrb[0].mxu0
        %4007 = vmatprep.mubr.bf16.mxu0 %v3529
        %4008 = vmatmul.mubr.bf16.gmra.mrb[0].mxu0 %v3528
        %v4009 = vpop.f32.mrb[0].mxu0
        %v4010 = vadd.f32 %v3669, %v4009
        %v4011 = vpop.f32.mrb[0].mxu0
        %v4012 = vpop.f32.mrb[0].mxu0
        %v4013 = vadd.f32 %v3669, %v4012
        %v4014 = vpop.f32.mrb[0].mxu0
        %4015 = vmatprep.mubr.bf16.mxu0 %v3533
        %4016 = vmatmul.mubr.bf16.gmra.mrb[0].mxu0 %v3532
        %v4017 = vpop.f32.mrb[0].mxu0
        %v4018 = vadd.f32 %v3669, %v4017
        %v4019 = vpop.f32.mrb[0].mxu0
        %v4020 = vpop.f32.mrb[0].mxu0
        %v4021 = vadd.f32 %v3669, %v4020
        %v4022 = vpop.f32.mrb[0].mxu0
        %4023 = vmatprep.mubr.bf16.mxu0 %v3537
        %4024 = vmatmul.mubr.bf16.gmra.mrb[0].mxu0 %v3536
        %v4025 = vpop.f32.mrb[0].mxu0
        %v4026 = vadd.f32 %v3669, %v4025
        %v4027 = vpop.f32.mrb[0].mxu0
        %v4028 = vpop.f32.mrb[0].mxu0
        %v4029 = vadd.f32 %v3669, %v4028
        %v4030 = vpop.f32.mrb[0].mxu0
        %4031 = vmatprep.mubr.bf16.mxu0 %v3541
        %4032 = vmatmul.mubr.bf16.gmra.mrb[0].mxu0 %v3540
        %v4033 = vpop.f32.mrb[0].mxu0
        %v4034 = vadd.f32 %v3669, %v4033
        %v4035 = vpop.f32.mrb[0].mxu0
        %v4036 = vpop.f32.mrb[0].mxu0
        %v4037 = vadd.f32 %v3669, %v4036
        %v4038 = vpop.f32.mrb[0].mxu0
        %4039 = vmatprep.mubr.bf16.mxu0 %v3545
        %4040 = vmatmul.mubr.bf16.gmra.mrb[0].mxu0 %v3544
        %v4041 = vpop.f32.mrb[0].mxu0
        %v4042 = vadd.f32 %v3669, %v4041
        %v4043 = vpop.f32.mrb[0].mxu0
        %v4044 = vpop.f32.mrb[0].mxu0
        %v4045 = vadd.f32 %v3669, %v4044
        %v4046 = vpop.f32.mrb[0].mxu0
        %4047 = vmatprep.mubr.bf16.mxu0 %v3549
        %4048 = vmatmul.mubr.bf16.gmra.mrb[0].mxu0 %v3548
        %v4049 = vpop.f32.mrb[0].mxu0
        %v4050 = vadd.f32 %v3669, %v4049
        %v4051 = vpop.f32.mrb[0].mxu0
        %v4052 = vpop.f32.mrb[0].mxu0
        %v4053 = vadd.f32 %v3669, %v4052
        %v4054 = vpop.f32.mrb[0].mxu0
        %4055 = vmatprep.mubr.bf16.mxu0 %v3553
        %4056 = vmatmul.mubr.bf16.gmra.mrb[0].mxu0 %v3552
        %v4057 = vpop.f32.mrb[0].mxu0
        %v4058 = vadd.f32 %v3669, %v4057
        %v4059 = vpop.f32.mrb[0].mxu0
        %v4060 = vpop.f32.mrb[0].mxu0
        %v4061 = vadd.f32 %v3669, %v4060
        %v4062 = vpop.f32.mrb[0].mxu0
        %4063 = vmatprep.mubr.bf16.mxu0 %v3557
        %4064 = vmatmul.mubr.bf16.gmra.mrb[0].mxu0 %v3556
        %v4065 = vpop.f32.mrb[0].mxu0
        %v4066 = vadd.f32 %v3669, %v4065
        %v4067 = vpop.f32.mrb[0].mxu0
        %v4068 = vpop.f32.mrb[0].mxu0
        %v4069 = vadd.f32 %v3669, %v4068
        %v4070 = vpop.f32.mrb[0].mxu0
        %4071 = vmatprep.mubr.bf16.mxu0 %v3561
        %4072 = vmatmul.mubr.bf16.gmra.mrb[0].mxu0 %v3560
        %v4073 = vpop.f32.mrb[0].mxu0
        %v4074 = vadd.f32 %v3669, %v4073
        %v4075 = vpop.f32.mrb[0].mxu0
        %v4076 = vpop.f32.mrb[0].mxu0
        %v4077 = vadd.f32 %v3669, %v4076
        %v4078 = vpop.f32.mrb[0].mxu0
        %4079 = vmatprep.mubr.bf16.mxu0 %v3565
        %4080 = vmatmul.mubr.bf16.gmra.mrb[0].mxu0 %v3564
        %v4081 = vpop.f32.mrb[0].mxu0
        %v4082 = vadd.f32 %v3669, %v4081
        %v4083 = vpop.f32.mrb[0].mxu0
        %v4084 = vpop.f32.mrb[0].mxu0
        %v4085 = vadd.f32 %v3669, %v4084
        %v4086 = vpop.f32.mrb[0].mxu0
        %4087 = vmatprep.mubr.bf16.mxu0 %v3569
        %4088 = vmatmul.mubr.bf16.gmra.mrb[0].mxu0 %v3568
        %v4089 = vpop.f32.mrb[0].mxu0
        %v4090 = vadd.f32 %v3669, %v4089
        %v4091 = vpop.f32.mrb[0].mxu0
        %v4092 = vpop.f32.mrb[0].mxu0
        %v4093 = vadd.f32 %v3669, %v4092
        %v4094 = vpop.f32.mrb[0].mxu0
        %4095 = vmatprep.mubr.bf16.mxu0 %v3573
        %4096 = vmatmul.mubr.bf16.gmra.mrb[0].mxu0 %v3572
        %v4097 = vpop.f32.mrb[0].mxu0
        %v4098 = vadd.f32 %v3669, %v4097
        %v4099 = vpop.f32.mrb[0].mxu0
        %v4100 = vpop.f32.mrb[0].mxu0
        %v4101 = vadd.f32 %v3669, %v4100
        %v4102 = vpop.f32.mrb[0].mxu0
        %4103 = vmatprep.mubr.bf16.mxu0 %v3577
        %4104 = vmatmul.mubr.bf16.gmra.mrb[0].mxu0 %v3576
        %v4105 = vpop.f32.mrb[0].mxu0
        %v4106 = vadd.f32 %v3669, %v4105
        %v4107 = vpop.f32.mrb[0].mxu0
        %v4108 = vpop.f32.mrb[0].mxu0
        %v4109 = vadd.f32 %v3669, %v4108
        %v4110 = vpop.f32.mrb[0].mxu0
        %4111 = vmatprep.mubr.bf16.mxu0 %v3581
        %4112 = vmatmul.mubr.bf16.gmra.mrb[0].mxu0 %v3580
        %v4113 = vpop.f32.mrb[0].mxu0
        %v4114 = vadd.f32 %v3669, %v4113
        %v4115 = vpop.f32.mrb[0].mxu0
        %v4116 = vpop.f32.mrb[0].mxu0
        %v4117 = vadd.f32 %v3669, %v4116
        %v4118 = vpop.f32.mrb[0].mxu0
        %4119 = vmatprep.mubr.bf16.mxu0 %v3585
        %4120 = vmatmul.mubr.bf16.gmra.mrb[0].mxu0 %v3584
        %v4121 = vpop.f32.mrb[0].mxu0
        %v4122 = vadd.f32 %v3669, %v4121
        %v4123 = vpop.f32.mrb[0].mxu0
        %v4124 = vpop.f32.mrb[0].mxu0
        %v4125 = vadd.f32 %v3669, %v4124
        %v4126 = vpop.f32.mrb[0].mxu0
        %4127 = vmatprep.mubr.bf16.mxu0 %v3589
        %4128 = vmatmul.mubr.bf16.gmra.mrb[0].mxu0 %v3588
        %v4129 = vpop.f32.mrb[0].mxu0
        %v4130 = vadd.f32 %v3669, %v4129
        %v4131 = vpop.f32.mrb[0].mxu0
        %v4132 = vpop.f32.mrb[0].mxu0
        %v4133 = vadd.f32 %v3669, %v4132
        %v4134 = vpop.f32.mrb[0].mxu0
        %4135 = vmatprep.mubr.bf16.mxu0 %v3593
        %4136 = vmatmul.mubr.bf16.gmra.mrb[0].mxu0 %v3592
        %v4137 = vpop.f32.mrb[0].mxu0
        %v4138 = vadd.f32 %v3669, %v4137
        %v4139 = vpop.f32.mrb[0].mxu0
        %v4140 = vpop.f32.mrb[0].mxu0
        %v4141 = vadd.f32 %v3669, %v4140
        %v4142 = vpop.f32.mrb[0].mxu0
        %4143 = vmatprep.mubr.bf16.mxu0 %v3597
        %4144 = vmatmul.mubr.bf16.gmra.mrb[0].mxu0 %v3596
        %v4145 = vpop.f32.mrb[0].mxu0
        %v4146 = vadd.f32 %v3669, %v4145
        %v4147 = vpop.f32.mrb[0].mxu0
        %v4148 = vpop.f32.mrb[0].mxu0
        %v4149 = vadd.f32 %v3669, %v4148
        %v4150 = vpop.f32.mrb[0].mxu0
        %4151 = vdwg.mxu0
        %4152 = vmatprep.subr.bf16.mxu0 0
        %4153 = vmatpush1.bf16.msra.mxu0 %v3815
        %4154 = vmatprep.subr.bf16.mxu0 0
        %4155 = vmatpush1.bf16.msra.mxu0 %v3816
        %4156 = vmatprep.subr.bf16.mxu0 0
        %4157 = vmatpush1.bf16.msra.mxu0 %v3817
        %4158 = vmatprep.subr.bf16.mxu0 0
        %4159 = vmatpush1.bf16.msra.mxu0 %v3818
        %4160 = vmatprep.subr.bf16.mxu0 0
        %4161 = vmatpush1.bf16.msra.mxu0 %v3819
        %4162 = vmatprep.subr.bf16.mxu0 0
        %4163 = vmatpush1.bf16.msra.mxu0 %v3820
        %4164 = vmatprep.subr.bf16.mxu0 0
        %4165 = vmatpush1.bf16.msra.mxu0 %v3821
        %4166 = vmatprep.subr.bf16.mxu0 0
        %4167 = vmatpush1.bf16.msra.mxu0 %v3822
        %4168 = vmatprep.subr.bf16.mxu0 0
        %4169 = vmatpush1.bf16.msra.mxu0 %v3823
        %4170 = vmatprep.subr.bf16.mxu0 0
        %4171 = vmatpush1.bf16.msra.mxu0 %v3824
        %4172 = vmatprep.subr.bf16.mxu0 0
        %4173 = vmatpush1.bf16.msra.mxu0 %v3825
        %4174 = vmatprep.subr.bf16.mxu0 0
        %4175 = vmatpush1.bf16.msra.mxu0 %v3826
        %4176 = vmatprep.subr.bf16.mxu0 0
        %4177 = vmatpush1.bf16.msra.mxu0 %v3827
        %4178 = vmatprep.subr.bf16.mxu0 0
        %4179 = vmatpush1.bf16.msra.mxu0 %v3828
        %4180 = vmatprep.subr.bf16.mxu0 0
        %4181 = vmatpush1.bf16.msra.mxu0 %v3829
        %4182 = vmatprep.subr.bf16.mxu0 0
        %4183 = vmatpush1.bf16.msra.mxu0 %v3830
        %4184 = vmatprep.mubr.bf16.mxu0 %v3475
        %4185 = vmatmul.mubr.bf16.gmra.mrb[0].mxu0 %v3474
        %v4186 = vpop.f32.mrb[0].mxu0
        %v4187 = vadd.f32 %v3898, %v4186
        %v4188 = vpop.f32.mrb[0].mxu0
        %v4189 = vpop.f32.mrb[0].mxu0
        %v4190 = vadd.f32 %v3901, %v4189
        %v4191 = vpop.f32.mrb[0].mxu0
        %4192 = vmatprep.mubr.bf16.mxu0 %v3479
        %4193 = vmatmul.mubr.bf16.gmra.mrb[0].mxu0 %v3478
        %v4194 = vpop.f32.mrb[0].mxu0
        %v4195 = vadd.f32 %v3906, %v4194
        %v4196 = vpop.f32.mrb[0].mxu0
        %v4197 = vpop.f32.mrb[0].mxu0
        %v4198 = vadd.f32 %v3909, %v4197
        %v4199 = vpop.f32.mrb[0].mxu0
        %4200 = vmatprep.mubr.bf16.mxu0 %v3483
        %4201 = vmatmul.mubr.bf16.gmra.mrb[0].mxu0 %v3482
        %v4202 = vpop.f32.mrb[0].mxu0
        %v4203 = vadd.f32 %v3914, %v4202
        %v4204 = vpop.f32.mrb[0].mxu0
        %v4205 = vpop.f32.mrb[0].mxu0
        %v4206 = vadd.f32 %v3917, %v4205
        %v4207 = vpop.f32.mrb[0].mxu0
        %4208 = vmatprep.mubr.bf16.mxu0 %v3487
        %4209 = vmatmul.mubr.bf16.gmra.mrb[0].mxu0 %v3486
        %v4210 = vpop.f32.mrb[0].mxu0
        %v4211 = vadd.f32 %v3922, %v4210
        %v4212 = vpop.f32.mrb[0].mxu0
        %v4213 = vpop.f32.mrb[0].mxu0
        %v4214 = vadd.f32 %v3925, %v4213
        %v4215 = vpop.f32.mrb[0].mxu0
        %4216 = vmatprep.mubr.bf16.mxu0 %v3491
        %4217 = vmatmul.mubr.bf16.gmra.mrb[0].mxu0 %v3490
        %v4218 = vpop.f32.mrb[0].mxu0
        %v4219 = vadd.f32 %v3930, %v4218
        %v4220 = vpop.f32.mrb[0].mxu0
        %v4221 = vpop.f32.mrb[0].mxu0
        %v4222 = vadd.f32 %v3933, %v4221
        %v4223 = vpop.f32.mrb[0].mxu0
        %4224 = vmatprep.mubr.bf16.mxu0 %v3495
        %4225 = vmatmul.mubr.bf16.gmra.mrb[0].mxu0 %v3494
        %v4226 = vpop.f32.mrb[0].mxu0
        %v4227 = vadd.f32 %v3938, %v4226
        %v4228 = vpop.f32.mrb[0].mxu0
        %v4229 = vpop.f32.mrb[0].mxu0
        %v4230 = vadd.f32 %v3941, %v4229
        %v4231 = vpop.f32.mrb[0].mxu0
        %4232 = vmatprep.mubr.bf16.mxu0 %v3499
        %4233 = vmatmul.mubr.bf16.gmra.mrb[0].mxu0 %v3498
        %v4234 = vpop.f32.mrb[0].mxu0
        %v4235 = vadd.f32 %v3946, %v4234
        %v4236 = vpop.f32.mrb[0].mxu0
        %v4237 = vpop.f32.mrb[0].mxu0
        %v4238 = vadd.f32 %v3949, %v4237
        %v4239 = vpop.f32.mrb[0].mxu0
        %4240 = vmatprep.mubr.bf16.mxu0 %v3503
        %4241 = vmatmul.mubr.bf16.gmra.mrb[0].mxu0 %v3502
        %v4242 = vpop.f32.mrb[0].mxu0
        %v4243 = vadd.f32 %v3954, %v4242
        %v4244 = vpop.f32.mrb[0].mxu0
        %v4245 = vpop.f32.mrb[0].mxu0
        %v4246 = vadd.f32 %v3957, %v4245
        %v4247 = vpop.f32.mrb[0].mxu0
        %4248 = vmatprep.mubr.bf16.mxu0 %v3507
        %4249 = vmatmul.mubr.bf16.gmra.mrb[0].mxu0 %v3506
        %v4250 = vpop.f32.mrb[0].mxu0
        %v4251 = vadd.f32 %v3962, %v4250
        %v4252 = vpop.f32.mrb[0].mxu0
        %v4253 = vpop.f32.mrb[0].mxu0
        %v4254 = vadd.f32 %v3965, %v4253
        %v4255 = vpop.f32.mrb[0].mxu0
        %4256 = vmatprep.mubr.bf16.mxu0 %v3511
        %4257 = vmatmul.mubr.bf16.gmra.mrb[0].mxu0 %v3510
        %v4258 = vpop.f32.mrb[0].mxu0
        %v4259 = vadd.f32 %v3970, %v4258
        %v4260 = vpop.f32.mrb[0].mxu0
        %v4261 = vpop.f32.mrb[0].mxu0
        %v4262 = vadd.f32 %v3973, %v4261
        %v4263 = vpop.f32.mrb[0].mxu0
        %4264 = vmatprep.mubr.bf16.mxu0 %v3515
        %4265 = vmatmul.mubr.bf16.gmra.mrb[0].mxu0 %v3514
        %v4266 = vpop.f32.mrb[0].mxu0
        %v4267 = vadd.f32 %v3978, %v4266
        %v4268 = vpop.f32.mrb[0].mxu0
        %v4269 = vpop.f32.mrb[0].mxu0
        %v4270 = vadd.f32 %v3981, %v4269
        %v4271 = vpop.f32.mrb[0].mxu0
        %4272 = vmatprep.mubr.bf16.mxu0 %v3519
        %4273 = vmatmul.mubr.bf16.gmra.mrb[0].mxu0 %v3518
        %v4274 = vpop.f32.mrb[0].mxu0
        %v4275 = vadd.f32 %v3986, %v4274
        %v4276 = vpop.f32.mrb[0].mxu0
        %v4277 = vpop.f32.mrb[0].mxu0
        %v4278 = vadd.f32 %v3989, %v4277
        %v4279 = vpop.f32.mrb[0].mxu0
        %4280 = vmatprep.mubr.bf16.mxu0 %v3523
        %4281 = vmatmul.mubr.bf16.gmra.mrb[0].mxu0 %v3522
        %v4282 = vpop.f32.mrb[0].mxu0
        %v4283 = vadd.f32 %v3994, %v4282
        %v4284 = vpop.f32.mrb[0].mxu0
        %v4285 = vpop.f32.mrb[0].mxu0
        %v4286 = vadd.f32 %v3997, %v4285
        %v4287 = vpop.f32.mrb[0].mxu0
        %4288 = vmatprep.mubr.bf16.mxu0 %v3527
        %4289 = vmatmul.mubr.bf16.gmra.mrb[0].mxu0 %v3526
        %v4290 = vpop.f32.mrb[0].mxu0
        %v4291 = vadd.f32 %v4002, %v4290
        %v4292 = vpop.f32.mrb[0].mxu0
        %v4293 = vpop.f32.mrb[0].mxu0
        %v4294 = vadd.f32 %v4005, %v4293
        %v4295 = vpop.f32.mrb[0].mxu0
        %4296 = vmatprep.mubr.bf16.mxu0 %v3531
        %4297 = vmatmul.mubr.bf16.gmra.mrb[0].mxu0 %v3530
        %v4298 = vpop.f32.mrb[0].mxu0
        %v4299 = vadd.f32 %v4010, %v4298
        %v4300 = vpop.f32.mrb[0].mxu0
        %v4301 = vpop.f32.mrb[0].mxu0
        %v4302 = vadd.f32 %v4013, %v4301
        %v4303 = vpop.f32.mrb[0].mxu0
        %4304 = vmatprep.mubr.bf16.mxu0 %v3535
        %4305 = vmatmul.mubr.bf16.gmra.mrb[0].mxu0 %v3534
        %v4306 = vpop.f32.mrb[0].mxu0
        %v4307 = vadd.f32 %v4018, %v4306
        %v4308 = vpop.f32.mrb[0].mxu0
        %v4309 = vpop.f32.mrb[0].mxu0
        %v4310 = vadd.f32 %v4021, %v4309
        %v4311 = vpop.f32.mrb[0].mxu0
        %4312 = vmatprep.mubr.bf16.mxu0 %v3539
        %4313 = vmatmul.mubr.bf16.gmra.mrb[0].mxu0 %v3538
        %v4314 = vpop.f32.mrb[0].mxu0
        %v4315 = vadd.f32 %v4026, %v4314
        %v4316 = vpop.f32.mrb[0].mxu0
        %v4317 = vpop.f32.mrb[0].mxu0
        %v4318 = vadd.f32 %v4029, %v4317
        %v4319 = vpop.f32.mrb[0].mxu0
        %4320 = vmatprep.mubr.bf16.mxu0 %v3543
        %4321 = vmatmul.mubr.bf16.gmra.mrb[0].mxu0 %v3542
        %v4322 = vpop.f32.mrb[0].mxu0
        %v4323 = vadd.f32 %v4034, %v4322
        %v4324 = vpop.f32.mrb[0].mxu0
        %v4325 = vpop.f32.mrb[0].mxu0
        %v4326 = vadd.f32 %v4037, %v4325
        %v4327 = vpop.f32.mrb[0].mxu0
        %4328 = vmatprep.mubr.bf16.mxu0 %v3547
        %4329 = vmatmul.mubr.bf16.gmra.mrb[0].mxu0 %v3546
        %v4330 = vpop.f32.mrb[0].mxu0
        %v4331 = vadd.f32 %v4042, %v4330
        %v4332 = vpop.f32.mrb[0].mxu0
        %v4333 = vpop.f32.mrb[0].mxu0
        %v4334 = vadd.f32 %v4045, %v4333
        %v4335 = vpop.f32.mrb[0].mxu0
        %4336 = vmatprep.mubr.bf16.mxu0 %v3551
        %4337 = vmatmul.mubr.bf16.gmra.mrb[0].mxu0 %v3550
        %v4338 = vpop.f32.mrb[0].mxu0
        %v4339 = vadd.f32 %v4050, %v4338
        %v4340 = vpop.f32.mrb[0].mxu0
        %v4341 = vpop.f32.mrb[0].mxu0
        %v4342 = vadd.f32 %v4053, %v4341
        %v4343 = vpop.f32.mrb[0].mxu0
        %4344 = vmatprep.mubr.bf16.mxu0 %v3555
        %4345 = vmatmul.mubr.bf16.gmra.mrb[0].mxu0 %v3554
        %v4346 = vpop.f32.mrb[0].mxu0
        %v4347 = vadd.f32 %v4058, %v4346
        %v4348 = vpop.f32.mrb[0].mxu0
        %v4349 = vpop.f32.mrb[0].mxu0
        %v4350 = vadd.f32 %v4061, %v4349
        %v4351 = vpop.f32.mrb[0].mxu0
        %4352 = vmatprep.mubr.bf16.mxu0 %v3559
        %4353 = vmatmul.mubr.bf16.gmra.mrb[0].mxu0 %v3558
        %v4354 = vpop.f32.mrb[0].mxu0
        %v4355 = vadd.f32 %v4066, %v4354
        %v4356 = vpop.f32.mrb[0].mxu0
        %v4357 = vpop.f32.mrb[0].mxu0
        %v4358 = vadd.f32 %v4069, %v4357
        %v4359 = vpop.f32.mrb[0].mxu0
        %4360 = vmatprep.mubr.bf16.mxu0 %v3563
        %4361 = vmatmul.mubr.bf16.gmra.mrb[0].mxu0 %v3562
        %v4362 = vpop.f32.mrb[0].mxu0
        %v4363 = vadd.f32 %v4074, %v4362
        %v4364 = vpop.f32.mrb[0].mxu0
        %v4365 = vpop.f32.mrb[0].mxu0
        %v4366 = vadd.f32 %v4077, %v4365
        %v4367 = vpop.f32.mrb[0].mxu0
        %4368 = vmatprep.mubr.bf16.mxu0 %v3567
        %4369 = vmatmul.mubr.bf16.gmra.mrb[0].mxu0 %v3566
        %v4370 = vpop.f32.mrb[0].mxu0
        %v4371 = vadd.f32 %v4082, %v4370
        %v4372 = vpop.f32.mrb[0].mxu0
        %v4373 = vpop.f32.mrb[0].mxu0
        %v4374 = vadd.f32 %v4085, %v4373
        %v4375 = vpop.f32.mrb[0].mxu0
        %4376 = vmatprep.mubr.bf16.mxu0 %v3571
        %4377 = vmatmul.mubr.bf16.gmra.mrb[0].mxu0 %v3570
        %v4378 = vpop.f32.mrb[0].mxu0
        %v4379 = vadd.f32 %v4090, %v4378
        %v4380 = vpop.f32.mrb[0].mxu0
        %v4381 = vpop.f32.mrb[0].mxu0
        %v4382 = vadd.f32 %v4093, %v4381
        %v4383 = vpop.f32.mrb[0].mxu0
        %4384 = vmatprep.mubr.bf16.mxu0 %v3575
        %4385 = vmatmul.mubr.bf16.gmra.mrb[0].mxu0 %v3574
        %v4386 = vpop.f32.mrb[0].mxu0
        %v4387 = vadd.f32 %v4098, %v4386
        %v4388 = vpop.f32.mrb[0].mxu0
        %v4389 = vpop.f32.mrb[0].mxu0
        %v4390 = vadd.f32 %v4101, %v4389
        %v4391 = vpop.f32.mrb[0].mxu0
        %4392 = vmatprep.mubr.bf16.mxu0 %v3579
        %4393 = vmatmul.mubr.bf16.gmra.mrb[0].mxu0 %v3578
        %v4394 = vpop.f32.mrb[0].mxu0
        %v4395 = vadd.f32 %v4106, %v4394
        %v4396 = vpop.f32.mrb[0].mxu0
        %v4397 = vpop.f32.mrb[0].mxu0
        %v4398 = vadd.f32 %v4109, %v4397
        %v4399 = vpop.f32.mrb[0].mxu0
        %4400 = vmatprep.mubr.bf16.mxu0 %v3583
        %4401 = vmatmul.mubr.bf16.gmra.mrb[0].mxu0 %v3582
        %v4402 = vpop.f32.mrb[0].mxu0
        %v4403 = vadd.f32 %v4114, %v4402
        %v4404 = vpop.f32.mrb[0].mxu0
        %v4405 = vpop.f32.mrb[0].mxu0
        %v4406 = vadd.f32 %v4117, %v4405
        %v4407 = vpop.f32.mrb[0].mxu0
        %4408 = vmatprep.mubr.bf16.mxu0 %v3587
        %4409 = vmatmul.mubr.bf16.gmra.mrb[0].mxu0 %v3586
        %v4410 = vpop.f32.mrb[0].mxu0
        %v4411 = vadd.f32 %v4122, %v4410
        %v4412 = vpop.f32.mrb[0].mxu0
        %v4413 = vpop.f32.mrb[0].mxu0
        %v4414 = vadd.f32 %v4125, %v4413
        %v4415 = vpop.f32.mrb[0].mxu0
        %4416 = vmatprep.mubr.bf16.mxu0 %v3591
        %4417 = vmatmul.mubr.bf16.gmra.mrb[0].mxu0 %v3590
        %v4418 = vpop.f32.mrb[0].mxu0
        %v4419 = vadd.f32 %v4130, %v4418
        %v4420 = vpop.f32.mrb[0].mxu0
        %v4421 = vpop.f32.mrb[0].mxu0
        %v4422 = vadd.f32 %v4133, %v4421
        %v4423 = vpop.f32.mrb[0].mxu0
        %4424 = vmatprep.mubr.bf16.mxu0 %v3595
        %4425 = vmatmul.mubr.bf16.gmra.mrb[0].mxu0 %v3594
        %v4426 = vpop.f32.mrb[0].mxu0
        %v4427 = vadd.f32 %v4138, %v4426
        %v4428 = vpop.f32.mrb[0].mxu0
        %v4429 = vpop.f32.mrb[0].mxu0
        %v4430 = vadd.f32 %v4141, %v4429
        %v4431 = vpop.f32.mrb[0].mxu0
        %4432 = vmatprep.mubr.bf16.mxu0 %v3599
        %4433 = vmatmul.mubr.bf16.gmra.mrb[0].mxu0 %v3598
        %v4434 = vpop.f32.mrb[0].mxu0
        %v4435 = vadd.f32 %v4146, %v4434
        %v4436 = vpop.f32.mrb[0].mxu0
        %v4437 = vpop.f32.mrb[0].mxu0
        %v4438 = vadd.f32 %v4149, %v4437
        %v4439 = vpop.f32.mrb[0].mxu0
        %4440 = vdwg.mxu0
        %v4441 = vadd.f32 %v4187, %v1176
        %v4442 = vadd.f32 %v4190, %v1177
        %v4443 = vadd.f32 %v4195, %v1178
        %v4444 = vadd.f32 %v4198, %v1179
        %v4445 = vadd.f32 %v4203, %v1180
        %v4446 = vadd.f32 %v4206, %v1181
        %v4447 = vadd.f32 %v4211, %v1182
        %v4448 = vadd.f32 %v4214, %v1183
        %v4449 = vadd.f32 %v4219, %v1184
        %v4450 = vadd.f32 %v4222, %v1185
        %v4451 = vadd.f32 %v4227, %v1186
        %v4452 = vadd.f32 %v4230, %v1187
        %v4453 = vadd.f32 %v4235, %v1188
        %v4454 = vadd.f32 %v4238, %v1189
        %v4455 = vadd.f32 %v4243, %v1190
        %v4456 = vadd.f32 %v4246, %v1191
        %v4457 = vadd.f32 %v4251, %v1192
        %v4458 = vadd.f32 %v4254, %v1193
        %v4459 = vadd.f32 %v4259, %v1194
        %v4460 = vadd.f32 %v4262, %v1195
        %v4461 = vadd.f32 %v4267, %v1196
        %v4462 = vadd.f32 %v4270, %v1197
        %v4463 = vadd.f32 %v4275, %v1198
        %v4464 = vadd.f32 %v4278, %v1199
        %v4465 = vadd.f32 %v4283, %v1200
        %v4466 = vadd.f32 %v4286, %v1201
        %v4467 = vadd.f32 %v4291, %v1202
        %v4468 = vadd.f32 %v4294, %v1203
        %v4469 = vadd.f32 %v4299, %v1204
        %v4470 = vadd.f32 %v4302, %v1205
        %v4471 = vadd.f32 %v4307, %v1206
        %v4472 = vadd.f32 %v4310, %v1207
        %v4473 = vadd.f32 %v4315, %v1208
        %v4474 = vadd.f32 %v4318, %v1209
        %v4475 = vadd.f32 %v4323, %v1210
        %v4476 = vadd.f32 %v4326, %v1211
        %v4477 = vadd.f32 %v4331, %v1212
        %v4478 = vadd.f32 %v4334, %v1213
        %v4479 = vadd.f32 %v4339, %v1214
        %v4480 = vadd.f32 %v4342, %v1215
        %v4481 = vadd.f32 %v4347, %v1216
        %v4482 = vadd.f32 %v4350, %v1217
        %v4483 = vadd.f32 %v4355, %v1218
        %v4484 = vadd.f32 %v4358, %v1219
        %v4485 = vadd.f32 %v4363, %v1220
        %v4486 = vadd.f32 %v4366, %v1221
        %v4487 = vadd.f32 %v4371, %v1222
        %v4488 = vadd.f32 %v4374, %v1223
        %v4489 = vadd.f32 %v4379, %v1224
        %v4490 = vadd.f32 %v4382, %v1225
        %v4491 = vadd.f32 %v4387, %v1226
        %v4492 = vadd.f32 %v4390, %v1227
        %v4493 = vadd.f32 %v4395, %v1228
        %v4494 = vadd.f32 %v4398, %v1229
        %v4495 = vadd.f32 %v4403, %v1230
        %v4496 = vadd.f32 %v4406, %v1231
        %v4497 = vadd.f32 %v4411, %v1232
        %v4498 = vadd.f32 %v4414, %v1233
        %v4499 = vadd.f32 %v4419, %v1234
        %v4500 = vadd.f32 %v4422, %v1235
        %v4501 = vadd.f32 %v4427, %v1236
        %v4502 = vadd.f32 %v4430, %v1237
        %v4503 = vadd.f32 %v4435, %v1238
        %v4504 = vadd.f32 %v4438, %v1239
        %4505 = vst [vmem:[%s325] sm:$0xff] %v4441
        %4506 = vst [vmem:[%s325 + $0x8] sm:$0xff] %v4442
        %4507 = vst [vmem:[%s325 + $0x10] sm:$0xff] %v4443
        %4508 = vst [vmem:[%s325 + $0x18] sm:$0xff] %v4444
        %4509 = vst [vmem:[%s325 + $0x20] sm:$0xff] %v4445
        %4510 = vst [vmem:[%s325 + $0x28] sm:$0xff] %v4446
        %4511 = vst [vmem:[%s325 + $0x30] sm:$0xff] %v4447
        %4512 = vst [vmem:[%s325 + $0x38] sm:$0xff] %v4448
        %4513 = vst [vmem:[%s325 + $0x40] sm:$0xff] %v4449
        %4514 = vst [vmem:[%s325 + $0x48] sm:$0xff] %v4450
        %4515 = vst [vmem:[%s325 + $0x50] sm:$0xff] %v4451
        %4516 = vst [vmem:[%s325 + $0x58] sm:$0xff] %v4452
        %4517 = vst [vmem:[%s325 + $0x60] sm:$0xff] %v4453
        %4518 = vst [vmem:[%s325 + $0x68] sm:$0xff] %v4454
        %4519 = vst [vmem:[%s325 + $0x70] sm:$0xff] %v4455
        %4520 = vst [vmem:[%s325 + $0x78] sm:$0xff] %v4456
        %4521 = vst [vmem:[%s325 + $0x80] sm:$0xff] %v4457
        %4522 = vst [vmem:[%s325 + $0x88] sm:$0xff] %v4458
        %4523 = vst [vmem:[%s325 + $0x90] sm:$0xff] %v4459
        %4524 = vst [vmem:[%s325 + $0x98] sm:$0xff] %v4460
        %4525 = vst [vmem:[%s325 + $0xa0] sm:$0xff] %v4461
        %4526 = vst [vmem:[%s325 + $0xa8] sm:$0xff] %v4462
        %4527 = vst [vmem:[%s325 + $0xb0] sm:$0xff] %v4463
        %4528 = vst [vmem:[%s325 + $0xb8] sm:$0xff] %v4464
        %4529 = vst [vmem:[%s325 + $0xc0] sm:$0xff] %v4465
        %4530 = vst [vmem:[%s325 + $0xc8] sm:$0xff] %v4466
        %4531 = vst [vmem:[%s325 + $0xd0] sm:$0xff] %v4467
        %4532 = vst [vmem:[%s325 + $0xd8] sm:$0xff] %v4468
        %4533 = vst [vmem:[%s325 + $0xe0] sm:$0xff] %v4469
        %4534 = vst [vmem:[%s325 + $0xe8] sm:$0xff] %v4470
        %4535 = vst [vmem:[%s325 + $0xf0] sm:$0xff] %v4471
        %4536 = vst [vmem:[%s325 + $0xf8] sm:$0xff] %v4472
        %4537 = vst [vmem:[%s325 + $0x100] sm:$0xff] %v4473
        %4538 = vst [vmem:[%s325 + $0x108] sm:$0xff] %v4474
        %4539 = vst [vmem:[%s325 + $0x110] sm:$0xff] %v4475
        %4540 = vst [vmem:[%s325 + $0x118] sm:$0xff] %v4476
        %4541 = vst [vmem:[%s325 + $0x120] sm:$0xff] %v4477
        %4542 = vst [vmem:[%s325 + $0x128] sm:$0xff] %v4478
        %4543 = vst [vmem:[%s325 + $0x130] sm:$0xff] %v4479
        %4544 = vst [vmem:[%s325 + $0x138] sm:$0xff] %v4480
        %4545 = vst [vmem:[%s325 + $0x140] sm:$0xff] %v4481
        %4546 = vst [vmem:[%s325 + $0x148] sm:$0xff] %v4482
        %4547 = vst [vmem:[%s325 + $0x150] sm:$0xff] %v4483
        %4548 = vst [vmem:[%s325 + $0x158] sm:$0xff] %v4484
        %4549 = vst [vmem:[%s325 + $0x160] sm:$0xff] %v4485
        %4550 = vst [vmem:[%s325 + $0x168] sm:$0xff] %v4486
        %4551 = vst [vmem:[%s325 + $0x170] sm:$0xff] %v4487
        %4552 = vst [vmem:[%s325 + $0x178] sm:$0xff] %v4488
        %4553 = vst [vmem:[%s325 + $0x180] sm:$0xff] %v4489
        %4554 = vst [vmem:[%s325 + $0x188] sm:$0xff] %v4490
        %4555 = vst [vmem:[%s325 + $0x190] sm:$0xff] %v4491
        %4556 = vst [vmem:[%s325 + $0x198] sm:$0xff] %v4492
        %4557 = vst [vmem:[%s325 + $0x1a0] sm:$0xff] %v4493
        %4558 = vst [vmem:[%s325 + $0x1a8] sm:$0xff] %v4494
        %4559 = vst [vmem:[%s325 + $0x1b0] sm:$0xff] %v4495
        %4560 = vst [vmem:[%s325 + $0x1b8] sm:$0xff] %v4496
        %4561 = vst [vmem:[%s325 + $0x1c0] sm:$0xff] %v4497
        %4562 = vst [vmem:[%s325 + $0x1c8] sm:$0xff] %v4498
        %4563 = vst [vmem:[%s325 + $0x1d0] sm:$0xff] %v4499
        %4564 = vst [vmem:[%s325 + $0x1d8] sm:$0xff] %v4500
        %4565 = vst [vmem:[%s325 + $0x1e0] sm:$0xff] %v4501
        %4566 = vst [vmem:[%s325 + $0x1e8] sm:$0xff] %v4502
        %4567 = vst [vmem:[%s325 + $0x1f0] sm:$0xff] %v4503
        %4568 = vst [vmem:[%s325 + $0x1f8] sm:$0xff] %v4504
        %s4569 = sand.u32 %s185, 1
        %s4570 = scalar_lea.sflag [#allocation4], %s4569
        %s4571 = sand.u32 %s185, 1
        %s4572 = smul.addr %s4571, 512
        %s4573 = scalar_lea.vmem [#allocation8], %s4572
        // Predicated region
        $region61: #{tpu_custom_call.1} parent=47 // pred_check
          %p4574 = pneg %p195
        $region62: #{tpu_custom_call.1} parent=47 // pred_check_branch
          %4576 = sbr.rel (%p4574) target = $region64
        $region63: #{tpu_custom_call.1} parent=47 // pred_region
          %s4577 = smul.u32 64, %s25
          %s4579 = ssub.s32 8192, 8192
          %4580 = vsyncadd %s4570, %s4579
          %s4581 = smul.addr %s4577, 128
          %s4582 = scalar_lea.hbm %s7, %s4581
          %s4583 = sshll.u32 %s4573, 4
          %s4584 = int_to_ptr.vmem [resolvable:$true] %s4583
          %4589 = dma.vmem_to_hbm [thread:$0]  %s4584, 8192, %s4582, %s4570, 128, 128, 8
        $region64: #{tpu_custom_call.1} parent=47 // pred_fallthru
          _
      $region48: #{tpu_custom_call.1} parent=5 // pred_fallthru
        _
      %p4590 = scmp.le.s32.totalorder 2, %s20
      // Predicated region
      $region65: #{tpu_custom_call.1} parent=5 // pred_check
        %p4591 = pneg %p4590
      $region66: #{tpu_custom_call.1} parent=5 // pred_check_branch
        %4593 = sbr.rel (%p4591) target = $region68
      $region67: #{tpu_custom_call.1} parent=5 // pred_region
        %s4594 = ssub.s32 %s20, 2
        // Predicated region
        $region69: #{tpu_custom_call.1} parent=67 // pred_check
          %p4595 = pneg %p201
        $region70: #{tpu_custom_call.1} parent=67 // pred_check_branch
          %4597 = sbr.rel (%p4595) target = $region72
        $region71: #{tpu_custom_call.1} parent=67 // pred_region
          %s4598 = sand.u32 %s186, 1
          %s4599 = scalar_lea.sflag [#allocation4], %s4598
          %s4600 = sand.u32 %s186, 1
          %s4601 = smul.addr %s4600, 512
          %s4602 = scalar_lea.vmem [#allocation8], %s4601
          %4603 = dma.done %s4599, 8192
        $region72: #{tpu_custom_call.1} parent=67 // pred_fallthru
          _
      $region68: #{tpu_custom_call.1} parent=5 // pred_fallthru
        _
    $region6: #{tpu_custom_call.1} parent=1 // loop_footer
      %s24 = sadd.s32 1, %s20
    $region7: #{tpu_custom_call.1} parent=1 // loop_footer_branch
      %19 = sbr.rel target = $region3
    $region8: #{tpu_custom_call.1} parent=1 // loop_exit
      _
    %4604 = vsyncpa [#allocation3], 1
    %s4605 = scalar_lea.sflag [#allocation3], 1
    %4606 = vsyncpa %s4605, 1
    %4607 = vsyncpa [#allocation6], 1
    %4608 = vsyncpa [#allocation4], 1
    %s4609 = scalar_lea.sflag [#allocation4], 1
    %4610 = vsyncpa %s4609, 1

</llo_original>
